<compile_context>
chip_gen: v6e
topology: v6e:2x2x1
jax: 0.10.0
libtpu: 0.0.40
codegen_flags: <defaults>
</compile_context>

<pallas_src>
import functools
import numpy as np
import jax
import jax.numpy as jnp
from jax.experimental import pallas as pl
from jax.experimental.pallas import tpu as pltpu

# ---------------- configuration (small, consistent with the module) ----------
DIM = 32
NUM_HEADS = 4
WINDOW_SIZE = 4
SHIFT_SIZE = 2                     # > 0 exercises the SW-MSA mask path
INPUT_RESOLUTION = (8, 8)
MLP_RATIO = 4.0
BATCH = 2
EPS = 1e-5                         # nn.LayerNorm default eps
WINDOW_TILE = 4                    # windows per grid step

# rows of the packed per-stream parameter sheet (lane width = max(C, hidden))
_R_G1Q, _R_B1Q, _R_G1K, _R_B1K = 0, 1, 2, 3
_R_BQ, _R_BK, _R_BV, _R_BPROJ = 4, 5, 6, 7
_R_G2, _R_B2, _R_BFC1, _R_BFC2 = 8, 9, 10, 11
_R_HEADMASK = 12                   # followed by num_heads 0/1 lane-mask rows


# ---------------- glue helpers (plain JAX / numpy) ---------------------------
def window_partition(x, ws):
    B, H, W, C = x.shape
    x = x.reshape(B, H // ws, ws, W // ws, ws, C)
    return x.transpose(0, 1, 3, 2, 4, 5).reshape(-1, ws, ws, C)


def window_reverse(windows, ws, H, W):
    B = windows.shape[0] // (H * W // ws // ws)
    x = windows.reshape(B, H // ws, W // ws, ws, ws, -1)
    return x.transpose(0, 1, 3, 2, 4, 5).reshape(B, H, W, -1)


def relative_position_index(ws):
    coords = np.stack(np.meshgrid(np.arange(ws), np.arange(ws), indexing="ij"))
    flat = coords.reshape(2, -1)
    rel = (flat[:, :, None] - flat[:, None, :]).transpose(1, 2, 0).astype(np.int32)
    rel[:, :, 0] += ws - 1
    rel[:, :, 1] += ws - 1
    rel[:, :, 0] *= 2 * ws - 1
    return jnp.asarray(rel.sum(-1))                       # (N, N) int32


def calculate_mask(H, W, ws, ss):
    img_mask = np.zeros((1, H, W, 1), np.float32)
    slices = (slice(0, -ws), slice(-ws, -ss), slice(-ss, None))
    cnt = 0
    for h in slices:
        for w in slices:
            img_mask[:, h, w, :] = cnt
            cnt += 1
    mw = window_partition(jnp.asarray(img_mask), ws).reshape(-1, ws * ws)
    attn_mask = mw[:, None, :] - mw[:, :, None]
    return jnp.where(attn_mask != 0, -100.0, 0.0).astype(jnp.float32)  # (nW,N,N)


def _window_tokens(t, B, H, W, C, ws, ss):
    tr = t.reshape(B, H, W, C)
    if ss > 0:
        tr = jnp.roll(tr, shift=(-ss, -ss), axis=(1, 2))
    return window_partition(tr, ws).reshape(-1, ws * ws, C)


def _unwindow_tokens(w, B, H, W, C, ws, ss):
    t = window_reverse(w.reshape(-1, ws, ws, C), ws, H, W)
    if ss > 0:
        t = jnp.roll(t, shift=(ss, ss), axis=(1, 2))
    return t.reshape(B, H * W, C)


# ---------------- in-kernel math helpers --------------------------------------
def _erf_f32(x):
    # TODO(synk): exact lax.erf has no guaranteed Mosaic lowering; use the
    # Abramowitz-Stegun 7.1.26 polynomial (|err| ~ 1.5e-7), fine for GELU.
    p = 0.3275911
    a1, a2, a3, a4, a5 = (0.254829592, -0.284496736, 1.421413741,
                          -1.453152027, 1.061405429)
    ax = jnp.abs(x)
    t = 1.0 / (1.0 + p * ax)
    poly = ((((a5 * t + a4) * t + a3) * t + a2) * t + a1) * t
    y = 1.0 - poly * jnp.exp(-ax * ax)
    return jnp.where(x >= 0, y, -y)


def _gelu_exact(x):
    return 0.5 * x * (1.0 + _erf_f32(x * (1.0 / np.sqrt(2.0))))


def _layernorm(x, gamma, beta):
    mu = jnp.mean(x, axis=-1, keepdims=True)
    var = jnp.mean((x - mu) ** 2, axis=-1, keepdims=True)
    return (x - mu) * jax.lax.rsqrt(var + EPS) * gamma + beta


# ---------------- fused Pallas kernel ------------------------------------------
def _cross_swin_block_kernel(*refs, num_heads, scale, hidden, has_mask):
    """One grid step = one stream x WINDOW_TILE windows.

    norm1(q-src), norm1(kv-src) -> fused q / kv matmuls (bf16 MXU, f32 acc)
    -> per-head attention (rel-pos bias + optional shift mask, softmax with
    EUP reciprocal), heads accumulated into ONE (tile,N,C) context buffer
    -> single proj matmul -> +residual -> norm2 -> MLP (GELU) -> +residual.
    """
    if has_mask:
        (q_ref, kv_ref, wq_ref, wkv_ref, wproj_ref, wfc1_ref, wfc2_ref,
         vec_ref, rbias_ref, mask_ref, o_ref) = refs
    else:
        (q_ref, kv_ref, wq_ref, wkv_ref, wproj_ref, wfc1_ref, wfc2_ref,
         vec_ref, rbias_ref, o_ref) = refs
        mask_ref = None

    xq = q_ref[0]                       # (WT, N, C) f32 — also residual shortcut
    xkv = kv_ref[0]                     # (WT, N, C)
    WT, N, C = xq.shape
    hd = C // num_heads
    T = WT * N
    bf16 = jnp.bfloat16

    vec = vec_ref[0]                    # (NVEC, P) packed small params (f32)
    g1q, b1q = vec[_R_G1Q:_R_G1Q + 1, :C], vec[_R_B1Q:_R_B1Q + 1, :C]
    g1k, b1k = vec[_R_G1K:_R_G1K + 1, :C], vec[_R_B1K:_R_B1K + 1, :C]
    bq = vec[_R_BQ:_R_BQ + 1, :C]
    bk = vec[_R_BK:_R_BK + 1, :C]
    bv = vec[_R_BV:_R_BV + 1, :C]
    bproj = vec[_R_BPROJ:_R_BPROJ + 1, :C]
    g2, b2 = vec[_R_G2:_R_G2 + 1, :C], vec[_R_B2:_R_B2 + 1, :C]
    bfc1 = vec[_R_BFC1:_R_BFC1 + 1, :hidden]
    bfc2 = vec[_R_BFC2:_R_BFC2 + 1, :C]

    # ---- norm1 of both sources (f32 VPU), then two fused MXU matmuls --------
    qn = _layernorm(xq.reshape(T, C), g1q, b1q)
    kn = _layernorm(xkv.reshape(T, C), g1k, b1k)
    q = (jnp.dot(qn.astype(bf16), wq_ref[0],
                 preferred_element_type=jnp.float32) + bq) * scale    # (T, C)
    kv = jnp.dot(kn.astype(bf16), wkv_ref[0],
                 preferred_element_type=jnp.float32)                  # (T, 2C)
    q3 = q.reshape(WT, N, C)
    k3 = (kv[:, :C] + bk).reshape(WT, N, C)
    v3 = (kv[:, C:] + bv).reshape(WT, N, C)

    rbias = rbias_ref[0]                                              # (nh,N,N)
    smask = mask_ref[...] if has_mask else None                       # (WT,N,N)

    # ---- per-head attention; heads accumulate into one (WT,N,C) buffer so the
    # output projection is a single (T,C)@(C,C) matmul (no per-head proj). ----
    ctx = jnp.zeros((WT, N, C), jnp.float32)
    for h in range(num_heads):                     # static, small unroll
        sl = slice(h * hd, (h + 1) * hd)
        logits = jnp.einsum('wnd,wmd->wnm', q3[..., sl], k3[..., sl],
                            preferred_element_type=jnp.float32)       # (WT,N,N)
        logits = logits + rbias[h][None]
        if has_mask:
            logits = logits + smask
        mx = jnp.max(logits, axis=-1, keepdims=True)
        ex = jnp.exp(logits - mx)
        pr = ex * pl.reciprocal(jnp.sum(ex, axis=-1, keepdims=True),
                                approx=True)
        head_lanes = vec[_R_HEADMASK + h:_R_HEADMASK + h + 1, :C]     # 0/1 mask
        ctx = ctx + jnp.einsum('wnm,wmc->wnc', pr, v3 * head_lanes,
                               preferred_element_type=jnp.float32)

    o = jnp.dot(ctx.reshape(T, C).astype(bf16), wproj_ref[0],
                preferred_element_type=jnp.float32) + bproj

    x1 = xq.reshape(T, C) + o                                         # residual 1

    # ---- MLP branch (norm2 -> fc1 -> GELU -> fc2) + residual 2 ---------------
    xn2 = _layernorm(x1, g2, b2)
    hmid = jnp.dot(xn2.astype(bf16), wfc1_ref[0],
                   preferred_element_type=jnp.float32) + bfc1
    hmid = _gelu_exact(hmid)
    out = x1 + jnp.dot(hmid.astype(bf16), wfc2_ref[0],
                       preferred_element_type=jnp.float32) + bfc2

    # TODO(synk): a fully lane-dense (WT, N*C) store would need a sublane->lane
    # relayout (reshape (T,C)->(WT,N*C)) of uncertain Mosaic support at C=32;
    # with the whole block fused into one kernel this store is ~8 KB/program,
    # so we keep the (N, C)-minor layout.
    o_ref[...] = out.reshape(1, WT, N, C)


# ---------------- forward wrapper ----------------------------------------------
def cross_swin_block_forward(x, y, x_size, params):
    H, W = x_size
    B, L, C = x.shape
    ws, ss, nh = WINDOW_SIZE, SHIFT_SIZE, NUM_HEADS
    if min(x_size) <= ws:                      # mirror the module's fallback
        ss, ws = 0, min(x_size)
    N = ws * ws
    hd = C // nh
    scale = hd ** -0.5
    hidden = params['w_fc1'].shape[-1]
    P = max(C, hidden)

    rel_index = relative_position_index(ws)    # derived from *effective* ws

    # token permutation into (shifted) window order; the raw windowed tokens
    # double as the residual shortcuts inside the kernel.
    xw = _window_tokens(x, B, H, W, C, ws, ss)
    yw = _window_tokens(y, B, H, W, C, ws, ss)
    Bw = xw.shape[0]

    # stream 0 -> output x (q from x, kv from y, attn_A / mlp_A)
    # stream 1 -> output y (q from y, kv from x, attn_B / mlp_B)
    q_src = jnp.stack([xw, yw])                # (2, Bw, N, C)
    kv_src = jnp.stack([yw, xw])

    # ---- one packed, lane-dense operand for all small vector params ---------
    head_masks = np.zeros((nh, P), np.float32)
    for h in range(nh):
        head_masks[h, h * hd:(h + 1) * hd] = 1.0

    def _row(v):
        v = jnp.asarray(v, jnp.float32).reshape(-1)
        return jnp.pad(v, (0, P - v.shape[0]))

    def _pack(s):
        rows = [params['norm1_g'][s], params['norm1_b'][s],
                params['norm1_g'][1 - s], params['norm1_b'][1 - s],
                params['b_q'][s],
                params['b_kv'][s][:C], params['b_kv'][s][C:],
                params['b_proj'][s],
                params['norm2_g'][s], params['norm2_b'][s],
                params['b_fc1'][s], params['b_fc2'][s]]
        rows = [_row(r) for r in rows]
        rows += [jnp.asarray(head_masks[h]) for h in range(nh)]
        return jnp.stack(rows)

    vecs = jnp.stack([_pack(0), _pack(1)])     # (2, 12 + nh, P)
    NVEC = vecs.shape[1]

    # relative-position bias per stream: (2, nh, N, N)
    rbias = (params['rpb_table'][:, rel_index.reshape(-1), :]
             .reshape(2, N, N, nh).transpose(0, 3, 1, 2).astype(jnp.float32))

    # bf16 weights (halves weight DMA); MXU accumulates in f32 in-kernel.
    bf16 = jnp.bfloat16
    w_q = params['w_q'].astype(bf16)
    w_kv = params['w_kv'].astype(bf16)
    w_proj = params['w_proj'].astype(bf16)
    w_fc1 = params['w_fc1'].astype(bf16)
    w_fc2 = params['w_fc2'].astype(bf16)

    WT = WINDOW_TILE if Bw % WINDOW_TILE == 0 else 1
    nWT = Bw // WT

    args = [q_src, kv_src, w_q, w_kv, w_proj, w_fc1, w_fc2, vecs, rbias]
    in_specs = [
        pl.BlockSpec((1, WT, N, C), lambda s, w: (s, w, 0, 0)),
        pl.BlockSpec((1, WT, N, C), lambda s, w: (s, w, 0, 0)),
        pl.BlockSpec((1, C, C), lambda s, w: (s, 0, 0)),
        pl.BlockSpec((1, C, 2 * C), lambda s, w: (s, 0, 0)),
        pl.BlockSpec((1, C, C), lambda s, w: (s, 0, 0)),
        pl.BlockSpec((1, C, hidden), lambda s, w: (s, 0, 0)),
        pl.BlockSpec((1, hidden, C), lambda s, w: (s, 0, 0)),
        pl.BlockSpec((1, NVEC, P), lambda s, w: (s, 0, 0)),
        pl.BlockSpec((1, nh, N, N), lambda s, w: (s, 0, 0, 0)),
    ]
    has_mask = ss > 0
    if has_mask:
        mask = calculate_mask(H, W, ws, ss)            # (nW, N, N)
        mask_full = jnp.tile(mask, (B, 1, 1))          # (Bw, N, N), window-major
        args.append(mask_full)
        in_specs.append(pl.BlockSpec((WT, N, N), lambda s, w: (w, 0, 0)))

    out = pl.pallas_call(
        functools.partial(_cross_swin_block_kernel, num_heads=nh, scale=scale,
                          hidden=hidden, has_mask=has_mask),
        grid=(2, nWT),                                 # streams x window tiles
        in_specs=in_specs,
        out_specs=pl.BlockSpec((1, WT, N, C), lambda s, w: (s, w, 0, 0)),
        out_shape=jax.ShapeDtypeStruct((2, Bw, N, C), jnp.float32),
        compiler_params=pltpu.CompilerParams(
            dimension_semantics=("parallel", "parallel"),
            vmem_limit_bytes=32 * 1024 * 1024),
    )(*args)

    x_out = _unwindow_tokens(out[0], B, H, W, C, ws, ss)
    y_out = _unwindow_tokens(out[1], B, H, W, C, ws, ss)
    return x_out, y_out


# ---------------- pure-JAX reference (mirrors the PyTorch forward) -------------
def cross_swin_block_reference(x, y, x_size, params):
    H, W = x_size
    B, L, C = x.shape
    ws, ss, nh = WINDOW_SIZE, SHIFT_SIZE, NUM_HEADS
    if min(x_size) <= ws:
        ss, ws = 0, min(x_size)
    N = ws * ws
    hd = C // nh
    scale = hd ** -0.5
    rel_index = relative_position_index(ws)

    def ln(v, g, b):
        mu = v.mean(-1, keepdims=True)
        var = ((v - mu) ** 2).mean(-1, keepdims=True)
        return (v - mu) / jnp.sqrt(var + EPS) * g + b

    xn = ln(x, params['norm1_g'][0], params['norm1_b'][0])
    yn = ln(y, params['norm1_g'][1], params['norm1_b'][1])
    xw = _window_tokens(xn, B, H, W, C, ws, ss)
    yw = _window_tokens(yn, B, H, W, C, ws, ss)
    Bw = xw.shape[0]
    mask = calculate_mask(H, W, ws, ss) if ss > 0 else None

    def cross_attn(qw, kvw, s):
        q = qw @ params['w_q'][s] + params['b_q'][s]
        kv = kvw @ params['w_kv'][s] + params['b_kv'][s]
        q = q.reshape(Bw, N, nh, hd).transpose(0, 2, 1, 3) * scale
        k = kv[..., :C].reshape(Bw, N, nh, hd).transpose(0, 2, 1, 3)
        v = kv[..., C:].reshape(Bw, N, nh, hd).transpose(0, 2, 1, 3)
        attn = jnp.einsum('bhnd,bhmd->bhnm', q, k)
        rb = params['rpb_table'][s][rel_index.reshape(-1)]
        attn = attn + rb.reshape(N, N, nh).transpose(2, 0, 1)[None]
        if mask is not None:
            nWm = mask.shape[0]
            attn = (attn.reshape(Bw // nWm, nWm, nh, N, N)
                    + mask[None, :, None]).reshape(Bw, nh, N, N)
        attn = jax.nn.softmax(attn, axis=-1)
        o = (jnp.einsum('bhnm,bhmd->bhnd', attn, v)
             .transpose(0, 2, 1, 3).reshape(Bw, N, C))
        return o @ params['w_proj'][s] + params['b_proj'][s]

    x1 = x + _unwindow_tokens(cross_attn(xw, yw, 0), B, H, W, C, ws, ss)
    y1 = y + _unwindow_tokens(cross_attn(yw, xw, 1), B, H, W, C, ws, ss)

    def mlp(t, s):
        tn = ln(t, params['norm2_g'][s], params['norm2_b'][s])
        h = tn @ params['w_fc1'][s] + params['b_fc1'][s]
        h = 0.5 * h * (1.0 + jax.scipy.special.erf(h / np.sqrt(2.0)))
        return t + h @ params['w_fc2'][s] + params['b_fc2'][s]

    return mlp(x1, 0), mlp(y1, 1)


# ---------------- deterministic parameter init ---------------------------------
def init_params(key, dim, num_heads, window_size, mlp_hidden):
    ks = jax.random.split(key, 16)
    std = 0.02
    table = (2 * window_size - 1) ** 2

    def nrm(k, shape):
        return std * jax.random.normal(k, shape, jnp.float32)

    return {
        # index 0 = *_A (x stream), index 1 = *_B (y stream)
        'norm1_g': 1.0 + 0.1 * jax.random.normal(ks[0], (2, dim), jnp.float32),
        'norm1_b': 0.1 * jax.random.normal(ks[1], (2, dim), jnp.float32),
        'rpb_table': std * jax.random.truncated_normal(
            ks[2], -2.0, 2.0, (2, table, num_heads), jnp.float32),
        'w_q': nrm(ks[3], (2, dim, dim)),
        'b_q': nrm(ks[4], (2, dim)),
        'w_kv': nrm(ks[5], (2, dim, 2 * dim)),
        'b_kv': nrm(ks[6], (2, 2 * dim)),
        'w_proj': nrm(ks[7], (2, dim, dim)),
        'b_proj': nrm(ks[8], (2, dim)),
        'norm2_g': 1.0 + 0.1 * jax.random.normal(ks[9], (2, dim), jnp.float32),
        'norm2_b': 0.1 * jax.random.normal(ks[10], (2, dim), jnp.float32),
        'w_fc1': nrm(ks[11], (2, dim, mlp_hidden)),
        'b_fc1': nrm(ks[12], (2, mlp_hidden)),
        'w_fc2': nrm(ks[13], (2, mlp_hidden, dim)),
        'b_fc2': nrm(ks[14], (2, dim)),
    }


if __name__ == "__main__":
    key = jax.random.PRNGKey(0)
    kx, ky, kp = jax.random.split(key, 3)
    H, W = INPUT_RESOLUTION
    x = jax.random.normal(kx, (BATCH, H * W, DIM), jnp.float32)
    y = jax.random.normal(ky, (BATCH, H * W, DIM), jnp.float32)
    params = init_params(kp, DIM, NUM_HEADS, WINDOW_SIZE, int(DIM * MLP_RATIO))

    out_x, out_y = cross_swin_block_forward(x, y, (H, W), params)
    out_x = jax.block_until_ready(out_x)
    out_y = jax.block_until_ready(out_y)

    ref_x, ref_y = cross_swin_block_reference(x, y, (H, W), params)
    assert out_x.shape == (BATCH, H * W, DIM)
    assert out_y.shape == (BATCH, H * W, DIM)
    # tolerance accounts for bf16 MXU operands (f32 accumulation) and the
    # EUP approx-reciprocal softmax; elementwise math is f32.
    np.testing.assert_allclose(np.asarray(out_x), np.asarray(ref_x),
                               rtol=5e-3, atol=5e-3)
    np.testing.assert_allclose(np.asarray(out_y), np.asarray(ref_y),
                               rtol=5e-3, atol=5e-3)
    print("KERNEL_OK")
</pallas_src>

<mosaic_0001>
module attributes {stable_mosaic.version = 11 : i64} {
  func.func @_cross_swin_block_kernel(%arg0: i32, %arg1: i32, %arg2: memref<1x4x16x32xf32, #tpu.memory_space<vmem>>, %arg3: memref<1x4x16x32xf32, #tpu.memory_space<vmem>>, %arg4: memref<1x32x32xbf16, #tpu.memory_space<vmem>>, %arg5: memref<1x32x64xbf16, #tpu.memory_space<vmem>>, %arg6: memref<1x32x32xbf16, #tpu.memory_space<vmem>>, %arg7: memref<1x32x128xbf16, #tpu.memory_space<vmem>>, %arg8: memref<1x128x32xbf16, #tpu.memory_space<vmem>>, %arg9: memref<1x16x128xf32, #tpu.memory_space<vmem>>, %arg10: memref<1x4x16x16xf32, #tpu.memory_space<vmem>>, %arg11: memref<4x16x16xf32, #tpu.memory_space<vmem>>, %arg12: memref<1x4x16x32xf32, #tpu.memory_space<vmem>>) attributes {dimension_semantics = [#tpu.dimension_semantics<parallel>, #tpu.dimension_semantics<parallel>], iteration_bounds = array<i64: 2, 2>, scalar_prefetch = 0 : i64, scratch_operands = 0 : i64, tpu.core_type = #tpu.core_type<tc>, window_params = [{transform_indices = @transform_0, window_bounds = array<i64: 1, 4, 16, 32>}, {transform_indices = @transform_1, window_bounds = array<i64: 1, 4, 16, 32>}, {transform_indices = @transform_2, window_bounds = array<i64: 1, 32, 32>}, {transform_indices = @transform_3, window_bounds = array<i64: 1, 32, 64>}, {transform_indices = @transform_4, window_bounds = array<i64: 1, 32, 32>}, {transform_indices = @transform_5, window_bounds = array<i64: 1, 32, 128>}, {transform_indices = @transform_6, window_bounds = array<i64: 1, 128, 32>}, {transform_indices = @transform_7, window_bounds = array<i64: 1, 16, 128>}, {transform_indices = @transform_8, window_bounds = array<i64: 1, 4, 16, 16>}, {transform_indices = @transform_9, window_bounds = array<i64: 4, 16, 16>}, {transform_indices = @transform_10, window_bounds = array<i64: 1, 4, 16, 32>}]} {
    %c0 = arith.constant 0 : index
    %c0_0 = arith.constant 0 : index
    %c0_1 = arith.constant 0 : index
    %c0_2 = arith.constant 0 : index
    %0 = vector.load %arg2[%c0, %c0_0, %c0_1, %c0_2] : memref<1x4x16x32xf32, #tpu.memory_space<vmem>>, vector<1x4x16x32xf32>
    %1 = vector.shape_cast %0 : vector<1x4x16x32xf32> to vector<4x16x32xf32>
    %c0_3 = arith.constant 0 : index
    %c0_4 = arith.constant 0 : index
    %c0_5 = arith.constant 0 : index
    %c0_6 = arith.constant 0 : index
    %2 = vector.load %arg3[%c0_3, %c0_4, %c0_5, %c0_6] : memref<1x4x16x32xf32, #tpu.memory_space<vmem>>, vector<1x4x16x32xf32>
    %3 = vector.shape_cast %2 : vector<1x4x16x32xf32> to vector<4x16x32xf32>
    %c0_7 = arith.constant 0 : index
    %c0_8 = arith.constant 0 : index
    %c0_9 = arith.constant 0 : index
    %4 = vector.load %arg9[%c0_7, %c0_8, %c0_9] : memref<1x16x128xf32, #tpu.memory_space<vmem>>, vector<1x16x128xf32>
    %5 = vector.shape_cast %4 : vector<1x16x128xf32> to vector<16x128xf32>
    %6 = vector.extract_strided_slice %5 {offsets = [0, 0], sizes = [1, 32], strides = [1, 1]} : vector<16x128xf32> to vector<1x32xf32>
    %7 = vector.extract_strided_slice %5 {offsets = [1, 0], sizes = [1, 32], strides = [1, 1]} : vector<16x128xf32> to vector<1x32xf32>
    %8 = vector.extract_strided_slice %5 {offsets = [2, 0], sizes = [1, 32], strides = [1, 1]} : vector<16x128xf32> to vector<1x32xf32>
    %9 = vector.extract_strided_slice %5 {offsets = [3, 0], sizes = [1, 32], strides = [1, 1]} : vector<16x128xf32> to vector<1x32xf32>
    %10 = vector.extract_strided_slice %5 {offsets = [4, 0], sizes = [1, 32], strides = [1, 1]} : vector<16x128xf32> to vector<1x32xf32>
    %11 = vector.extract_strided_slice %5 {offsets = [5, 0], sizes = [1, 32], strides = [1, 1]} : vector<16x128xf32> to vector<1x32xf32>
    %12 = vector.extract_strided_slice %5 {offsets = [6, 0], sizes = [1, 32], strides = [1, 1]} : vector<16x128xf32> to vector<1x32xf32>
    %13 = vector.extract_strided_slice %5 {offsets = [7, 0], sizes = [1, 32], strides = [1, 1]} : vector<16x128xf32> to vector<1x32xf32>
    %14 = vector.extract_strided_slice %5 {offsets = [8, 0], sizes = [1, 32], strides = [1, 1]} : vector<16x128xf32> to vector<1x32xf32>
    %15 = vector.extract_strided_slice %5 {offsets = [9, 0], sizes = [1, 32], strides = [1, 1]} : vector<16x128xf32> to vector<1x32xf32>
    %16 = vector.extract_strided_slice %5 {offsets = [10, 0], sizes = [1, 128], strides = [1, 1]} : vector<16x128xf32> to vector<1x128xf32>
    %17 = vector.extract_strided_slice %5 {offsets = [11, 0], sizes = [1, 32], strides = [1, 1]} : vector<16x128xf32> to vector<1x32xf32>
    %18 = vector.shape_cast %1 : vector<4x16x32xf32> to vector<64x32xf32>
    %cst = arith.constant dense<0.000000e+00> : vector<64xf32>
    %19 = vector.multi_reduction <add>, %18, %cst [1] : vector<64x32xf32> to vector<64xf32>
    %20 = vector.shape_cast %19 : vector<64xf32> to vector<64x1xf32>
    %cst_10 = arith.constant 3.200000e+01 : f32
    %21 = vector.broadcast %cst_10 : f32 to vector<64x1xf32>
    %22 = arith.divf %20, %21 : vector<64x1xf32>
    %23 = vector.broadcast %22 : vector<64x1xf32> to vector<64x32xf32>
    %24 = arith.subf %18, %23 : vector<64x32xf32>
    %25 = arith.mulf %24, %24 : vector<64x32xf32>
    %cst_11 = arith.constant dense<0.000000e+00> : vector<64xf32>
    %26 = vector.multi_reduction <add>, %25, %cst_11 [1] : vector<64x32xf32> to vector<64xf32>
    %27 = vector.shape_cast %26 : vector<64xf32> to vector<64x1xf32>
    %cst_12 = arith.constant 3.200000e+01 : f32
    %28 = vector.broadcast %cst_12 : f32 to vector<64x1xf32>
    %29 = arith.divf %27, %28 : vector<64x1xf32>
    %30 = vector.broadcast %22 : vector<64x1xf32> to vector<64x32xf32>
    %31 = arith.subf %18, %30 : vector<64x32xf32>
    %cst_13 = arith.constant 9.99999974E-6 : f32
    %32 = vector.broadcast %cst_13 : f32 to vector<64x1xf32>
    %33 = arith.addf %29, %32 : vector<64x1xf32>
    %34 = math.rsqrt %33 : vector<64x1xf32>
    %35 = vector.broadcast %34 : vector<64x1xf32> to vector<64x32xf32>
    %36 = arith.mulf %31, %35 : vector<64x32xf32>
    %37 = vector.broadcast %6 : vector<1x32xf32> to vector<64x32xf32>
    %38 = arith.mulf %36, %37 : vector<64x32xf32>
    %39 = vector.broadcast %7 : vector<1x32xf32> to vector<64x32xf32>
    %40 = arith.addf %38, %39 : vector<64x32xf32>
    %41 = vector.shape_cast %3 : vector<4x16x32xf32> to vector<64x32xf32>
    %cst_14 = arith.constant dense<0.000000e+00> : vector<64xf32>
    %42 = vector.multi_reduction <add>, %41, %cst_14 [1] : vector<64x32xf32> to vector<64xf32>
    %43 = vector.shape_cast %42 : vector<64xf32> to vector<64x1xf32>
    %cst_15 = arith.constant 3.200000e+01 : f32
    %44 = vector.broadcast %cst_15 : f32 to vector<64x1xf32>
    %45 = arith.divf %43, %44 : vector<64x1xf32>
    %46 = vector.broadcast %45 : vector<64x1xf32> to vector<64x32xf32>
    %47 = arith.subf %41, %46 : vector<64x32xf32>
    %48 = arith.mulf %47, %47 : vector<64x32xf32>
    %cst_16 = arith.constant dense<0.000000e+00> : vector<64xf32>
    %49 = vector.multi_reduction <add>, %48, %cst_16 [1] : vector<64x32xf32> to vector<64xf32>
    %50 = vector.shape_cast %49 : vector<64xf32> to vector<64x1xf32>
    %cst_17 = arith.constant 3.200000e+01 : f32
    %51 = vector.broadcast %cst_17 : f32 to vector<64x1xf32>
    %52 = arith.divf %50, %51 : vector<64x1xf32>
    %53 = vector.broadcast %45 : vector<64x1xf32> to vector<64x32xf32>
    %54 = arith.subf %41, %53 : vector<64x32xf32>
    %cst_18 = arith.constant 9.99999974E-6 : f32
    %55 = vector.broadcast %cst_18 : f32 to vector<64x1xf32>
    %56 = arith.addf %52, %55 : vector<64x1xf32>
    %57 = math.rsqrt %56 : vector<64x1xf32>
    %58 = vector.broadcast %57 : vector<64x1xf32> to vector<64x32xf32>
    %59 = arith.mulf %54, %58 : vector<64x32xf32>
    %60 = vector.broadcast %8 : vector<1x32xf32> to vector<64x32xf32>
    %61 = arith.mulf %59, %60 : vector<64x32xf32>
    %62 = vector.broadcast %9 : vector<1x32xf32> to vector<64x32xf32>
    %63 = arith.addf %61, %62 : vector<64x32xf32>
    %64 = arith.truncf %40 : vector<64x32xf32> to vector<64x32xbf16>
    %c0_19 = arith.constant 0 : index
    %c0_20 = arith.constant 0 : index
    %c0_21 = arith.constant 0 : index
    %65 = vector.load %arg4[%c0_19, %c0_20, %c0_21] : memref<1x32x32xbf16, #tpu.memory_space<vmem>>, vector<1x32x32xbf16>
    %66 = vector.shape_cast %65 : vector<1x32x32xbf16> to vector<32x32xbf16>
    %cst_22 = arith.constant dense<0.000000e+00> : vector<64x32xf32>
    %67 = tpu.matmul %64, %66, %cst_22 {dimension_numbers = #tpu.dot_dimension_numbers<[1], [0], [0], [1], [0, 0, 1, 1], [], []>} : vector<64x32xbf16>, vector<32x32xbf16>, vector<64x32xf32> -> vector<64x32xf32>
    %68 = vector.broadcast %10 : vector<1x32xf32> to vector<64x32xf32>
    %69 = arith.addf %67, %68 : vector<64x32xf32>
    %cst_23 = arith.constant 0.353553385 : f32
    %70 = vector.broadcast %cst_23 : f32 to vector<64x32xf32>
    %71 = arith.mulf %69, %70 : vector<64x32xf32>
    %72 = arith.truncf %63 : vector<64x32xf32> to vector<64x32xbf16>
    %c0_24 = arith.constant 0 : index
    %c0_25 = arith.constant 0 : index
    %c0_26 = arith.constant 0 : index
    %73 = vector.load %arg5[%c0_24, %c0_25, %c0_26] : memref<1x32x64xbf16, #tpu.memory_space<vmem>>, vector<1x32x64xbf16>
    %74 = vector.shape_cast %73 : vector<1x32x64xbf16> to vector<32x64xbf16>
    %cst_27 = arith.constant dense<0.000000e+00> : vector<64x64xf32>
    %75 = tpu.matmul %72, %74, %cst_27 {dimension_numbers = #tpu.dot_dimension_numbers<[1], [0], [0], [1], [0, 0, 1, 1], [], []>} : vector<64x32xbf16>, vector<32x64xbf16>, vector<64x64xf32> -> vector<64x64xf32>
    %76 = vector.shape_cast %71 : vector<64x32xf32> to vector<4x16x32xf32>
    %77 = vector.extract_strided_slice %75 {offsets = [0, 0], sizes = [64, 32], strides = [1, 1]} : vector<64x64xf32> to vector<64x32xf32>
    %78 = vector.broadcast %11 : vector<1x32xf32> to vector<64x32xf32>
    %79 = arith.addf %77, %78 : vector<64x32xf32>
    %80 = vector.shape_cast %79 : vector<64x32xf32> to vector<4x16x32xf32>
    %81 = vector.extract_strided_slice %75 {offsets = [0, 32], sizes = [64, 32], strides = [1, 1]} : vector<64x64xf32> to vector<64x32xf32>
    %82 = vector.broadcast %12 : vector<1x32xf32> to vector<64x32xf32>
    %83 = arith.addf %81, %82 : vector<64x32xf32>
    %84 = vector.shape_cast %83 : vector<64x32xf32> to vector<4x16x32xf32>
    %c0_28 = arith.constant 0 : index
    %c0_29 = arith.constant 0 : index
    %c0_30 = arith.constant 0 : index
    %c0_31 = arith.constant 0 : index
    %85 = vector.load %arg10[%c0_28, %c0_29, %c0_30, %c0_31] : memref<1x4x16x16xf32, #tpu.memory_space<vmem>>, vector<1x4x16x16xf32>
    %86 = vector.shape_cast %85 : vector<1x4x16x16xf32> to vector<4x16x16xf32>
    %c0_32 = arith.constant 0 : index
    %c0_33 = arith.constant 0 : index
    %c0_34 = arith.constant 0 : index
    %87 = vector.load %arg11[%c0_32, %c0_33, %c0_34] : memref<4x16x16xf32, #tpu.memory_space<vmem>>, vector<4x16x16xf32>
    %cst_35 = arith.constant 0.000000e+00 : f32
    %88 = vector.broadcast %cst_35 : f32 to vector<4x16x32xf32>
    %89 = vector.extract_strided_slice %76 {offsets = [0, 0, 0], sizes = [4, 16, 8], strides = [1, 1, 1]} : vector<4x16x32xf32> to vector<4x16x8xf32>
    %90 = vector.extract_strided_slice %80 {offsets = [0, 0, 0], sizes = [4, 16, 8], strides = [1, 1, 1]} : vector<4x16x32xf32> to vector<4x16x8xf32>
    "tpu.trace_start"() <{level = 10 : i32, message = "wnd,wmd->wnm"}> : () -> ()
    %cst_36 = arith.constant dense<0.000000e+00> : vector<4x16x16xf32>
    %91 = tpu.matmul %89, %90, %cst_36 {dimension_numbers = #tpu.dot_dimension_numbers<[2], [2], [1], [1], [0, 0, 0, 1, 1, 1], [0], [0]>} : vector<4x16x8xf32>, vector<4x16x8xf32>, vector<4x16x16xf32> -> vector<4x16x16xf32>
    "tpu.trace_stop"() : () -> ()
    %92 = vector.extract_strided_slice %86 {offsets = [0, 0, 0], sizes = [1, 16, 16], strides = [1, 1, 1]} : vector<4x16x16xf32> to vector<1x16x16xf32>
    %93 = vector.shape_cast %92 : vector<1x16x16xf32> to vector<16x16xf32>
    %94 = vector.shape_cast %93 : vector<16x16xf32> to vector<1x16x16xf32>
    %95 = vector.broadcast %94 : vector<1x16x16xf32> to vector<4x16x16xf32>
    %96 = arith.addf %91, %95 : vector<4x16x16xf32>
    %97 = arith.addf %96, %87 : vector<4x16x16xf32>
    %cst_37 = arith.constant dense<0xFF800000> : vector<4x16xf32>
    %98 = vector.multi_reduction <maximumf>, %97, %cst_37 [2] : vector<4x16x16xf32> to vector<4x16xf32>
    %99 = vector.shape_cast %98 : vector<4x16xf32> to vector<4x16x1xf32>
    %100 = vector.broadcast %99 : vector<4x16x1xf32> to vector<4x16x16xf32>
    %101 = arith.subf %97, %100 : vector<4x16x16xf32>
    %102 = math.exp %101 : vector<4x16x16xf32>
    %cst_38 = arith.constant dense<0.000000e+00> : vector<4x16xf32>
    %103 = vector.multi_reduction <add>, %102, %cst_38 [2] : vector<4x16x16xf32> to vector<4x16xf32>
    %104 = vector.shape_cast %103 : vector<4x16xf32> to vector<4x16x1xf32>
    %105 = tpu.reciprocal %104 {approx = true} : vector<4x16x1xf32> -> vector<4x16x1xf32>
    %106 = vector.broadcast %105 : vector<4x16x1xf32> to vector<4x16x16xf32>
    %107 = arith.mulf %102, %106 : vector<4x16x16xf32>
    %108 = vector.extract_strided_slice %5 {offsets = [12, 0], sizes = [1, 32], strides = [1, 1]} : vector<16x128xf32> to vector<1x32xf32>
    %109 = vector.shape_cast %108 : vector<1x32xf32> to vector<1x1x32xf32>
    %110 = vector.broadcast %109 : vector<1x1x32xf32> to vector<4x16x32xf32>
    %111 = arith.mulf %84, %110 : vector<4x16x32xf32>
    "tpu.trace_start"() <{level = 10 : i32, message = "wnm,wmc->wnc"}> : () -> ()
    %cst_39 = arith.constant dense<0.000000e+00> : vector<4x16x32xf32>
    %112 = tpu.matmul %107, %111, %cst_39 {dimension_numbers = #tpu.dot_dimension_numbers<[2], [1], [1], [2], [0, 0, 0, 1, 1, 2], [0], [0]>} : vector<4x16x16xf32>, vector<4x16x32xf32>, vector<4x16x32xf32> -> vector<4x16x32xf32>
    "tpu.trace_stop"() : () -> ()
    %113 = arith.addf %88, %112 : vector<4x16x32xf32>
    %114 = vector.extract_strided_slice %76 {offsets = [0, 0, 8], sizes = [4, 16, 8], strides = [1, 1, 1]} : vector<4x16x32xf32> to vector<4x16x8xf32>
    %115 = vector.extract_strided_slice %80 {offsets = [0, 0, 8], sizes = [4, 16, 8], strides = [1, 1, 1]} : vector<4x16x32xf32> to vector<4x16x8xf32>
    "tpu.trace_start"() <{level = 10 : i32, message = "wnd,wmd->wnm"}> : () -> ()
    %cst_40 = arith.constant dense<0.000000e+00> : vector<4x16x16xf32>
    %116 = tpu.matmul %114, %115, %cst_40 {dimension_numbers = #tpu.dot_dimension_numbers<[2], [2], [1], [1], [0, 0, 0, 1, 1, 1], [0], [0]>} : vector<4x16x8xf32>, vector<4x16x8xf32>, vector<4x16x16xf32> -> vector<4x16x16xf32>
    "tpu.trace_stop"() : () -> ()
    %117 = vector.extract_strided_slice %86 {offsets = [1, 0, 0], sizes = [1, 16, 16], strides = [1, 1, 1]} : vector<4x16x16xf32> to vector<1x16x16xf32>
    %118 = vector.shape_cast %117 : vector<1x16x16xf32> to vector<16x16xf32>
    %119 = vector.shape_cast %118 : vector<16x16xf32> to vector<1x16x16xf32>
    %120 = vector.broadcast %119 : vector<1x16x16xf32> to vector<4x16x16xf32>
    %121 = arith.addf %116, %120 : vector<4x16x16xf32>
    %122 = arith.addf %121, %87 : vector<4x16x16xf32>
    %cst_41 = arith.constant dense<0xFF800000> : vector<4x16xf32>
    %123 = vector.multi_reduction <maximumf>, %122, %cst_41 [2] : vector<4x16x16xf32> to vector<4x16xf32>
    %124 = vector.shape_cast %123 : vector<4x16xf32> to vector<4x16x1xf32>
    %125 = vector.broadcast %124 : vector<4x16x1xf32> to vector<4x16x16xf32>
    %126 = arith.subf %122, %125 : vector<4x16x16xf32>
    %127 = math.exp %126 : vector<4x16x16xf32>
    %cst_42 = arith.constant dense<0.000000e+00> : vector<4x16xf32>
    %128 = vector.multi_reduction <add>, %127, %cst_42 [2] : vector<4x16x16xf32> to vector<4x16xf32>
    %129 = vector.shape_cast %128 : vector<4x16xf32> to vector<4x16x1xf32>
    %130 = tpu.reciprocal %129 {approx = true} : vector<4x16x1xf32> -> vector<4x16x1xf32>
    %131 = vector.broadcast %130 : vector<4x16x1xf32> to vector<4x16x16xf32>
    %132 = arith.mulf %127, %131 : vector<4x16x16xf32>
    %133 = vector.extract_strided_slice %5 {offsets = [13, 0], sizes = [1, 32], strides = [1, 1]} : vector<16x128xf32> to vector<1x32xf32>
    %134 = vector.shape_cast %133 : vector<1x32xf32> to vector<1x1x32xf32>
    %135 = vector.broadcast %134 : vector<1x1x32xf32> to vector<4x16x32xf32>
    %136 = arith.mulf %84, %135 : vector<4x16x32xf32>
    "tpu.trace_start"() <{level = 10 : i32, message = "wnm,wmc->wnc"}> : () -> ()
    %cst_43 = arith.constant dense<0.000000e+00> : vector<4x16x32xf32>
    %137 = tpu.matmul %132, %136, %cst_43 {dimension_numbers = #tpu.dot_dimension_numbers<[2], [1], [1], [2], [0, 0, 0, 1, 1, 2], [0], [0]>} : vector<4x16x16xf32>, vector<4x16x32xf32>, vector<4x16x32xf32> -> vector<4x16x32xf32>
    "tpu.trace_stop"() : () -> ()
    %138 = arith.addf %113, %137 : vector<4x16x32xf32>
    %139 = vector.extract_strided_slice %76 {offsets = [0, 0, 16], sizes = [4, 16, 8], strides = [1, 1, 1]} : vector<4x16x32xf32> to vector<4x16x8xf32>
    %140 = vector.extract_strided_slice %80 {offsets = [0, 0, 16], sizes = [4, 16, 8], strides = [1, 1, 1]} : vector<4x16x32xf32> to vector<4x16x8xf32>
    "tpu.trace_start"() <{level = 10 : i32, message = "wnd,wmd->wnm"}> : () -> ()
    %cst_44 = arith.constant dense<0.000000e+00> : vector<4x16x16xf32>
    %141 = tpu.matmul %139, %140, %cst_44 {dimension_numbers = #tpu.dot_dimension_numbers<[2], [2], [1], [1], [0, 0, 0, 1, 1, 1], [0], [0]>} : vector<4x16x8xf32>, vector<4x16x8xf32>, vector<4x16x16xf32> -> vector<4x16x16xf32>
    "tpu.trace_stop"() : () -> ()
    %142 = vector.extract_strided_slice %86 {offsets = [2, 0, 0], sizes = [1, 16, 16], strides = [1, 1, 1]} : vector<4x16x16xf32> to vector<1x16x16xf32>
    %143 = vector.shape_cast %142 : vector<1x16x16xf32> to vector<16x16xf32>
    %144 = vector.shape_cast %143 : vector<16x16xf32> to vector<1x16x16xf32>
    %145 = vector.broadcast %144 : vector<1x16x16xf32> to vector<4x16x16xf32>
    %146 = arith.addf %141, %145 : vector<4x16x16xf32>
    %147 = arith.addf %146, %87 : vector<4x16x16xf32>
    %cst_45 = arith.constant dense<0xFF800000> : vector<4x16xf32>
    %148 = vector.multi_reduction <maximumf>, %147, %cst_45 [2] : vector<4x16x16xf32> to vector<4x16xf32>
    %149 = vector.shape_cast %148 : vector<4x16xf32> to vector<4x16x1xf32>
    %150 = vector.broadcast %149 : vector<4x16x1xf32> to vector<4x16x16xf32>
    %151 = arith.subf %147, %150 : vector<4x16x16xf32>
    %152 = math.exp %151 : vector<4x16x16xf32>
    %cst_46 = arith.constant dense<0.000000e+00> : vector<4x16xf32>
    %153 = vector.multi_reduction <add>, %152, %cst_46 [2] : vector<4x16x16xf32> to vector<4x16xf32>
    %154 = vector.shape_cast %153 : vector<4x16xf32> to vector<4x16x1xf32>
    %155 = tpu.reciprocal %154 {approx = true} : vector<4x16x1xf32> -> vector<4x16x1xf32>
    %156 = vector.broadcast %155 : vector<4x16x1xf32> to vector<4x16x16xf32>
    %157 = arith.mulf %152, %156 : vector<4x16x16xf32>
    %158 = vector.extract_strided_slice %5 {offsets = [14, 0], sizes = [1, 32], strides = [1, 1]} : vector<16x128xf32> to vector<1x32xf32>
    %159 = vector.shape_cast %158 : vector<1x32xf32> to vector<1x1x32xf32>
    %160 = vector.broadcast %159 : vector<1x1x32xf32> to vector<4x16x32xf32>
    %161 = arith.mulf %84, %160 : vector<4x16x32xf32>
    "tpu.trace_start"() <{level = 10 : i32, message = "wnm,wmc->wnc"}> : () -> ()
    %cst_47 = arith.constant dense<0.000000e+00> : vector<4x16x32xf32>
    %162 = tpu.matmul %157, %161, %cst_47 {dimension_numbers = #tpu.dot_dimension_numbers<[2], [1], [1], [2], [0, 0, 0, 1, 1, 2], [0], [0]>} : vector<4x16x16xf32>, vector<4x16x32xf32>, vector<4x16x32xf32> -> vector<4x16x32xf32>
    "tpu.trace_stop"() : () -> ()
    %163 = arith.addf %138, %162 : vector<4x16x32xf32>
    %164 = vector.extract_strided_slice %76 {offsets = [0, 0, 24], sizes = [4, 16, 8], strides = [1, 1, 1]} : vector<4x16x32xf32> to vector<4x16x8xf32>
    %165 = vector.extract_strided_slice %80 {offsets = [0, 0, 24], sizes = [4, 16, 8], strides = [1, 1, 1]} : vector<4x16x32xf32> to vector<4x16x8xf32>
    "tpu.trace_start"() <{level = 10 : i32, message = "wnd,wmd->wnm"}> : () -> ()
    %cst_48 = arith.constant dense<0.000000e+00> : vector<4x16x16xf32>
    %166 = tpu.matmul %164, %165, %cst_48 {dimension_numbers = #tpu.dot_dimension_numbers<[2], [2], [1], [1], [0, 0, 0, 1, 1, 1], [0], [0]>} : vector<4x16x8xf32>, vector<4x16x8xf32>, vector<4x16x16xf32> -> vector<4x16x16xf32>
    "tpu.trace_stop"() : () -> ()
    %167 = vector.extract_strided_slice %86 {offsets = [3, 0, 0], sizes = [1, 16, 16], strides = [1, 1, 1]} : vector<4x16x16xf32> to vector<1x16x16xf32>
    %168 = vector.shape_cast %167 : vector<1x16x16xf32> to vector<16x16xf32>
    %169 = vector.shape_cast %168 : vector<16x16xf32> to vector<1x16x16xf32>
    %170 = vector.broadcast %169 : vector<1x16x16xf32> to vector<4x16x16xf32>
    %171 = arith.addf %166, %170 : vector<4x16x16xf32>
    %172 = arith.addf %171, %87 : vector<4x16x16xf32>
    %cst_49 = arith.constant dense<0xFF800000> : vector<4x16xf32>
    %173 = vector.multi_reduction <maximumf>, %172, %cst_49 [2] : vector<4x16x16xf32> to vector<4x16xf32>
    %174 = vector.shape_cast %173 : vector<4x16xf32> to vector<4x16x1xf32>
    %175 = vector.broadcast %174 : vector<4x16x1xf32> to vector<4x16x16xf32>
    %176 = arith.subf %172, %175 : vector<4x16x16xf32>
    %177 = math.exp %176 : vector<4x16x16xf32>
    %cst_50 = arith.constant dense<0.000000e+00> : vector<4x16xf32>
    %178 = vector.multi_reduction <add>, %177, %cst_50 [2] : vector<4x16x16xf32> to vector<4x16xf32>
    %179 = vector.shape_cast %178 : vector<4x16xf32> to vector<4x16x1xf32>
    %180 = tpu.reciprocal %179 {approx = true} : vector<4x16x1xf32> -> vector<4x16x1xf32>
    %181 = vector.broadcast %180 : vector<4x16x1xf32> to vector<4x16x16xf32>
    %182 = arith.mulf %177, %181 : vector<4x16x16xf32>
    %183 = vector.extract_strided_slice %5 {offsets = [15, 0], sizes = [1, 32], strides = [1, 1]} : vector<16x128xf32> to vector<1x32xf32>
    %184 = vector.shape_cast %183 : vector<1x32xf32> to vector<1x1x32xf32>
    %185 = vector.broadcast %184 : vector<1x1x32xf32> to vector<4x16x32xf32>
    %186 = arith.mulf %84, %185 : vector<4x16x32xf32>
    "tpu.trace_start"() <{level = 10 : i32, message = "wnm,wmc->wnc"}> : () -> ()
    %cst_51 = arith.constant dense<0.000000e+00> : vector<4x16x32xf32>
    %187 = tpu.matmul %182, %186, %cst_51 {dimension_numbers = #tpu.dot_dimension_numbers<[2], [1], [1], [2], [0, 0, 0, 1, 1, 2], [0], [0]>} : vector<4x16x16xf32>, vector<4x16x32xf32>, vector<4x16x32xf32> -> vector<4x16x32xf32>
    "tpu.trace_stop"() : () -> ()
    %188 = arith.addf %163, %187 : vector<4x16x32xf32>
    %189 = vector.shape_cast %188 : vector<4x16x32xf32> to vector<64x32xf32>
    %190 = arith.truncf %189 : vector<64x32xf32> to vector<64x32xbf16>
    %c0_52 = arith.constant 0 : index
    %c0_53 = arith.constant 0 : index
    %c0_54 = arith.constant 0 : index
    %191 = vector.load %arg6[%c0_52, %c0_53, %c0_54] : memref<1x32x32xbf16, #tpu.memory_space<vmem>>, vector<1x32x32xbf16>
    %192 = vector.shape_cast %191 : vector<1x32x32xbf16> to vector<32x32xbf16>
    %cst_55 = arith.constant dense<0.000000e+00> : vector<64x32xf32>
    %193 = tpu.matmul %190, %192, %cst_55 {dimension_numbers = #tpu.dot_dimension_numbers<[1], [0], [0], [1], [0, 0, 1, 1], [], []>} : vector<64x32xbf16>, vector<32x32xbf16>, vector<64x32xf32> -> vector<64x32xf32>
    %194 = vector.broadcast %13 : vector<1x32xf32> to vector<64x32xf32>
    %195 = arith.addf %193, %194 : vector<64x32xf32>
    %196 = vector.shape_cast %1 : vector<4x16x32xf32> to vector<64x32xf32>
    %197 = arith.addf %196, %195 : vector<64x32xf32>
    %cst_56 = arith.constant dense<0.000000e+00> : vector<64xf32>
    %198 = vector.multi_reduction <add>, %197, %cst_56 [1] : vector<64x32xf32> to vector<64xf32>
    %199 = vector.shape_cast %198 : vector<64xf32> to vector<64x1xf32>
    %cst_57 = arith.constant 3.200000e+01 : f32
    %200 = vector.broadcast %cst_57 : f32 to vector<64x1xf32>
    %201 = arith.divf %199, %200 : vector<64x1xf32>
    %202 = vector.broadcast %201 : vector<64x1xf32> to vector<64x32xf32>
    %203 = arith.subf %197, %202 : vector<64x32xf32>
    %204 = arith.mulf %203, %203 : vector<64x32xf32>
    %cst_58 = arith.constant dense<0.000000e+00> : vector<64xf32>
    %205 = vector.multi_reduction <add>, %204, %cst_58 [1] : vector<64x32xf32> to vector<64xf32>
    %206 = vector.shape_cast %205 : vector<64xf32> to vector<64x1xf32>
    %cst_59 = arith.constant 3.200000e+01 : f32
    %207 = vector.broadcast %cst_59 : f32 to vector<64x1xf32>
    %208 = arith.divf %206, %207 : vector<64x1xf32>
    %209 = vector.broadcast %201 : vector<64x1xf32> to vector<64x32xf32>
    %210 = arith.subf %197, %209 : vector<64x32xf32>
    %cst_60 = arith.constant 9.99999974E-6 : f32
    %211 = vector.broadcast %cst_60 : f32 to vector<64x1xf32>
    %212 = arith.addf %208, %211 : vector<64x1xf32>
    %213 = math.rsqrt %212 : vector<64x1xf32>
    %214 = vector.broadcast %213 : vector<64x1xf32> to vector<64x32xf32>
    %215 = arith.mulf %210, %214 : vector<64x32xf32>
    %216 = vector.broadcast %14 : vector<1x32xf32> to vector<64x32xf32>
    %217 = arith.mulf %215, %216 : vector<64x32xf32>
    %218 = vector.broadcast %15 : vector<1x32xf32> to vector<64x32xf32>
    %219 = arith.addf %217, %218 : vector<64x32xf32>
    %220 = arith.truncf %219 : vector<64x32xf32> to vector<64x32xbf16>
    %c0_61 = arith.constant 0 : index
    %c0_62 = arith.constant 0 : index
    %c0_63 = arith.constant 0 : index
    %221 = vector.load %arg7[%c0_61, %c0_62, %c0_63] : memref<1x32x128xbf16, #tpu.memory_space<vmem>>, vector<1x32x128xbf16>
    %222 = vector.shape_cast %221 : vector<1x32x128xbf16> to vector<32x128xbf16>
    %cst_64 = arith.constant dense<0.000000e+00> : vector<64x128xf32>
    %223 = tpu.matmul %220, %222, %cst_64 {dimension_numbers = #tpu.dot_dimension_numbers<[1], [0], [0], [1], [0, 0, 1, 1], [], []>} : vector<64x32xbf16>, vector<32x128xbf16>, vector<64x128xf32> -> vector<64x128xf32>
    %224 = vector.broadcast %16 : vector<1x128xf32> to vector<64x128xf32>
    %225 = arith.addf %223, %224 : vector<64x128xf32>
    %cst_65 = arith.constant 5.000000e-01 : f32
    %226 = vector.broadcast %cst_65 : f32 to vector<64x128xf32>
    %227 = arith.mulf %226, %225 : vector<64x128xf32>
    %cst_66 = arith.constant 0.707106769 : f32
    %228 = vector.broadcast %cst_66 : f32 to vector<64x128xf32>
    %229 = arith.mulf %225, %228 : vector<64x128xf32>
    %230 = math.absf %229 : vector<64x128xf32>
    %cst_67 = arith.constant 0.327591091 : f32
    %231 = vector.broadcast %cst_67 : f32 to vector<64x128xf32>
    %232 = arith.mulf %231, %230 : vector<64x128xf32>
    %cst_68 = arith.constant 1.000000e+00 : f32
    %233 = vector.broadcast %cst_68 : f32 to vector<64x128xf32>
    %234 = arith.addf %233, %232 : vector<64x128xf32>
    %cst_69 = arith.constant 1.000000e+00 : f32
    %235 = vector.broadcast %cst_69 : f32 to vector<64x128xf32>
    %236 = arith.divf %235, %234 : vector<64x128xf32>
    %cst_70 = arith.constant 1.06140542 : f32
    %237 = vector.broadcast %cst_70 : f32 to vector<64x128xf32>
    %238 = arith.mulf %237, %236 : vector<64x128xf32>
    %cst_71 = arith.constant -1.45315206 : f32
    %239 = vector.broadcast %cst_71 : f32 to vector<64x128xf32>
    %240 = arith.addf %238, %239 : vector<64x128xf32>
    %241 = arith.mulf %240, %236 : vector<64x128xf32>
    %cst_72 = arith.constant 1.42141378 : f32
    %242 = vector.broadcast %cst_72 : f32 to vector<64x128xf32>
    %243 = arith.addf %241, %242 : vector<64x128xf32>
    %244 = arith.mulf %243, %236 : vector<64x128xf32>
    %cst_73 = arith.constant -0.284496725 : f32
    %245 = vector.broadcast %cst_73 : f32 to vector<64x128xf32>
    %246 = arith.addf %244, %245 : vector<64x128xf32>
    %247 = arith.mulf %246, %236 : vector<64x128xf32>
    %cst_74 = arith.constant 0.254829586 : f32
    %248 = vector.broadcast %cst_74 : f32 to vector<64x128xf32>
    %249 = arith.addf %247, %248 : vector<64x128xf32>
    %250 = arith.mulf %249, %236 : vector<64x128xf32>
    %cst_75 = arith.constant 0.000000e+00 : f32
    %251 = vector.broadcast %cst_75 : f32 to vector<64x128xf32>
    %252 = arith.subf %251, %230 : vector<64x128xf32>
    %253 = arith.mulf %252, %230 : vector<64x128xf32>
    %254 = math.exp %253 : vector<64x128xf32>
    %255 = arith.mulf %250, %254 : vector<64x128xf32>
    %cst_76 = arith.constant 1.000000e+00 : f32
    %256 = vector.broadcast %cst_76 : f32 to vector<64x128xf32>
    %257 = arith.subf %256, %255 : vector<64x128xf32>
    %cst_77 = arith.constant 0.000000e+00 : f32
    %258 = vector.broadcast %cst_77 : f32 to vector<64x128xf32>
    %259 = arith.cmpf oge, %229, %258 : vector<64x128xf32>
    %cst_78 = arith.constant 0.000000e+00 : f32
    %260 = vector.broadcast %cst_78 : f32 to vector<64x128xf32>
    %261 = arith.subf %260, %257 : vector<64x128xf32>
    %262 = arith.select %259, %257, %261 : vector<64x128xi1>, vector<64x128xf32>
    %cst_79 = arith.constant 1.000000e+00 : f32
    %263 = vector.broadcast %cst_79 : f32 to vector<64x128xf32>
    %264 = arith.addf %263, %262 : vector<64x128xf32>
    %265 = arith.mulf %227, %264 : vector<64x128xf32>
    %266 = arith.truncf %265 : vector<64x128xf32> to vector<64x128xbf16>
    %c0_80 = arith.constant 0 : index
    %c0_81 = arith.constant 0 : index
    %c0_82 = arith.constant 0 : index
    %267 = vector.load %arg8[%c0_80, %c0_81, %c0_82] : memref<1x128x32xbf16, #tpu.memory_space<vmem>>, vector<1x128x32xbf16>
    %268 = vector.shape_cast %267 : vector<1x128x32xbf16> to vector<128x32xbf16>
    %cst_83 = arith.constant dense<0.000000e+00> : vector<64x32xf32>
    %269 = tpu.matmul %266, %268, %cst_83 {dimension_numbers = #tpu.dot_dimension_numbers<[1], [0], [0], [1], [0, 0, 1, 1], [], []>} : vector<64x128xbf16>, vector<128x32xbf16>, vector<64x32xf32> -> vector<64x32xf32>
    %270 = arith.addf %197, %269 : vector<64x32xf32>
    %271 = vector.broadcast %17 : vector<1x32xf32> to vector<64x32xf32>
    %272 = arith.addf %270, %271 : vector<64x32xf32>
    %273 = vector.shape_cast %272 : vector<64x32xf32> to vector<1x4x16x32xf32>
    %c0_84 = arith.constant 0 : index
    %c0_85 = arith.constant 0 : index
    %c0_86 = arith.constant 0 : index
    %c0_87 = arith.constant 0 : index
    %274 = vector.load %arg12[%c0_84, %c0_85, %c0_86, %c0_87] : memref<1x4x16x32xf32, #tpu.memory_space<vmem>>, vector<1x4x16x32xf32>
    tpu.vector_store %arg12[%c0_84, %c0_85, %c0_86, %c0_87], %273 {strides = array<i32>} : memref<1x4x16x32xf32, #tpu.memory_space<vmem>>, vector<1x4x16x32xf32>,
    return
  }
  func.func @transform_0(%arg0: i32, %arg1: i32) -> (i32, i32, i32, i32) {
    %c0_i32 = arith.constant 0 : i32
    %c0_i32_0 = arith.constant 0 : i32
    %c0_i32_1 = arith.constant 0 : i32
    return %arg0, %arg1, %c0_i32, %c0_i32_0 : i32, i32, i32, i32
  }
  func.func @transform_1(%arg0: i32, %arg1: i32) -> (i32, i32, i32, i32) {
    %c0_i32 = arith.constant 0 : i32
    %c0_i32_0 = arith.constant 0 : i32
    %c0_i32_1 = arith.constant 0 : i32
    return %arg0, %arg1, %c0_i32, %c0_i32_0 : i32, i32, i32, i32
  }
  func.func @transform_2(%arg0: i32, %arg1: i32) -> (i32, i32, i32) {
    %c0_i32 = arith.constant 0 : i32
    %c0_i32_0 = arith.constant 0 : i32
    %c0_i32_1 = arith.constant 0 : i32
    return %arg0, %c0_i32, %c0_i32_0 : i32, i32, i32
  }
  func.func @transform_3(%arg0: i32, %arg1: i32) -> (i32, i32, i32) {
    %c0_i32 = arith.constant 0 : i32
    %c0_i32_0 = arith.constant 0 : i32
    %c0_i32_1 = arith.constant 0 : i32
    return %arg0, %c0_i32, %c0_i32_0 : i32, i32, i32
  }
  func.func @transform_4(%arg0: i32, %arg1: i32) -> (i32, i32, i32) {
    %c0_i32 = arith.constant 0 : i32
    %c0_i32_0 = arith.constant 0 : i32
    %c0_i32_1 = arith.constant 0 : i32
    return %arg0, %c0_i32, %c0_i32_0 : i32, i32, i32
  }
  func.func @transform_5(%arg0: i32, %arg1: i32) -> (i32, i32, i32) {
    %c0_i32 = arith.constant 0 : i32
    %c0_i32_0 = arith.constant 0 : i32
    %c0_i32_1 = arith.constant 0 : i32
    return %arg0, %c0_i32, %c0_i32_0 : i32, i32, i32
  }
  func.func @transform_6(%arg0: i32, %arg1: i32) -> (i32, i32, i32) {
    %c0_i32 = arith.constant 0 : i32
    %c0_i32_0 = arith.constant 0 : i32
    %c0_i32_1 = arith.constant 0 : i32
    return %arg0, %c0_i32, %c0_i32_0 : i32, i32, i32
  }
  func.func @transform_7(%arg0: i32, %arg1: i32) -> (i32, i32, i32) {
    %c0_i32 = arith.constant 0 : i32
    %c0_i32_0 = arith.constant 0 : i32
    %c0_i32_1 = arith.constant 0 : i32
    return %arg0, %c0_i32, %c0_i32_0 : i32, i32, i32
  }
  func.func @transform_8(%arg0: i32, %arg1: i32) -> (i32, i32, i32, i32) {
    %c0_i32 = arith.constant 0 : i32
    %c0_i32_0 = arith.constant 0 : i32
    %c0_i32_1 = arith.constant 0 : i32
    %c0_i32_2 = arith.constant 0 : i32
    return %arg0, %c0_i32, %c0_i32_0, %c0_i32_1 : i32, i32, i32, i32
  }
  func.func @transform_9(%arg0: i32, %arg1: i32) -> (i32, i32, i32) {
    %c0_i32 = arith.constant 0 : i32
    %c0_i32_0 = arith.constant 0 : i32
    %c0_i32_1 = arith.constant 0 : i32
    return %arg1, %c0_i32, %c0_i32_0 : i32, i32, i32
  }
  func.func @transform_10(%arg0: i32, %arg1: i32) -> (i32, i32, i32, i32) {
    %c0_i32 = arith.constant 0 : i32
    %c0_i32_0 = arith.constant 0 : i32
    %c0_i32_1 = arith.constant 0 : i32
    return %arg0, %arg1, %c0_i32, %c0_i32_0 : i32, i32, i32, i32
  }
}

</mosaic_0001>

<llo_original>
// kernel: tpu_custom_call.1
$region0: #{tpu_custom_call.1}
  #allocation0 [shape = 'u32[]', space=smem, size = 0x4, offset = 0x4, fixed_abs, tag = 'smem constant byte address 0x4 - core index']
  #allocation1 [shape = 'u32[144,128]{1,0:T(1,128)}', space=vmem, size = 0x12000, scoped, tag = 'internal scratch']
  %s0 = inlined_call_operand.hbm [shape: f32[2,8,16,32], index: 0, kind: input, shape index: {}]
  %s1 = inlined_call_operand.hbm [shape: f32[2,8,16,32], index: 1, kind: input, shape index: {}]
  %s2 = inlined_call_operand.vmem [shape: bf16[2,32,32], index: 2, kind: input, shape index: {}]
  %s3 = inlined_call_operand.hbm [shape: bf16[2,32,64], index: 3, kind: input, shape index: {}]
  %s4 = inlined_call_operand.hbm [shape: bf16[2,32,32], index: 4, kind: input, shape index: {}]
  %s5 = inlined_call_operand.hbm [shape: bf16[2,32,128], index: 5, kind: input, shape index: {}]
  %s6 = inlined_call_operand.vmem [shape: bf16[2,128,32], index: 6, kind: input, shape index: {}]
  %s7 = inlined_call_operand.hbm [shape: f32[2,16,128], index: 7, kind: input, shape index: {}]
  %s8 = inlined_call_operand.vmem [shape: f32[2,4,16,16], index: 8, kind: input, shape index: {}]
  %s9 = inlined_call_operand.hbm [shape: f32[8,16,16], index: 9, kind: input, shape index: {}]
  %s10 = inlined_call_operand.hbm [shape: f32[2,8,16,32], index: 10, kind: output, shape index: {}]
  %s11 = sld [smem:[#allocation0]]
  $region101: #{tpu_custom_call.1} parent=0
    _
  %s13 = ssub.s32 1, %s11
  %s14 = scalar_select 0, %s13, %s11
  $region1: #{tpu_custom_call.1} parent=0
    #allocation2 [shape = 'u8[65536]{0}', space=vmem, size = 0x10000, scoped, tag = 'input window, operand 0']
    #allocation3 [shape = 's32[2]{0}', space=sflag, size = 0x8, scoped, tag = 'scoped memory for tpu_custom_call.1']
    #allocation4 [shape = 's32[2]{0}', space=sflag, size = 0x8, scoped, tag = 'scoped memory for tpu_custom_call.1']
    #allocation5 [shape = 'u8[65536]{0}', space=vmem, size = 0x10000, scoped, tag = 'input window, operand 1']
    #allocation6 [shape = 's32[2]{0}', space=sflag, size = 0x8, scoped, tag = 'scoped memory for tpu_custom_call.1']
    #allocation7 [shape = 'u8[16384]{0}', space=vmem, size = 0x4000, scoped, tag = 'input window, operand 3']
    #allocation8 [shape = 'u8[16384]{0}', space=vmem, size = 0x4000, scoped, tag = 'input window, operand 4']
    #allocation9 [shape = 's32[2]{0}', space=sflag, size = 0x8, scoped, tag = 'scoped memory for tpu_custom_call.1']
    #allocation10 [shape = 'u8[16384]{0}', space=vmem, size = 0x4000, scoped, tag = 'input window, operand 5']
    #allocation11 [shape = 'u8[16384]{0}', space=vmem, size = 0x4000, scoped, tag = 'input window, operand 7']
    #allocation12 [shape = 's32[2]{0}', space=sflag, size = 0x8, scoped, tag = 'scoped memory for tpu_custom_call.1']
    #allocation13 [shape = 'u8[65536]{0}', space=vmem, size = 0x10000, scoped, tag = 'input window, operand 9']
    #allocation14 [shape = 'u8[65536]{0}', space=vmem, size = 0x10000, scoped, tag = 'output window, operand 0']
    %15 = vsyncpa [#allocation3], 0
    %s16 = scalar_lea.sflag [#allocation3], 1
    %17 = vsyncpa %s16, 0
    %18 = vsyncpa [#allocation6], 0
    %s19 = scalar_lea.sflag [#allocation6], 1
    %20 = vsyncpa %s19, 0
    %21 = vsyncpa [#allocation9], 0
    %s22 = scalar_lea.sflag [#allocation9], 1
    %23 = vsyncpa %s22, 0
    %24 = vsyncpa [#allocation12], 0
    %s25 = scalar_lea.sflag [#allocation12], 1
    %26 = vsyncpa %s25, 0
    %27 = vsyncpa [#allocation4], 0
    %s28 = scalar_lea.sflag [#allocation4], 1
    %29 = vsyncpa %s28, 0
    loop: start=0, step=1, limit=6
    $region2: #{tpu_custom_call.1} parent=1 // loop_pre_header
      _
    $region3: #{tpu_custom_call.1} parent=1 // loop_header
      %s31 = sphi 0, %s35
      %p32 = scmp.ge.s32.totalorder %s31, 6
      %s38 = sphi 0, %s50
      %s39 = sphi 0, %s46
      %s40 = sphi 0, %s38
      %s41 = sphi 0, %s39
      %s42 = sphi 0, %s40
      %s43 = sphi 0, %s41
      %s55 = sphi 0, %s57
      %s58 = sphi 0, %s55
      %s59 = sphi 0, %s58
      %s75 = sphi 0, %s59
      %s83 = sphi 0, %s85
      %s86 = sphi 0, %s83
      %s87 = sphi 0, %s86
      %s103 = sphi 0, %s87
      %s109 = sphi 0, %s111
      %s112 = sphi 0, %s109
      %s113 = sphi 0, %s112
      %s129 = sphi 0, %s113
      %s135 = sphi 0, %s137
      %s138 = sphi 0, %s135
      %s139 = sphi 0, %s138
      %s155 = sphi 0, %s139
      %s161 = sphi 0, %s163
      %s164 = sphi 0, %s161
      %s165 = sphi 0, %s164
      %s181 = sphi 0, %s165
      %s187 = sphi 0, %s189
      %s190 = sphi 0, %s187
      %s191 = sphi 0, %s190
      %s207 = sphi 0, %s191
      %s213 = sphi 0, %s215
      %s216 = sphi 0, %s213
      %s217 = sphi 0, %s216
      %s233 = sphi 0, %s217
      %s239 = sphi 0, %s241
      %s242 = sphi 0, %s239
      %s243 = sphi 0, %s242
      %s259 = sphi 0, %s243
      %s265 = sphi 0, %s267
      %s268 = sphi 0, %s265
      %s269 = sphi 0, %s268
      %s285 = sphi 0, %s269
      %s291 = sphi 0, %s293
      %s294 = sphi 0, %s291
      %s295 = sphi 0, %s294
      %s311 = sphi 0, %s295
      %s319 = sphi 0, %s321
      %s322 = sphi 0, %s319
      %s323 = sphi 0, %s322
      %s339 = sphi 0, %s323
    $region4: #{tpu_custom_call.1} parent=1 // loop_header_branch
      %34 = sbr.rel (%p32) target = $region8
    $region5: #{tpu_custom_call.1} parent=1 // loop_body
      %s36 = ssub.s32 %s31, 1
      %s37 = ssub.s32 %s31, 2
      %s44 = sadd.s32 1, %s39
      %p45 = scmp.ge.s32.totalorder %s44, 2
      %s46 = scalar_select %p45, 0, %s44
      %s47 = sadd.s32 1, %s38
      %s48 = scalar_select %p45, %s47, %s38
      %p49 = scmp.ge.s32.totalorder %s48, 2
      %s50 = scalar_select %p49, 0, %s48
      %s51 = ssub.s32 %s38, %s50
      %s52 = ssub.s32 %s39, %s46
      %s53 = sor.u32 %s51, %s52
      %p54 = scmp.eq.s32.totalorder %s53, 0
      %s56 = sadd.s32 %s55, 1
      %s57 = scalar_select %p54, %s55, %s56
      %p60 = pneg %p54
      %p61 = scmp.eq.s32.totalorder %s31, 3
      %p62 = por %p60, %p61
      %p63 = scmp.ne.s32.totalorder %s55, %s58
      %p64 = scmp.eq.s32.totalorder %s31, 0
      %p65 = por %p63, %p64
      %p66 = scmp.ne.s32.totalorder %s55, %s58
      %p67 = scmp.eq.s32.totalorder %s36, 3
      %p68 = por %p66, %p67
      %p69 = scmp.ne.s32.totalorder %s58, %s59
      %p70 = scmp.eq.s32.totalorder %s36, 0
      %p71 = por %p69, %p70
      %p72 = scmp.ne.s32.totalorder %s58, %s59
      %p73 = scmp.eq.s32.totalorder %s37, 3
      %p74 = por %p72, %p73
      %p76 = scmp.ne.s32.totalorder %s59, %s75
      %p77 = scmp.eq.s32.totalorder %s37, 0
      %p78 = por %p76, %p77
      %s79 = ssub.s32 %s38, %s50
      %s80 = ssub.s32 %s39, %s46
      %s81 = sor.u32 %s79, %s80
      %p82 = scmp.eq.s32.totalorder %s81, 0
      %s84 = sadd.s32 %s83, 1
      %s85 = scalar_select %p82, %s83, %s84
      %p88 = pneg %p82
      %p89 = scmp.eq.s32.totalorder %s31, 3
      %p90 = por %p88, %p89
      %p91 = scmp.ne.s32.totalorder %s83, %s86
      %p92 = scmp.eq.s32.totalorder %s31, 0
      %p93 = por %p91, %p92
      %p94 = scmp.ne.s32.totalorder %s83, %s86
      %p95 = scmp.eq.s32.totalorder %s36, 3
      %p96 = por %p94, %p95
      %p97 = scmp.ne.s32.totalorder %s86, %s87
      %p98 = scmp.eq.s32.totalorder %s36, 0
      %p99 = por %p97, %p98
      %p100 = scmp.ne.s32.totalorder %s86, %s87
      %p101 = scmp.eq.s32.totalorder %s37, 3
      %p102 = por %p100, %p101
      %p104 = scmp.ne.s32.totalorder %s87, %s103
      %p105 = scmp.eq.s32.totalorder %s37, 0
      %p106 = por %p104, %p105
      %s107 = ssub.s32 %s38, %s50
      %p108 = scmp.eq.s32.totalorder %s107, 0
      %s110 = sadd.s32 %s109, 1
      %s111 = scalar_select %p108, %s109, %s110
      %p114 = pneg %p108
      %p115 = scmp.eq.s32.totalorder %s31, 3
      %p116 = por %p114, %p115
      %p117 = scmp.ne.s32.totalorder %s109, %s112
      %p118 = scmp.eq.s32.totalorder %s31, 0
      %p119 = por %p117, %p118
      %p120 = scmp.ne.s32.totalorder %s109, %s112
      %p121 = scmp.eq.s32.totalorder %s36, 3
      %p122 = por %p120, %p121
      %p123 = scmp.ne.s32.totalorder %s112, %s113
      %p124 = scmp.eq.s32.totalorder %s36, 0
      %p125 = por %p123, %p124
      %p126 = scmp.ne.s32.totalorder %s112, %s113
      %p127 = scmp.eq.s32.totalorder %s37, 3
      %p128 = por %p126, %p127
      %p130 = scmp.ne.s32.totalorder %s113, %s129
      %p131 = scmp.eq.s32.totalorder %s37, 0
      %p132 = por %p130, %p131
      %s133 = ssub.s32 %s38, %s50
      %p134 = scmp.eq.s32.totalorder %s133, 0
      %s136 = sadd.s32 %s135, 1
      %s137 = scalar_select %p134, %s135, %s136
      %p140 = pneg %p134
      %p141 = scmp.eq.s32.totalorder %s31, 3
      %p142 = por %p140, %p141
      %p143 = scmp.ne.s32.totalorder %s135, %s138
      %p144 = scmp.eq.s32.totalorder %s31, 0
      %p145 = por %p143, %p144
      %p146 = scmp.ne.s32.totalorder %s135, %s138
      %p147 = scmp.eq.s32.totalorder %s36, 3
      %p148 = por %p146, %p147
      %p149 = scmp.ne.s32.totalorder %s138, %s139
      %p150 = scmp.eq.s32.totalorder %s36, 0
      %p151 = por %p149, %p150
      %p152 = scmp.ne.s32.totalorder %s138, %s139
      %p153 = scmp.eq.s32.totalorder %s37, 3
      %p154 = por %p152, %p153
      %p156 = scmp.ne.s32.totalorder %s139, %s155
      %p157 = scmp.eq.s32.totalorder %s37, 0
      %p158 = por %p156, %p157
      %s159 = ssub.s32 %s38, %s50
      %p160 = scmp.eq.s32.totalorder %s159, 0
      %s162 = sadd.s32 %s161, 1
      %s163 = scalar_select %p160, %s161, %s162
      %p166 = pneg %p160
      %p167 = scmp.eq.s32.totalorder %s31, 3
      %p168 = por %p166, %p167
      %p169 = scmp.ne.s32.totalorder %s161, %s164
      %p170 = scmp.eq.s32.totalorder %s31, 0
      %p171 = por %p169, %p170
      %p172 = scmp.ne.s32.totalorder %s161, %s164
      %p173 = scmp.eq.s32.totalorder %s36, 3
      %p174 = por %p172, %p173
      %p175 = scmp.ne.s32.totalorder %s164, %s165
      %p176 = scmp.eq.s32.totalorder %s36, 0
      %p177 = por %p175, %p176
      %p178 = scmp.ne.s32.totalorder %s164, %s165
      %p179 = scmp.eq.s32.totalorder %s37, 3
      %p180 = por %p178, %p179
      %p182 = scmp.ne.s32.totalorder %s165, %s181
      %p183 = scmp.eq.s32.totalorder %s37, 0
      %p184 = por %p182, %p183
      %s185 = ssub.s32 %s38, %s50
      %p186 = scmp.eq.s32.totalorder %s185, 0
      %s188 = sadd.s32 %s187, 1
      %s189 = scalar_select %p186, %s187, %s188
      %p192 = pneg %p186
      %p193 = scmp.eq.s32.totalorder %s31, 3
      %p194 = por %p192, %p193
      %p195 = scmp.ne.s32.totalorder %s187, %s190
      %p196 = scmp.eq.s32.totalorder %s31, 0
      %p197 = por %p195, %p196
      %p198 = scmp.ne.s32.totalorder %s187, %s190
      %p199 = scmp.eq.s32.totalorder %s36, 3
      %p200 = por %p198, %p199
      %p201 = scmp.ne.s32.totalorder %s190, %s191
      %p202 = scmp.eq.s32.totalorder %s36, 0
      %p203 = por %p201, %p202
      %p204 = scmp.ne.s32.totalorder %s190, %s191
      %p205 = scmp.eq.s32.totalorder %s37, 3
      %p206 = por %p204, %p205
      %p208 = scmp.ne.s32.totalorder %s191, %s207
      %p209 = scmp.eq.s32.totalorder %s37, 0
      %p210 = por %p208, %p209
      %s211 = ssub.s32 %s38, %s50
      %p212 = scmp.eq.s32.totalorder %s211, 0
      %s214 = sadd.s32 %s213, 1
      %s215 = scalar_select %p212, %s213, %s214
      %p218 = pneg %p212
      %p219 = scmp.eq.s32.totalorder %s31, 3
      %p220 = por %p218, %p219
      %p221 = scmp.ne.s32.totalorder %s213, %s216
      %p222 = scmp.eq.s32.totalorder %s31, 0
      %p223 = por %p221, %p222
      %p224 = scmp.ne.s32.totalorder %s213, %s216
      %p225 = scmp.eq.s32.totalorder %s36, 3
      %p226 = por %p224, %p225
      %p227 = scmp.ne.s32.totalorder %s216, %s217
      %p228 = scmp.eq.s32.totalorder %s36, 0
      %p229 = por %p227, %p228
      %p230 = scmp.ne.s32.totalorder %s216, %s217
      %p231 = scmp.eq.s32.totalorder %s37, 3
      %p232 = por %p230, %p231
      %p234 = scmp.ne.s32.totalorder %s217, %s233
      %p235 = scmp.eq.s32.totalorder %s37, 0
      %p236 = por %p234, %p235
      %s237 = ssub.s32 %s38, %s50
      %p238 = scmp.eq.s32.totalorder %s237, 0
      %s240 = sadd.s32 %s239, 1
      %s241 = scalar_select %p238, %s239, %s240
      %p244 = pneg %p238
      %p245 = scmp.eq.s32.totalorder %s31, 3
      %p246 = por %p244, %p245
      %p247 = scmp.ne.s32.totalorder %s239, %s242
      %p248 = scmp.eq.s32.totalorder %s31, 0
      %p249 = por %p247, %p248
      %p250 = scmp.ne.s32.totalorder %s239, %s242
      %p251 = scmp.eq.s32.totalorder %s36, 3
      %p252 = por %p250, %p251
      %p253 = scmp.ne.s32.totalorder %s242, %s243
      %p254 = scmp.eq.s32.totalorder %s36, 0
      %p255 = por %p253, %p254
      %p256 = scmp.ne.s32.totalorder %s242, %s243
      %p257 = scmp.eq.s32.totalorder %s37, 3
      %p258 = por %p256, %p257
      %p260 = scmp.ne.s32.totalorder %s243, %s259
      %p261 = scmp.eq.s32.totalorder %s37, 0
      %p262 = por %p260, %p261
      %s263 = ssub.s32 %s38, %s50
      %p264 = scmp.eq.s32.totalorder %s263, 0
      %s266 = sadd.s32 %s265, 1
      %s267 = scalar_select %p264, %s265, %s266
      %p270 = pneg %p264
      %p271 = scmp.eq.s32.totalorder %s31, 3
      %p272 = por %p270, %p271
      %p273 = scmp.ne.s32.totalorder %s265, %s268
      %p274 = scmp.eq.s32.totalorder %s31, 0
      %p275 = por %p273, %p274
      %p276 = scmp.ne.s32.totalorder %s265, %s268
      %p277 = scmp.eq.s32.totalorder %s36, 3
      %p278 = por %p276, %p277
      %p279 = scmp.ne.s32.totalorder %s268, %s269
      %p280 = scmp.eq.s32.totalorder %s36, 0
      %p281 = por %p279, %p280
      %p282 = scmp.ne.s32.totalorder %s268, %s269
      %p283 = scmp.eq.s32.totalorder %s37, 3
      %p284 = por %p282, %p283
      %p286 = scmp.ne.s32.totalorder %s269, %s285
      %p287 = scmp.eq.s32.totalorder %s37, 0
      %p288 = por %p286, %p287
      %s289 = ssub.s32 %s39, %s46
      %p290 = scmp.eq.s32.totalorder %s289, 0
      %s292 = sadd.s32 %s291, 1
      %s293 = scalar_select %p290, %s291, %s292
      %p296 = pneg %p290
      %p297 = scmp.eq.s32.totalorder %s31, 3
      %p298 = por %p296, %p297
      %p299 = scmp.ne.s32.totalorder %s291, %s294
      %p300 = scmp.eq.s32.totalorder %s31, 0
      %p301 = por %p299, %p300
      %p302 = scmp.ne.s32.totalorder %s291, %s294
      %p303 = scmp.eq.s32.totalorder %s36, 3
      %p304 = por %p302, %p303
      %p305 = scmp.ne.s32.totalorder %s294, %s295
      %p306 = scmp.eq.s32.totalorder %s36, 0
      %p307 = por %p305, %p306
      %p308 = scmp.ne.s32.totalorder %s294, %s295
      %p309 = scmp.eq.s32.totalorder %s37, 3
      %p310 = por %p308, %p309
      %p312 = scmp.ne.s32.totalorder %s295, %s311
      %p313 = scmp.eq.s32.totalorder %s37, 0
      %p314 = por %p312, %p313
      %s315 = ssub.s32 %s38, %s50
      %s316 = ssub.s32 %s39, %s46
      %s317 = sor.u32 %s315, %s316
      %p318 = scmp.eq.s32.totalorder %s317, 0
      %s320 = sadd.s32 %s319, 1
      %s321 = scalar_select %p318, %s319, %s320
      %p324 = pneg %p318
      %p325 = scmp.eq.s32.totalorder %s31, 3
      %p326 = por %p324, %p325
      %p327 = scmp.ne.s32.totalorder %s319, %s322
      %p328 = scmp.eq.s32.totalorder %s31, 0
      %p329 = por %p327, %p328
      %p330 = scmp.ne.s32.totalorder %s319, %s322
      %p331 = scmp.eq.s32.totalorder %s36, 3
      %p332 = por %p330, %p331
      %p333 = scmp.ne.s32.totalorder %s322, %s323
      %p334 = scmp.eq.s32.totalorder %s36, 0
      %p335 = por %p333, %p334
      %p336 = scmp.ne.s32.totalorder %s322, %s323
      %p337 = scmp.eq.s32.totalorder %s37, 3
      %p338 = por %p336, %p337
      %p340 = scmp.ne.s32.totalorder %s323, %s339
      %p341 = scmp.eq.s32.totalorder %s37, 0
      %p342 = por %p340, %p341
      %p343 = scmp.le.s32.totalorder 1, %s31
      %p344 = scmp.lt.s32.totalorder %s31, 5
      %p345 = pnand %p343, %p344
      %p346 = pneg %p345
      // Predicated region
      $region9: #{tpu_custom_call.1} parent=5 // pred_check
        _
      $region10: #{tpu_custom_call.1} parent=5 // pred_check_branch
        %348 = sbr.rel (%p345) target = $region12
      $region11: #{tpu_custom_call.1} parent=5 // pred_region
        %s349 = ssub.s32 %s31, 1
      $region12: #{tpu_custom_call.1} parent=5 // pred_fallthru
        _
      %p350 = scmp.lt.s32.totalorder %s31, 4
      // Predicated region
      $region13: #{tpu_custom_call.1} parent=5 // pred_check
        %p351 = pneg %p350
      $region14: #{tpu_custom_call.1} parent=5 // pred_check_branch
        %353 = sbr.rel (%p351) target = $region16
      $region15: #{tpu_custom_call.1} parent=5 // pred_region
        // Predicated region
        $region17: #{tpu_custom_call.1} parent=15 // pred_check
          %p354 = pneg %p65
        $region18: #{tpu_custom_call.1} parent=15 // pred_check_branch
          %356 = sbr.rel (%p354) target = $region20
        $region19: #{tpu_custom_call.1} parent=15 // pred_region
          %s357 = sand.u32 %s55, 1
          %s358 = scalar_lea.sflag [#allocation3], %s357
          %s359 = sand.u32 %s55, 1
          %s360 = smul.addr %s359, 64
          %s361 = scalar_lea.vmem [#allocation2], %s360
          %s362 = smul.u32 4, %s39
          %s364 = ssub.s32 1024, 1024
          %365 = vsyncadd %s358, %s364
          %s366 = smul.addr %s362, 2
          %s367 = smul.addr %s38, 16
          %s368 = sadd.s32 %s366, %s367
          %s369 = smul.addr %s368, 128
          %s370 = scalar_lea.hbm %s0, %s369
          %s371 = sshll.u32 %s361, 4
          %s372 = int_to_ptr.vmem [resolvable:$true] %s371
          %377 = dma.hbm_to_vmem [thread:$0]  %s370, 1024, %s372, %s358, 128, 128, 8
        $region20: #{tpu_custom_call.1} parent=15 // pred_fallthru
          _
        // Predicated region
        $region21: #{tpu_custom_call.1} parent=15 // pred_check
          %p378 = pneg %p93
        $region22: #{tpu_custom_call.1} parent=15 // pred_check_branch
          %380 = sbr.rel (%p378) target = $region24
        $region23: #{tpu_custom_call.1} parent=15 // pred_region
          %s381 = sand.u32 %s31, 1
          %s382 = scalar_lea.sflag [#allocation6], %s381
          %s383 = sand.u32 %s83, 1
          %s384 = smul.addr %s383, 64
          %s385 = scalar_lea.vmem [#allocation5], %s384
          %s386 = smul.u32 4, %s39
          %s388 = ssub.s32 1024, 1024
          %389 = vsyncadd %s382, %s388
          %s390 = smul.addr %s386, 2
          %s391 = smul.addr %s38, 16
          %s392 = sadd.s32 %s390, %s391
          %s393 = smul.addr %s392, 128
          %s394 = scalar_lea.hbm %s1, %s393
          %s395 = sshll.u32 %s385, 4
          %s396 = int_to_ptr.vmem [resolvable:$true] %s395
          %401 = dma.hbm_to_vmem [thread:$0]  %s394, 1024, %s396, %s382, 128, 128, 8
        $region24: #{tpu_custom_call.1} parent=15 // pred_fallthru
          _
        // Predicated region
        $region25: #{tpu_custom_call.1} parent=15 // pred_check
          %p402 = pneg %p119
        $region26: #{tpu_custom_call.1} parent=15 // pred_check_branch
          %404 = sbr.rel (%p402) target = $region28
        $region27: #{tpu_custom_call.1} parent=15 // pred_region
          %p405 = scmp.lt.s32.totalorder %s38, 1
          %s406 = scalar_select %p405, %s38, 1
          %s407 = smul.addr %s406, 4
          %s408 = smul.addr %s407, 4
          %s409 = scalar_lea.vmem %s2, %s408
        $region28: #{tpu_custom_call.1} parent=15 // pred_fallthru
          _
        // Predicated region
        $region29: #{tpu_custom_call.1} parent=15 // pred_check
          %p410 = pneg %p145
        $region30: #{tpu_custom_call.1} parent=15 // pred_check_branch
          %412 = sbr.rel (%p410) target = $region32
        $region31: #{tpu_custom_call.1} parent=15 // pred_region
          %s413 = sand.u32 %s31, 1
          %s414 = scalar_lea.sflag [#allocation6], %s413
          %s415 = sand.u32 %s135, 1
          %s416 = smul.addr %s415, 16
          %s417 = scalar_lea.vmem [#allocation7], %s416
          %s419 = ssub.s32 256, 256
          %420 = vsyncadd %s414, %s419
          %s421 = smul.addr %s38, 4
          %s422 = smul.addr %s421, 64
          %s423 = scalar_lea.hbm %s3, %s422
          %s424 = sshll.u32 %s417, 4
          %s425 = int_to_ptr.vmem [resolvable:$true] %s424
          %430 = dma.hbm_to_vmem [thread:$0]  %s423, 256, %s425, %s414, 64, 64, 4
        $region32: #{tpu_custom_call.1} parent=15 // pred_fallthru
          _
        // Predicated region
        $region33: #{tpu_custom_call.1} parent=15 // pred_check
          %p431 = pneg %p171
        $region34: #{tpu_custom_call.1} parent=15 // pred_check_branch
          %433 = sbr.rel (%p431) target = $region36
        $region35: #{tpu_custom_call.1} parent=15 // pred_region
          %s434 = sand.u32 %s31, 1
          %s435 = scalar_lea.sflag [#allocation9], %s434
          %s436 = sand.u32 %s161, 1
          %s437 = smul.addr %s436, 16
          %s438 = scalar_lea.vmem [#allocation8], %s437
          %s440 = ssub.s32 256, 256
          %441 = vsyncadd %s435, %s440
          %s442 = smul.addr %s38, 4
          %s443 = smul.addr %s442, 64
          %s444 = scalar_lea.hbm %s4, %s443
          %s445 = sshll.u32 %s438, 4
          %s446 = int_to_ptr.vmem [resolvable:$true] %s445
          %451 = dma.hbm_to_vmem [thread:$0]  %s444, 256, %s446, %s435, 64, 64, 4
        $region36: #{tpu_custom_call.1} parent=15 // pred_fallthru
          _
        // Predicated region
        $region37: #{tpu_custom_call.1} parent=15 // pred_check
          %p452 = pneg %p197
        $region38: #{tpu_custom_call.1} parent=15 // pred_check_branch
          %454 = sbr.rel (%p452) target = $region40
        $region39: #{tpu_custom_call.1} parent=15 // pred_region
          %s455 = sand.u32 %s31, 1
          %s456 = scalar_lea.sflag [#allocation9], %s455
          %s457 = sand.u32 %s187, 1
          %s458 = smul.addr %s457, 16
          %s459 = scalar_lea.vmem [#allocation10], %s458
          %s461 = ssub.s32 256, 256
          %462 = vsyncadd %s456, %s461
          %s463 = smul.addr %s38, 4
          %s464 = smul.addr %s463, 64
          %s465 = scalar_lea.hbm %s5, %s464
          %s466 = sshll.u32 %s459, 4
          %s467 = int_to_ptr.vmem [resolvable:$true] %s466
          %472 = dma.hbm_to_vmem [thread:$0]  %s465, 256, %s467, %s456, 64, 64, 4
        $region40: #{tpu_custom_call.1} parent=15 // pred_fallthru
          _
        // Predicated region
        $region41: #{tpu_custom_call.1} parent=15 // pred_check
          %p473 = pneg %p223
        $region42: #{tpu_custom_call.1} parent=15 // pred_check_branch
          %475 = sbr.rel (%p473) target = $region44
        $region43: #{tpu_custom_call.1} parent=15 // pred_region
          %p476 = scmp.lt.s32.totalorder %s38, 1
          %s477 = scalar_select %p476, %s38, 1
          %s478 = smul.addr %s477, 16
          %s479 = smul.addr %s478, 4
          %s480 = scalar_lea.vmem %s6, %s479
        $region44: #{tpu_custom_call.1} parent=15 // pred_fallthru
          _
        // Predicated region
        $region45: #{tpu_custom_call.1} parent=15 // pred_check
          %p481 = pneg %p249
        $region46: #{tpu_custom_call.1} parent=15 // pred_check_branch
          %483 = sbr.rel (%p481) target = $region48
        $region47: #{tpu_custom_call.1} parent=15 // pred_region
          %s484 = sand.u32 %s31, 1
          %s485 = scalar_lea.sflag [#allocation12], %s484
          %s486 = sand.u32 %s239, 1
          %s487 = smul.addr %s486, 16
          %s488 = scalar_lea.vmem [#allocation11], %s487
          %s490 = ssub.s32 256, 256
          %491 = vsyncadd %s485, %s490
          %s492 = smul.addr %s38, 2
          %s493 = smul.addr %s492, 128
          %s494 = scalar_lea.hbm %s7, %s493
          %s495 = sshll.u32 %s488, 4
          %s496 = int_to_ptr.vmem [resolvable:$true] %s495
          %501 = dma.hbm_to_vmem [thread:$0]  %s494, 256, %s496, %s485, 128, 128, 8
        $region48: #{tpu_custom_call.1} parent=15 // pred_fallthru
          _
        // Predicated region
        $region49: #{tpu_custom_call.1} parent=15 // pred_check
          %p502 = pneg %p275
        $region50: #{tpu_custom_call.1} parent=15 // pred_check_branch
          %504 = sbr.rel (%p502) target = $region52
        $region51: #{tpu_custom_call.1} parent=15 // pred_region
          %p505 = scmp.lt.s32.totalorder %s38, 1
          %s506 = scalar_select %p505, %s38, 1
          %s507 = smul.addr %s506, 8
          %s508 = smul.addr %s507, 8
          %s509 = scalar_lea.vmem %s8, %s508
        $region52: #{tpu_custom_call.1} parent=15 // pred_fallthru
          _
        // Predicated region
        $region53: #{tpu_custom_call.1} parent=15 // pred_check
          %p510 = pneg %p301
        $region54: #{tpu_custom_call.1} parent=15 // pred_check_branch
          %512 = sbr.rel (%p510) target = $region56
        $region55: #{tpu_custom_call.1} parent=15 // pred_region
          %s513 = sand.u32 %s31, 1
          %s514 = scalar_lea.sflag [#allocation12], %s513
          %s515 = sand.u32 %s291, 1
          %s516 = smul.addr %s515, 64
          %s517 = scalar_lea.vmem [#allocation13], %s516
          %s518 = smul.u32 4, %s39
          %s520 = ssub.s32 1024, 1024
          %521 = vsyncadd %s514, %s520
          %s522 = smul.addr %s518, 2
          %s523 = smul.addr %s522, 128
          %s524 = scalar_lea.hbm %s9, %s523
          %s525 = sshll.u32 %s517, 4
          %s526 = int_to_ptr.vmem [resolvable:$true] %s525
          %531 = dma.hbm_to_vmem [thread:$0]  %s524, 1024, %s526, %s514, 128, 128, 8
        $region56: #{tpu_custom_call.1} parent=15 // pred_fallthru
          _
      $region16: #{tpu_custom_call.1} parent=5 // pred_fallthru
        _
      %p532 = scmp.le.s32.totalorder 1, %s31
      %p533 = scmp.lt.s32.totalorder %s31, 5
      %p534 = pnand %p532, %p533
      %p535 = pneg %p534
      // Predicated region
      $region57: #{tpu_custom_call.1} parent=5 // pred_check
        _
      $region58: #{tpu_custom_call.1} parent=5 // pred_check_branch
        %537 = sbr.rel (%p534) target = $region60
      $region59: #{tpu_custom_call.1} parent=5 // pred_region
        %s538 = ssub.s32 %s31, 1
        %s539 = sand.u32 %s58, 1
        %s540 = scalar_lea.sflag [#allocation3], %s539
        %s541 = sand.u32 %s58, 1
        %s542 = smul.addr %s541, 64
        %s543 = scalar_lea.vmem [#allocation2], %s542
        // Predicated region
        $region61: #{tpu_custom_call.1} parent=59 // pred_check
          %p544 = pneg %p71
        $region62: #{tpu_custom_call.1} parent=59 // pred_check_branch
          %546 = sbr.rel (%p544) target = $region64
        $region63: #{tpu_custom_call.1} parent=59 // pred_region
          %547 = dma.done %s540, 1024
        $region64: #{tpu_custom_call.1} parent=59 // pred_fallthru
          _
        %s548 = sand.u32 %s36, 1
        %s549 = scalar_lea.sflag [#allocation6], %s548
        %s550 = sand.u32 %s86, 1
        %s551 = smul.addr %s550, 64
        %s552 = scalar_lea.vmem [#allocation5], %s551
        // Predicated region
        $region65: #{tpu_custom_call.1} parent=59 // pred_check
          %p553 = pneg %p99
        $region66: #{tpu_custom_call.1} parent=59 // pred_check_branch
          %555 = sbr.rel (%p553) target = $region68
        $region67: #{tpu_custom_call.1} parent=59 // pred_region
          %556 = dma.done %s549, 1024
        $region68: #{tpu_custom_call.1} parent=59 // pred_fallthru
          _
        %s557 = sand.u32 %s36, 1
        %s558 = scalar_lea.sflag [#allocation6], %s557
        %s559 = sand.u32 %s138, 1
        %s560 = smul.addr %s559, 16
        %s561 = scalar_lea.vmem [#allocation7], %s560
        // Predicated region
        $region69: #{tpu_custom_call.1} parent=59 // pred_check
          %p562 = pneg %p151
        $region70: #{tpu_custom_call.1} parent=59 // pred_check_branch
          %564 = sbr.rel (%p562) target = $region72
        $region71: #{tpu_custom_call.1} parent=59 // pred_region
          %565 = dma.done %s558, 256
        $region72: #{tpu_custom_call.1} parent=59 // pred_fallthru
          _
        %s566 = sand.u32 %s36, 1
        %s567 = scalar_lea.sflag [#allocation9], %s566
        %s568 = sand.u32 %s164, 1
        %s569 = smul.addr %s568, 16
        %s570 = scalar_lea.vmem [#allocation8], %s569
        // Predicated region
        $region73: #{tpu_custom_call.1} parent=59 // pred_check
          %p571 = pneg %p177
        $region74: #{tpu_custom_call.1} parent=59 // pred_check_branch
          %573 = sbr.rel (%p571) target = $region76
        $region75: #{tpu_custom_call.1} parent=59 // pred_region
          %574 = dma.done %s567, 256
        $region76: #{tpu_custom_call.1} parent=59 // pred_fallthru
          _
        %s575 = sand.u32 %s36, 1
        %s576 = scalar_lea.sflag [#allocation9], %s575
        %s577 = sand.u32 %s190, 1
        %s578 = smul.addr %s577, 16
        %s579 = scalar_lea.vmem [#allocation10], %s578
        // Predicated region
        $region77: #{tpu_custom_call.1} parent=59 // pred_check
          %p580 = pneg %p203
        $region78: #{tpu_custom_call.1} parent=59 // pred_check_branch
          %582 = sbr.rel (%p580) target = $region80
        $region79: #{tpu_custom_call.1} parent=59 // pred_region
          %583 = dma.done %s576, 256
        $region80: #{tpu_custom_call.1} parent=59 // pred_fallthru
          _
        %s584 = sand.u32 %s36, 1
        %s585 = scalar_lea.sflag [#allocation12], %s584
        %s586 = sand.u32 %s242, 1
        %s587 = smul.addr %s586, 16
        %s588 = scalar_lea.vmem [#allocation11], %s587
        // Predicated region
        $region81: #{tpu_custom_call.1} parent=59 // pred_check
          %p589 = pneg %p255
        $region82: #{tpu_custom_call.1} parent=59 // pred_check_branch
          %591 = sbr.rel (%p589) target = $region84
        $region83: #{tpu_custom_call.1} parent=59 // pred_region
          %592 = dma.done %s585, 256
        $region84: #{tpu_custom_call.1} parent=59 // pred_fallthru
          _
        %s593 = sand.u32 %s36, 1
        %s594 = scalar_lea.sflag [#allocation12], %s593
        %s595 = sand.u32 %s294, 1
        %s596 = smul.addr %s595, 64
        %s597 = scalar_lea.vmem [#allocation13], %s596
        // Predicated region
        $region85: #{tpu_custom_call.1} parent=59 // pred_check
          %p598 = pneg %p307
        $region86: #{tpu_custom_call.1} parent=59 // pred_check_branch
          %600 = sbr.rel (%p598) target = $region88
        $region87: #{tpu_custom_call.1} parent=59 // pred_region
          %601 = dma.done %s594, 1024
        $region88: #{tpu_custom_call.1} parent=59 // pred_fallthru
          _
        %s602 = sand.u32 %s58, 1
        %s603 = scalar_lea.sflag [#allocation3], %s602
        %s604 = sand.u32 %s58, 1
        %s605 = smul.addr %s604, 64
        %s606 = scalar_lea.vmem [#allocation2], %s605
        %p607 = pneg %p71
        %p608 = pneg %p68
        %s609 = sand.u32 %s36, 1
        %s610 = scalar_lea.sflag [#allocation6], %s609
        %s611 = sand.u32 %s86, 1
        %s612 = smul.addr %s611, 64
        %s613 = scalar_lea.vmem [#allocation5], %s612
        %p614 = pneg %p99
        %p615 = pneg %p96
        %p616 = scmp.lt.s32.totalorder %s40, 1
        %s617 = scalar_select %p616, %s40, 1
        %s618 = smul.addr %s617, 4
        %s619 = smul.addr %s618, 4
        %s620 = scalar_lea.vmem %s2, %s619
        %p621 = pneg %p125
        %p622 = pneg %p122
        %s623 = sand.u32 %s36, 1
        %s624 = scalar_lea.sflag [#allocation6], %s623
        %s625 = sand.u32 %s138, 1
        %s626 = smul.addr %s625, 16
        %s627 = scalar_lea.vmem [#allocation7], %s626
        %p628 = pneg %p151
        %p629 = pneg %p148
        %s630 = sand.u32 %s36, 1
        %s631 = scalar_lea.sflag [#allocation9], %s630
        %s632 = sand.u32 %s164, 1
        %s633 = smul.addr %s632, 16
        %s634 = scalar_lea.vmem [#allocation8], %s633
        %p635 = pneg %p177
        %p636 = pneg %p174
        %s637 = sand.u32 %s36, 1
        %s638 = scalar_lea.sflag [#allocation9], %s637
        %s639 = sand.u32 %s190, 1
        %s640 = smul.addr %s639, 16
        %s641 = scalar_lea.vmem [#allocation10], %s640
        %p642 = pneg %p203
        %p643 = pneg %p200
        %p644 = scmp.lt.s32.totalorder %s40, 1
        %s645 = scalar_select %p644, %s40, 1
        %s646 = smul.addr %s645, 16
        %s647 = smul.addr %s646, 4
        %s648 = scalar_lea.vmem %s6, %s647
        %p649 = pneg %p229
        %p650 = pneg %p226
        %s651 = sand.u32 %s36, 1
        %s652 = scalar_lea.sflag [#allocation12], %s651
        %s653 = sand.u32 %s242, 1
        %s654 = smul.addr %s653, 16
        %s655 = scalar_lea.vmem [#allocation11], %s654
        %p656 = pneg %p255
        %p657 = pneg %p252
        %p658 = scmp.lt.s32.totalorder %s40, 1
        %s659 = scalar_select %p658, %s40, 1
        %s660 = smul.addr %s659, 8
        %s661 = smul.addr %s660, 8
        %s662 = scalar_lea.vmem %s8, %s661
        %p663 = pneg %p281
        %p664 = pneg %p278
        %s665 = sand.u32 %s36, 1
        %s666 = scalar_lea.sflag [#allocation12], %s665
        %s667 = sand.u32 %s294, 1
        %s668 = smul.addr %s667, 64
        %s669 = scalar_lea.vmem [#allocation13], %s668
        %p670 = pneg %p307
        %p671 = pneg %p304
        %p672 = pneg %p335
        %p673 = pneg %p332
        %s674 = sand.u32 %s322, 1
        %s675 = scalar_lea.sflag [#allocation4], %s674
        %s676 = sand.u32 %s322, 1
        %s677 = smul.addr %s676, 64
        %s678 = scalar_lea.vmem [#allocation14], %s677
        %s679 = smul.u32 4, %s41
        %s680 = smul.u32 4, %s41
        %p681 = scmp.lt.s32.totalorder %s40, 1
        %s682 = scalar_select %p681, %s40, 1
        %s683 = smul.addr %s682, 4
        %s684 = smul.addr %s683, 4
        %s685 = scalar_lea.vmem %s2, %s684
        %p686 = scmp.lt.s32.totalorder %s40, 1
        %s687 = scalar_select %p686, %s40, 1
        %s688 = smul.addr %s687, 16
        %s689 = smul.addr %s688, 4
        %s690 = scalar_lea.vmem %s6, %s689
        %p691 = scmp.lt.s32.totalorder %s40, 1
        %s692 = scalar_select %p691, %s40, 1
        %s693 = smul.addr %s692, 8
        %s694 = smul.addr %s693, 8
        %s695 = scalar_lea.vmem %s8, %s694
        %s696 = smul.u32 4, %s41
        %s697 = smul.u32 4, %s41
        %v699 = vld [vmem:[%s543] sm:$0xff]
        %v700 = vld [vmem:[%s543 + $0x8] sm:$0xff]
        %v701 = vld [vmem:[%s543 + $0x10] sm:$0xff]
        %v702 = vld [vmem:[%s543 + $0x18] sm:$0xff]
        %v703 = vld [vmem:[%s543 + $0x20] sm:$0xff]
        %v704 = vld [vmem:[%s543 + $0x28] sm:$0xff]
        %v705 = vld [vmem:[%s543 + $0x30] sm:$0xff]
        %v706 = vld [vmem:[%s543 + $0x38] sm:$0xff]
        %v707 = vld [vmem:[%s552] sm:$0xff]
        %v708 = vld [vmem:[%s552 + $0x8] sm:$0xff]
        %v709 = vld [vmem:[%s552 + $0x10] sm:$0xff]
        %v710 = vld [vmem:[%s552 + $0x18] sm:$0xff]
        %v711 = vld [vmem:[%s552 + $0x20] sm:$0xff]
        %v712 = vld [vmem:[%s552 + $0x28] sm:$0xff]
        %v713 = vld [vmem:[%s552 + $0x30] sm:$0xff]
        %v714 = vld [vmem:[%s552 + $0x38] sm:$0xff]
        %v715 = vld [vmem:[%s588] sm:$0xff]
        %v716 = vld [vmem:[%s588 + $0x8] sm:$0xff]
        %vm717 = vcmask 261120
        %v718 = vsel %vm717, %v699, 0.0
        %719 = vadd.xlane.f32.xlu0 %v718
        %v720 = vpop.xlane.xlu0 %719
        %v721 = vsel %vm717, %v700, 0.0
        %722 = vadd.xlane.f32.xlu0 %v721
        %v723 = vpop.xlane.xlu0 %722
        %v724 = vsel %vm717, %v701, 0.0
        %725 = vadd.xlane.f32.xlu0 %v724
        %v726 = vpop.xlane.xlu0 %725
        %v727 = vsel %vm717, %v702, 0.0
        %728 = vadd.xlane.f32.xlu0 %v727
        %v729 = vpop.xlane.xlu0 %728
        %v730 = vsel %vm717, %v703, 0.0
        %731 = vadd.xlane.f32.xlu0 %v730
        %v732 = vpop.xlane.xlu0 %731
        %v733 = vsel %vm717, %v704, 0.0
        %734 = vadd.xlane.f32.xlu0 %v733
        %v735 = vpop.xlane.xlu0 %734
        %v736 = vsel %vm717, %v705, 0.0
        %737 = vadd.xlane.f32.xlu0 %v736
        %v738 = vpop.xlane.xlu0 %737
        %v739 = vsel %vm717, %v706, 0.0
        %740 = vadd.xlane.f32.xlu0 %v739
        %v741 = vpop.xlane.xlu0 %740
        %v742 = vrcp.pop 32.0
        %v743 = vmul.f32 %v720, %v742
        %v744 = vmul.f32 %v723, %v742
        %v745 = vmul.f32 %v726, %v742
        %v746 = vmul.f32 %v729, %v742
        %v747 = vmul.f32 %v732, %v742
        %v748 = vmul.f32 %v735, %v742
        %v749 = vmul.f32 %v738, %v742
        %v750 = vmul.f32 %v741, %v742
        %v751 = vsub.f32 %v699, %v743
        %v752 = vsub.f32 %v700, %v744
        %v753 = vsub.f32 %v701, %v745
        %v754 = vsub.f32 %v702, %v746
        %v755 = vsub.f32 %v703, %v747
        %v756 = vsub.f32 %v704, %v748
        %v757 = vsub.f32 %v705, %v749
        %v758 = vsub.f32 %v706, %v750
        %v759 = vmul.f32 %v751, %v751
        %v760 = vmul.f32 %v752, %v752
        %v761 = vmul.f32 %v753, %v753
        %v762 = vmul.f32 %v754, %v754
        %v763 = vmul.f32 %v755, %v755
        %v764 = vmul.f32 %v756, %v756
        %v765 = vmul.f32 %v757, %v757
        %v766 = vmul.f32 %v758, %v758
        %v767 = vsel %vm717, %v759, 0.0
        %768 = vadd.xlane.f32.xlu0 %v767
        %v769 = vpop.xlane.xlu0 %768
        %v770 = vsel %vm717, %v760, 0.0
        %771 = vadd.xlane.f32.xlu0 %v770
        %v772 = vpop.xlane.xlu0 %771
        %v773 = vsel %vm717, %v761, 0.0
        %774 = vadd.xlane.f32.xlu0 %v773
        %v775 = vpop.xlane.xlu0 %774
        %v776 = vsel %vm717, %v762, 0.0
        %777 = vadd.xlane.f32.xlu0 %v776
        %v778 = vpop.xlane.xlu0 %777
        %v779 = vsel %vm717, %v763, 0.0
        %780 = vadd.xlane.f32.xlu0 %v779
        %v781 = vpop.xlane.xlu0 %780
        %v782 = vsel %vm717, %v764, 0.0
        %783 = vadd.xlane.f32.xlu0 %v782
        %v784 = vpop.xlane.xlu0 %783
        %v785 = vsel %vm717, %v765, 0.0
        %786 = vadd.xlane.f32.xlu0 %v785
        %v787 = vpop.xlane.xlu0 %786
        %v788 = vsel %vm717, %v766, 0.0
        %789 = vadd.xlane.f32.xlu0 %v788
        %v790 = vpop.xlane.xlu0 %789
        %v791 = vmul.f32 %v769, %v742
        %v792 = vmul.f32 %v772, %v742
        %v793 = vmul.f32 %v775, %v742
        %v794 = vmul.f32 %v778, %v742
        %v795 = vmul.f32 %v781, %v742
        %v796 = vmul.f32 %v784, %v742
        %v797 = vmul.f32 %v787, %v742
        %v798 = vmul.f32 %v790, %v742
        %v799 = vadd.f32 %v791, 1e-05
        %v800 = vadd.f32 %v792, 1e-05
        %v801 = vadd.f32 %v793, 1e-05
        %v802 = vadd.f32 %v794, 1e-05
        %v803 = vadd.f32 %v795, 1e-05
        %v804 = vadd.f32 %v796, 1e-05
        %v805 = vadd.f32 %v797, 1e-05
        %v806 = vadd.f32 %v798, 1e-05
        %v807 = vrsqrt.pop %v799
        %v808 = vrsqrt.pop %v800
        %v809 = vrsqrt.pop %v801
        %v810 = vrsqrt.pop %v802
        %v811 = vrsqrt.pop %v803
        %v812 = vrsqrt.pop %v804
        %v813 = vrsqrt.pop %v805
        %v814 = vrsqrt.pop %v806
        %v815 = vmul.f32 %v751, %v807
        %v816 = vmul.f32 %v752, %v808
        %v817 = vmul.f32 %v753, %v809
        %v818 = vmul.f32 %v754, %v810
        %v819 = vmul.f32 %v755, %v811
        %v820 = vmul.f32 %v756, %v812
        %v821 = vmul.f32 %v757, %v813
        %v822 = vmul.f32 %v758, %v814
        %v823 = vlaneseq
        %v824 = vshrl.u32 %v823, 7
        %v825 = vsub.s32 0, %v824
        %v826 = vrot.slane %v715, %v825
        %v827 = vmul.f32 %v815, %v826
        %v828 = vmul.f32 %v816, %v826
        %v829 = vmul.f32 %v817, %v826
        %v830 = vmul.f32 %v818, %v826
        %v831 = vmul.f32 %v819, %v826
        %v832 = vmul.f32 %v820, %v826
        %v833 = vmul.f32 %v821, %v826
        %v834 = vmul.f32 %v822, %v826
        %v835 = vlaneseq
        %v836 = vshrl.u32 %v835, 7
        %v837 = vsub.s32 1, %v836
        %v838 = vrot.slane %v715, %v837
        %v839 = vadd.f32 %v827, %v838
        %v840 = vadd.f32 %v828, %v838
        %v841 = vadd.f32 %v829, %v838
        %v842 = vadd.f32 %v830, %v838
        %v843 = vadd.f32 %v831, %v838
        %v844 = vadd.f32 %v832, %v838
        %v845 = vadd.f32 %v833, %v838
        %v846 = vadd.f32 %v834, %v838
        %v847 = vsel %vm717, %v707, 0.0
        %848 = vadd.xlane.f32.xlu0 %v847
        %v849 = vpop.xlane.xlu0 %848
        %v850 = vsel %vm717, %v708, 0.0
        %851 = vadd.xlane.f32.xlu0 %v850
        %v852 = vpop.xlane.xlu0 %851
        %v853 = vsel %vm717, %v709, 0.0
        %854 = vadd.xlane.f32.xlu0 %v853
        %v855 = vpop.xlane.xlu0 %854
        %v856 = vsel %vm717, %v710, 0.0
        %857 = vadd.xlane.f32.xlu0 %v856
        %v858 = vpop.xlane.xlu0 %857
        %v859 = vsel %vm717, %v711, 0.0
        %860 = vadd.xlane.f32.xlu0 %v859
        %v861 = vpop.xlane.xlu0 %860
        %v862 = vsel %vm717, %v712, 0.0
        %863 = vadd.xlane.f32.xlu0 %v862
        %v864 = vpop.xlane.xlu0 %863
        %v865 = vsel %vm717, %v713, 0.0
        %866 = vadd.xlane.f32.xlu0 %v865
        %v867 = vpop.xlane.xlu0 %866
        %v868 = vsel %vm717, %v714, 0.0
        %869 = vadd.xlane.f32.xlu0 %v868
        %v870 = vpop.xlane.xlu0 %869
        %v871 = vmul.f32 %v849, %v742
        %v872 = vmul.f32 %v852, %v742
        %v873 = vmul.f32 %v855, %v742
        %v874 = vmul.f32 %v858, %v742
        %v875 = vmul.f32 %v861, %v742
        %v876 = vmul.f32 %v864, %v742
        %v877 = vmul.f32 %v867, %v742
        %v878 = vmul.f32 %v870, %v742
        %v879 = vsub.f32 %v707, %v871
        %v880 = vsub.f32 %v708, %v872
        %v881 = vsub.f32 %v709, %v873
        %v882 = vsub.f32 %v710, %v874
        %v883 = vsub.f32 %v711, %v875
        %v884 = vsub.f32 %v712, %v876
        %v885 = vsub.f32 %v713, %v877
        %v886 = vsub.f32 %v714, %v878
        %v887 = vmul.f32 %v879, %v879
        %v888 = vmul.f32 %v880, %v880
        %v889 = vmul.f32 %v881, %v881
        %v890 = vmul.f32 %v882, %v882
        %v891 = vmul.f32 %v883, %v883
        %v892 = vmul.f32 %v884, %v884
        %v893 = vmul.f32 %v885, %v885
        %v894 = vmul.f32 %v886, %v886
        %v895 = vsel %vm717, %v887, 0.0
        %896 = vadd.xlane.f32.xlu0 %v895
        %v897 = vpop.xlane.xlu0 %896
        %v898 = vsel %vm717, %v888, 0.0
        %899 = vadd.xlane.f32.xlu0 %v898
        %v900 = vpop.xlane.xlu0 %899
        %v901 = vsel %vm717, %v889, 0.0
        %902 = vadd.xlane.f32.xlu0 %v901
        %v903 = vpop.xlane.xlu0 %902
        %v904 = vsel %vm717, %v890, 0.0
        %905 = vadd.xlane.f32.xlu0 %v904
        %v906 = vpop.xlane.xlu0 %905
        %v907 = vsel %vm717, %v891, 0.0
        %908 = vadd.xlane.f32.xlu0 %v907
        %v909 = vpop.xlane.xlu0 %908
        %v910 = vsel %vm717, %v892, 0.0
        %911 = vadd.xlane.f32.xlu0 %v910
        %v912 = vpop.xlane.xlu0 %911
        %v913 = vsel %vm717, %v893, 0.0
        %914 = vadd.xlane.f32.xlu0 %v913
        %v915 = vpop.xlane.xlu0 %914
        %v916 = vsel %vm717, %v894, 0.0
        %917 = vadd.xlane.f32.xlu0 %v916
        %v918 = vpop.xlane.xlu0 %917
        %v919 = vmul.f32 %v897, %v742
        %v920 = vmul.f32 %v900, %v742
        %v921 = vmul.f32 %v903, %v742
        %v922 = vmul.f32 %v906, %v742
        %v923 = vmul.f32 %v909, %v742
        %v924 = vmul.f32 %v912, %v742
        %v925 = vmul.f32 %v915, %v742
        %v926 = vmul.f32 %v918, %v742
        %v927 = vadd.f32 %v919, 1e-05
        %v928 = vadd.f32 %v920, 1e-05
        %v929 = vadd.f32 %v921, 1e-05
        %v930 = vadd.f32 %v922, 1e-05
        %v931 = vadd.f32 %v923, 1e-05
        %v932 = vadd.f32 %v924, 1e-05
        %v933 = vadd.f32 %v925, 1e-05
        %v934 = vadd.f32 %v926, 1e-05
        %v935 = vrsqrt.pop %v927
        %v936 = vrsqrt.pop %v928
        %v937 = vrsqrt.pop %v929
        %v938 = vrsqrt.pop %v930
        %v939 = vrsqrt.pop %v931
        %v940 = vrsqrt.pop %v932
        %v941 = vrsqrt.pop %v933
        %v942 = vrsqrt.pop %v934
        %v943 = vmul.f32 %v879, %v935
        %v944 = vmul.f32 %v880, %v936
        %v945 = vmul.f32 %v881, %v937
        %v946 = vmul.f32 %v882, %v938
        %v947 = vmul.f32 %v883, %v939
        %v948 = vmul.f32 %v884, %v940
        %v949 = vmul.f32 %v885, %v941
        %v950 = vmul.f32 %v886, %v942
        %v951 = vlaneseq
        %v952 = vshrl.u32 %v951, 7
        %v953 = vsub.s32 2, %v952
        %v954 = vrot.slane %v715, %v953
        %v955 = vmul.f32 %v943, %v954
        %v956 = vmul.f32 %v944, %v954
        %v957 = vmul.f32 %v945, %v954
        %v958 = vmul.f32 %v946, %v954
        %v959 = vmul.f32 %v947, %v954
        %v960 = vmul.f32 %v948, %v954
        %v961 = vmul.f32 %v949, %v954
        %v962 = vmul.f32 %v950, %v954
        %v963 = vlaneseq
        %v964 = vshrl.u32 %v963, 7
        %v965 = vsub.s32 3, %v964
        %v966 = vrot.slane %v715, %v965
        %v967 = vadd.f32 %v955, %v966
        %v968 = vadd.f32 %v956, %v966
        %v969 = vadd.f32 %v957, %v966
        %v970 = vadd.f32 %v958, %v966
        %v971 = vadd.f32 %v959, %v966
        %v972 = vadd.f32 %v960, %v966
        %v973 = vadd.f32 %v961, %v966
        %v974 = vadd.f32 %v962, %v966
        %v975 = vpack.c.bf16 %v840, %v839
        %v976 = vpack.c.bf16 %v842, %v841
        %v977 = vpack.c.bf16 %v844, %v843
        %v978 = vpack.c.bf16 %v846, %v845
        %v979 = vld [vmem:[%s685] sm:$0xf]
        %v980 = vld [vmem:[%s685 + $0x4] sm:$0xf]
        %v981 = vld [vmem:[%s685 + $0x8] sm:$0xf]
        %v982 = vld [vmem:[%s685 + $0xc] sm:$0xf]
        %v983 = vlaneseq
        %v984 = vshrl.u32 %v983, 7
        %v985 = vsub.s32 4, %v984
        %v986 = vrot.slane %v715, %v985
        %v991 = vunpack.c.l.b16 %v979
        %v992 = vunpack.c.l.b16 %v980
        %v993 = vunpack.c.l.b16 %v981
        %v994 = vunpack.c.l.b16 %v982
        %v995 = vpack.c.b16 %v992, %v991
        %v996 = vpack.c.b16 %v994, %v993
        %v1000 = vsel %vm717, %v975, 0
        %v1003 = vsel %vm717, %v976, 0
        %v1006 = vsel %vm717, %v977, 0
        %v1009 = vsel %vm717, %v978, 0
        %1011 = vmatprep.subr.bf16.mxu0 0
        %1012 = vmatpush1.bf16.msra.mxu0 0
        %1013 = vmatprep.subr.bf16.mxu0 0
        %1014 = vmatpush1.bf16.msra.mxu0 0
        %1015 = vmatprep.subr.bf16.mxu0 0
        %1016 = vmatpush1.bf16.msra.mxu0 0
        %1017 = vmatprep.subr.bf16.mxu0 0
        %1018 = vmatpush1.bf16.msra.mxu0 0
        %1019 = vmatprep.subr.bf16.mxu0 0
        %1020 = vmatpush1.bf16.msra.mxu0 0
        %1021 = vmatprep.subr.bf16.mxu0 0
        %1022 = vmatpush1.bf16.msra.mxu0 0
        %1023 = vmatprep.subr.bf16.mxu0 0
        %1024 = vmatpush1.bf16.msra.mxu0 %v996
        %1025 = vmatprep.subr.bf16.mxu0 0
        %1026 = vmatpush1.bf16.msra.mxu0 %v995
        %1027 = vmatprep.subr.bf16.mxu0 0
        %1028 = vmatpush2.bf16.msra.mxu0 0
        %1029 = vmatprep.subr.bf16.mxu0 0
        %1030 = vmatpush2.bf16.msra.mxu0 0
        %1031 = vmatprep.subr.bf16.mxu0 0
        %1032 = vmatpush2.bf16.msra.mxu0 0
        %1033 = vmatprep.subr.bf16.mxu0 0
        %1034 = vmatpush2.bf16.msra.mxu0 0
        %1035 = vmatprep.subr.bf16.mxu0 0
        %1036 = vmatpush2.bf16.msra.mxu0 0
        %1037 = vmatprep.subr.bf16.mxu0 0
        %1038 = vmatpush2.bf16.msra.mxu0 0
        %1039 = vmatprep.subr.bf16.mxu0 0
        %1040 = vmatpush2.bf16.msra.mxu0 0
        %1041 = vmatprep.subr.bf16.mxu0 0
        %1042 = vmatpush2.bf16.msra.mxu0 0
        %1043 = vmatprep.mubr.bf16.mxu0 0
        %1044 = vmatmul.mubr.bf16.gmra.mxu0 %v1000
        %v1045 = vpop.f32.mrf.mxu0
        %v1046 = vadd.f32 %v986, %v1045
        %v1047 = vpop.f32.mrf.mxu0
        %v1048 = vpop.f32.mrf.mxu0
        %v1049 = vadd.f32 %v986, %v1048
        %v1050 = vpop.f32.mrf.mxu0
        %1051 = vmatprep.mubr.bf16.mxu0 0
        %1052 = vmatmul.mubr.bf16.gmra.mxu0 %v1003
        %v1053 = vpop.f32.mrf.mxu0
        %v1054 = vadd.f32 %v986, %v1053
        %v1055 = vpop.f32.mrf.mxu0
        %v1056 = vpop.f32.mrf.mxu0
        %v1057 = vadd.f32 %v986, %v1056
        %v1058 = vpop.f32.mrf.mxu0
        %1059 = vmatprep.mubr.bf16.mxu0 0
        %1060 = vmatmul.mubr.bf16.gmra.mxu0 %v1006
        %v1061 = vpop.f32.mrf.mxu0
        %v1062 = vadd.f32 %v986, %v1061
        %v1063 = vpop.f32.mrf.mxu0
        %v1064 = vpop.f32.mrf.mxu0
        %v1065 = vadd.f32 %v986, %v1064
        %v1066 = vpop.f32.mrf.mxu0
        %1067 = vmatprep.mubr.bf16.mxu0 0
        %1068 = vmatmul.mubr.bf16.gmra.mxu0 %v1009
        %v1069 = vpop.f32.mrf.mxu0
        %v1070 = vadd.f32 %v986, %v1069
        %v1071 = vpop.f32.mrf.mxu0
        %v1072 = vpop.f32.mrf.mxu0
        %v1073 = vadd.f32 %v986, %v1072
        %v1074 = vpop.f32.mrf.mxu0
        %1075 = vdwg.mxu0
        %v1076 = vmul.f32 %v1046, 0.35355338
        %v1077 = vmul.f32 %v1049, 0.35355338
        %v1078 = vmul.f32 %v1054, 0.35355338
        %v1079 = vmul.f32 %v1057, 0.35355338
        %v1080 = vmul.f32 %v1062, 0.35355338
        %v1081 = vmul.f32 %v1065, 0.35355338
        %v1082 = vmul.f32 %v1070, 0.35355338
        %v1083 = vmul.f32 %v1073, 0.35355338
        %v1084 = vpack.c.bf16 %v968, %v967
        %v1085 = vpack.c.bf16 %v970, %v969
        %v1086 = vpack.c.bf16 %v972, %v971
        %v1087 = vpack.c.bf16 %v974, %v973
        %v1088 = vld [vmem:[%s561] sm:$0xf]
        %v1089 = vld [vmem:[%s561 + $0x4] sm:$0xf]
        %v1090 = vld [vmem:[%s561 + $0x8] sm:$0xf]
        %v1091 = vld [vmem:[%s561 + $0xc] sm:$0xf]
        %v1096 = vunpack.c.l.b16 %v1088
        %v1097 = vunpack.c.l.b16 %v1089
        %v1098 = vunpack.c.l.b16 %v1090
        %v1099 = vunpack.c.l.b16 %v1091
        %v1100 = vpack.c.b16 %v1097, %v1096
        %v1101 = vpack.c.b16 %v1099, %v1098
        %v1105 = vsel %vm717, %v1084, 0
        %v1108 = vsel %vm717, %v1085, 0
        %v1111 = vsel %vm717, %v1086, 0
        %v1114 = vsel %vm717, %v1087, 0
        %1116 = vmatprep.subr.bf16.mxu0 0
        %1117 = vmatpush1.bf16.msra.mxu0 0
        %1118 = vmatprep.subr.bf16.mxu0 0
        %1119 = vmatpush1.bf16.msra.mxu0 0
        %1120 = vmatprep.subr.bf16.mxu0 0
        %1121 = vmatpush1.bf16.msra.mxu0 0
        %1122 = vmatprep.subr.bf16.mxu0 0
        %1123 = vmatpush1.bf16.msra.mxu0 0
        %1124 = vmatprep.subr.bf16.mxu0 0
        %1125 = vmatpush1.bf16.msra.mxu0 0
        %1126 = vmatprep.subr.bf16.mxu0 0
        %1127 = vmatpush1.bf16.msra.mxu0 0
        %1128 = vmatprep.subr.bf16.mxu0 0
        %1129 = vmatpush1.bf16.msra.mxu0 %v1101
        %1130 = vmatprep.subr.bf16.mxu0 0
        %1131 = vmatpush1.bf16.msra.mxu0 %v1100
        %1132 = vmatprep.subr.bf16.mxu0 0
        %1133 = vmatpush2.bf16.msra.mxu0 0
        %1134 = vmatprep.subr.bf16.mxu0 0
        %1135 = vmatpush2.bf16.msra.mxu0 0
        %1136 = vmatprep.subr.bf16.mxu0 0
        %1137 = vmatpush2.bf16.msra.mxu0 0
        %1138 = vmatprep.subr.bf16.mxu0 0
        %1139 = vmatpush2.bf16.msra.mxu0 0
        %1140 = vmatprep.subr.bf16.mxu0 0
        %1141 = vmatpush2.bf16.msra.mxu0 0
        %1142 = vmatprep.subr.bf16.mxu0 0
        %1143 = vmatpush2.bf16.msra.mxu0 0
        %1144 = vmatprep.subr.bf16.mxu0 0
        %1145 = vmatpush2.bf16.msra.mxu0 0
        %1146 = vmatprep.subr.bf16.mxu0 0
        %1147 = vmatpush2.bf16.msra.mxu0 0
        %1148 = vmatprep.mubr.bf16.mxu0 0
        %1149 = vmatmul.mubr.bf16.gmra.mxu0 %v1105
        %v1150 = vpop.f32.mrf.mxu0
        %v1151 = vadd.f32 0.0, %v1150
        %v1152 = vpop.f32.mrf.mxu0
        %v1153 = vpop.f32.mrf.mxu0
        %v1154 = vadd.f32 0.0, %v1153
        %v1155 = vpop.f32.mrf.mxu0
        %1156 = vmatprep.mubr.bf16.mxu0 0
        %1157 = vmatmul.mubr.bf16.gmra.mxu0 %v1108
        %v1158 = vpop.f32.mrf.mxu0
        %v1159 = vadd.f32 0.0, %v1158
        %v1160 = vpop.f32.mrf.mxu0
        %v1161 = vpop.f32.mrf.mxu0
        %v1162 = vadd.f32 0.0, %v1161
        %v1163 = vpop.f32.mrf.mxu0
        %1164 = vmatprep.mubr.bf16.mxu0 0
        %1165 = vmatmul.mubr.bf16.gmra.mxu0 %v1111
        %v1166 = vpop.f32.mrf.mxu0
        %v1167 = vadd.f32 0.0, %v1166
        %v1168 = vpop.f32.mrf.mxu0
        %v1169 = vpop.f32.mrf.mxu0
        %v1170 = vadd.f32 0.0, %v1169
        %v1171 = vpop.f32.mrf.mxu0
        %1172 = vmatprep.mubr.bf16.mxu0 0
        %1173 = vmatmul.mubr.bf16.gmra.mxu0 %v1114
        %v1174 = vpop.f32.mrf.mxu0
        %v1175 = vadd.f32 0.0, %v1174
        %v1176 = vpop.f32.mrf.mxu0
        %v1177 = vpop.f32.mrf.mxu0
        %v1178 = vadd.f32 0.0, %v1177
        %v1179 = vpop.f32.mrf.mxu0
        %1180 = vdwg.mxu0
        %v1181 = vlaneseq
        %v1182 = vshrl.u32 %v1181, 7
        %v1183 = vsub.s32 5, %v1182
        %v1184 = vrot.slane %v715, %v1183
        %v1185 = vadd.f32 %v1151, %v1184
        %v1186 = vadd.f32 %v1154, %v1184
        %v1187 = vadd.f32 %v1159, %v1184
        %v1188 = vadd.f32 %v1162, %v1184
        %v1189 = vadd.f32 %v1167, %v1184
        %v1190 = vadd.f32 %v1170, %v1184
        %v1191 = vadd.f32 %v1175, %v1184
        %v1192 = vadd.f32 %v1178, %v1184
        %v1193 = vlaneseq
        %v1194 = vshrl.u32 %v1193, 7
        %v1195 = vsub.s32 6, %v1194
        %v1196 = vrot.slane %v715, %v1195
        %1198 = vrot.lane.b32.xlu0 %v1196, 32
        %v1199 = vpop.permute.xlu0 %1198
        %v1201 = vadd.f32 %v1151, %v1199
        %v1202 = vadd.f32 %v1154, %v1199
        %v1203 = vadd.f32 %v1159, %v1199
        %v1204 = vadd.f32 %v1162, %v1199
        %v1205 = vadd.f32 %v1167, %v1199
        %v1206 = vadd.f32 %v1170, %v1199
        %v1207 = vadd.f32 %v1175, %v1199
        %v1208 = vadd.f32 %v1178, %v1199
        %v1209 = vld [vmem:[%s695] sm:$0xff]
        %v1210 = vld [vmem:[%s695 + $0x8] sm:$0xff]
        %v1211 = vld [vmem:[%s695 + $0x10] sm:$0xff]
        %v1212 = vld [vmem:[%s695 + $0x18] sm:$0xff]
        %v1213 = vld [vmem:[%s695 + $0x20] sm:$0xff]
        %v1214 = vld [vmem:[%s695 + $0x28] sm:$0xff]
        %v1215 = vld [vmem:[%s695 + $0x30] sm:$0xff]
        %v1216 = vld [vmem:[%s695 + $0x38] sm:$0xff]
        %v1217 = vld [vmem:[%s597] sm:$0xff]
        %v1218 = vld [vmem:[%s597 + $0x8] sm:$0xff]
        %v1219 = vld [vmem:[%s597 + $0x10] sm:$0xff]
        %v1220 = vld [vmem:[%s597 + $0x18] sm:$0xff]
        %v1221 = vld [vmem:[%s597 + $0x20] sm:$0xff]
        %v1222 = vld [vmem:[%s597 + $0x28] sm:$0xff]
        %v1223 = vld [vmem:[%s597 + $0x30] sm:$0xff]
        %v1224 = vld [vmem:[%s597 + $0x38] sm:$0xff]
        %vm1225 = vcmask 64512
        %v1227 = vsel %vm1225, %v1076, 0
        %v1230 = vsel %vm1225, %v1077, 0
        %v1233 = vsel %vm1225, %v1185, 0
        %v1236 = vsel %vm1225, %v1186, 0
        %1238 = vmatprep.subr.mxu0 0.0
        %1239 = vmatpush1.xpose.msra.mxu0 0.0
        %1240 = vmatprep.subr.mxu0 0.0
        %1241 = vmatpush1.xpose.msra.mxu0 0.0
        %1242 = vmatprep.subr.mxu0 0.0
        %1243 = vmatpush1.xpose.msra.mxu0 0.0
        %1244 = vmatprep.subr.mxu0 0.0
        %1245 = vmatpush1.xpose.msra.mxu0 0.0
        %1246 = vmatprep.subr.mxu0 0.0
        %1247 = vmatpush1.xpose.msra.mxu0 0.0
        %1248 = vmatprep.subr.mxu0 0.0
        %1249 = vmatpush1.xpose.msra.mxu0 0.0
        %1250 = vmatprep.subr.mxu0 0.0
        %1251 = vmatpush1.xpose.msra.mxu0 0.0
        %1252 = vmatprep.subr.mxu0 0.0
        %1253 = vmatpush1.xpose.msra.mxu0 0.0
        %1254 = vmatprep.subr.mxu0 0.0
        %1255 = vmatpush1.xpose.msra.mxu0 0.0
        %1256 = vmatprep.subr.mxu0 0.0
        %1257 = vmatpush1.xpose.msra.mxu0 0.0
        %1258 = vmatprep.subr.mxu0 0.0
        %1259 = vmatpush1.xpose.msra.mxu0 0.0
        %1260 = vmatprep.subr.mxu0 0.0
        %1261 = vmatpush1.xpose.msra.mxu0 0.0
        %1262 = vmatprep.subr.mxu0 0.0
        %1263 = vmatpush1.xpose.msra.mxu0 0.0
        %1264 = vmatprep.subr.mxu0 0.0
        %1265 = vmatpush1.xpose.msra.mxu0 0.0
        %1266 = vmatprep.subr.mxu0 0.0
        %1267 = vmatpush1.xpose.msra.mxu0 %v1236
        %1268 = vmatprep.subr.mxu0 0.0
        %1269 = vmatpush1.xpose.msra.mxu0 %v1233
        %1270 = vmatprep.subr.mxu0 0.0
        %1271 = vmatpush2.xpose.msra.mxu0 0.0
        %1272 = vmatprep.subr.mxu0 0.0
        %1273 = vmatpush2.xpose.msra.mxu0 0.0
        %1274 = vmatprep.subr.mxu0 0.0
        %1275 = vmatpush2.xpose.msra.mxu0 0.0
        %1276 = vmatprep.subr.mxu0 0.0
        %1277 = vmatpush2.xpose.msra.mxu0 0.0
        %1278 = vmatprep.subr.mxu0 0.0
        %1279 = vmatpush2.xpose.msra.mxu0 0.0
        %1280 = vmatprep.subr.mxu0 0.0
        %1281 = vmatpush2.xpose.msra.mxu0 0.0
        %1282 = vmatprep.subr.mxu0 0.0
        %1283 = vmatpush2.xpose.msra.mxu0 0.0
        %1284 = vmatprep.subr.mxu0 0.0
        %1285 = vmatpush2.xpose.msra.mxu0 0.0
        %1286 = vmatprep.subr.mxu0 0.0
        %1287 = vmatpush2.xpose.msra.mxu0 0.0
        %1288 = vmatprep.subr.mxu0 0.0
        %1289 = vmatpush2.xpose.msra.mxu0 0.0
        %1290 = vmatprep.subr.mxu0 0.0
        %1291 = vmatpush2.xpose.msra.mxu0 0.0
        %1292 = vmatprep.subr.mxu0 0.0
        %1293 = vmatpush2.xpose.msra.mxu0 0.0
        %1294 = vmatprep.subr.mxu0 0.0
        %1295 = vmatpush2.xpose.msra.mxu0 0.0
        %1296 = vmatprep.subr.mxu0 0.0
        %1297 = vmatpush2.xpose.msra.mxu0 0.0
        %1298 = vmatprep.subr.mxu0 0.0
        %1299 = vmatpush2.xpose.msra.mxu0 0.0
        %1300 = vmatprep.subr.mxu0 0.0
        %1301 = vmatpush2.xpose.msra.mxu0 0.0
        %1302 = vmatprep.mubr.f32.mxu0 0.0
        %1303 = vmatmul.mubr.f32.gmra.mxu0 %v1227
        %v1304 = vpop.f32.mrf.mxu0
        %v1305 = vadd.f32 %v1209, %v1304
        %v1306 = vpop.f32.mrf.mxu0
        %1307 = vmatprep.mubr.f32.mxu0 0.0
        %1308 = vmatmul.mubr.f32.gmra.mxu0 %v1230
        %v1309 = vpop.f32.mrf.mxu0
        %v1310 = vadd.f32 %v1210, %v1309
        %v1311 = vpop.f32.mrf.mxu0
        %1312 = vdwg.mxu0
        %v1314 = vsel %vm1225, %v1078, 0
        %v1317 = vsel %vm1225, %v1079, 0
        %v1320 = vsel %vm1225, %v1187, 0
        %v1323 = vsel %vm1225, %v1188, 0
        %1325 = vmatprep.subr.mxu0 0.0
        %1326 = vmatpush1.xpose.msra.mxu0 0.0
        %1327 = vmatprep.subr.mxu0 0.0
        %1328 = vmatpush1.xpose.msra.mxu0 0.0
        %1329 = vmatprep.subr.mxu0 0.0
        %1330 = vmatpush1.xpose.msra.mxu0 0.0
        %1331 = vmatprep.subr.mxu0 0.0
        %1332 = vmatpush1.xpose.msra.mxu0 0.0
        %1333 = vmatprep.subr.mxu0 0.0
        %1334 = vmatpush1.xpose.msra.mxu0 0.0
        %1335 = vmatprep.subr.mxu0 0.0
        %1336 = vmatpush1.xpose.msra.mxu0 0.0
        %1337 = vmatprep.subr.mxu0 0.0
        %1338 = vmatpush1.xpose.msra.mxu0 0.0
        %1339 = vmatprep.subr.mxu0 0.0
        %1340 = vmatpush1.xpose.msra.mxu0 0.0
        %1341 = vmatprep.subr.mxu0 0.0
        %1342 = vmatpush1.xpose.msra.mxu0 0.0
        %1343 = vmatprep.subr.mxu0 0.0
        %1344 = vmatpush1.xpose.msra.mxu0 0.0
        %1345 = vmatprep.subr.mxu0 0.0
        %1346 = vmatpush1.xpose.msra.mxu0 0.0
        %1347 = vmatprep.subr.mxu0 0.0
        %1348 = vmatpush1.xpose.msra.mxu0 0.0
        %1349 = vmatprep.subr.mxu0 0.0
        %1350 = vmatpush1.xpose.msra.mxu0 0.0
        %1351 = vmatprep.subr.mxu0 0.0
        %1352 = vmatpush1.xpose.msra.mxu0 0.0
        %1353 = vmatprep.subr.mxu0 0.0
        %1354 = vmatpush1.xpose.msra.mxu0 %v1323
        %1355 = vmatprep.subr.mxu0 0.0
        %1356 = vmatpush1.xpose.msra.mxu0 %v1320
        %1357 = vmatprep.subr.mxu0 0.0
        %1358 = vmatpush2.xpose.msra.mxu0 0.0
        %1359 = vmatprep.subr.mxu0 0.0
        %1360 = vmatpush2.xpose.msra.mxu0 0.0
        %1361 = vmatprep.subr.mxu0 0.0
        %1362 = vmatpush2.xpose.msra.mxu0 0.0
        %1363 = vmatprep.subr.mxu0 0.0
        %1364 = vmatpush2.xpose.msra.mxu0 0.0
        %1365 = vmatprep.subr.mxu0 0.0
        %1366 = vmatpush2.xpose.msra.mxu0 0.0
        %1367 = vmatprep.subr.mxu0 0.0
        %1368 = vmatpush2.xpose.msra.mxu0 0.0
        %1369 = vmatprep.subr.mxu0 0.0
        %1370 = vmatpush2.xpose.msra.mxu0 0.0
        %1371 = vmatprep.subr.mxu0 0.0
        %1372 = vmatpush2.xpose.msra.mxu0 0.0
        %1373 = vmatprep.subr.mxu0 0.0
        %1374 = vmatpush2.xpose.msra.mxu0 0.0
        %1375 = vmatprep.subr.mxu0 0.0
        %1376 = vmatpush2.xpose.msra.mxu0 0.0
        %1377 = vmatprep.subr.mxu0 0.0
        %1378 = vmatpush2.xpose.msra.mxu0 0.0
        %1379 = vmatprep.subr.mxu0 0.0
        %1380 = vmatpush2.xpose.msra.mxu0 0.0
        %1381 = vmatprep.subr.mxu0 0.0
        %1382 = vmatpush2.xpose.msra.mxu0 0.0
        %1383 = vmatprep.subr.mxu0 0.0
        %1384 = vmatpush2.xpose.msra.mxu0 0.0
        %1385 = vmatprep.subr.mxu0 0.0
        %1386 = vmatpush2.xpose.msra.mxu0 0.0
        %1387 = vmatprep.subr.mxu0 0.0
        %1388 = vmatpush2.xpose.msra.mxu0 0.0
        %1389 = vmatprep.mubr.f32.mxu0 0.0
        %1390 = vmatmul.mubr.f32.gmra.mxu0 %v1314
        %v1391 = vpop.f32.mrf.mxu0
        %v1392 = vadd.f32 %v1209, %v1391
        %v1393 = vpop.f32.mrf.mxu0
        %1394 = vmatprep.mubr.f32.mxu0 0.0
        %1395 = vmatmul.mubr.f32.gmra.mxu0 %v1317
        %v1396 = vpop.f32.mrf.mxu0
        %v1397 = vadd.f32 %v1210, %v1396
        %v1398 = vpop.f32.mrf.mxu0
        %1399 = vdwg.mxu0
        %v1401 = vsel %vm1225, %v1080, 0
        %v1404 = vsel %vm1225, %v1081, 0
        %v1407 = vsel %vm1225, %v1189, 0
        %v1410 = vsel %vm1225, %v1190, 0
        %1412 = vmatprep.subr.mxu0 0.0
        %1413 = vmatpush1.xpose.msra.mxu0 0.0
        %1414 = vmatprep.subr.mxu0 0.0
        %1415 = vmatpush1.xpose.msra.mxu0 0.0
        %1416 = vmatprep.subr.mxu0 0.0
        %1417 = vmatpush1.xpose.msra.mxu0 0.0
        %1418 = vmatprep.subr.mxu0 0.0
        %1419 = vmatpush1.xpose.msra.mxu0 0.0
        %1420 = vmatprep.subr.mxu0 0.0
        %1421 = vmatpush1.xpose.msra.mxu0 0.0
        %1422 = vmatprep.subr.mxu0 0.0
        %1423 = vmatpush1.xpose.msra.mxu0 0.0
        %1424 = vmatprep.subr.mxu0 0.0
        %1425 = vmatpush1.xpose.msra.mxu0 0.0
        %1426 = vmatprep.subr.mxu0 0.0
        %1427 = vmatpush1.xpose.msra.mxu0 0.0
        %1428 = vmatprep.subr.mxu0 0.0
        %1429 = vmatpush1.xpose.msra.mxu0 0.0
        %1430 = vmatprep.subr.mxu0 0.0
        %1431 = vmatpush1.xpose.msra.mxu0 0.0
        %1432 = vmatprep.subr.mxu0 0.0
        %1433 = vmatpush1.xpose.msra.mxu0 0.0
        %1434 = vmatprep.subr.mxu0 0.0
        %1435 = vmatpush1.xpose.msra.mxu0 0.0
        %1436 = vmatprep.subr.mxu0 0.0
        %1437 = vmatpush1.xpose.msra.mxu0 0.0
        %1438 = vmatprep.subr.mxu0 0.0
        %1439 = vmatpush1.xpose.msra.mxu0 0.0
        %1440 = vmatprep.subr.mxu0 0.0
        %1441 = vmatpush1.xpose.msra.mxu0 %v1410
        %1442 = vmatprep.subr.mxu0 0.0
        %1443 = vmatpush1.xpose.msra.mxu0 %v1407
        %1444 = vmatprep.subr.mxu0 0.0
        %1445 = vmatpush2.xpose.msra.mxu0 0.0
        %1446 = vmatprep.subr.mxu0 0.0
        %1447 = vmatpush2.xpose.msra.mxu0 0.0
        %1448 = vmatprep.subr.mxu0 0.0
        %1449 = vmatpush2.xpose.msra.mxu0 0.0
        %1450 = vmatprep.subr.mxu0 0.0
        %1451 = vmatpush2.xpose.msra.mxu0 0.0
        %1452 = vmatprep.subr.mxu0 0.0
        %1453 = vmatpush2.xpose.msra.mxu0 0.0
        %1454 = vmatprep.subr.mxu0 0.0
        %1455 = vmatpush2.xpose.msra.mxu0 0.0
        %1456 = vmatprep.subr.mxu0 0.0
        %1457 = vmatpush2.xpose.msra.mxu0 0.0
        %1458 = vmatprep.subr.mxu0 0.0
        %1459 = vmatpush2.xpose.msra.mxu0 0.0
        %1460 = vmatprep.subr.mxu0 0.0
        %1461 = vmatpush2.xpose.msra.mxu0 0.0
        %1462 = vmatprep.subr.mxu0 0.0
        %1463 = vmatpush2.xpose.msra.mxu0 0.0
        %1464 = vmatprep.subr.mxu0 0.0
        %1465 = vmatpush2.xpose.msra.mxu0 0.0
        %1466 = vmatprep.subr.mxu0 0.0
        %1467 = vmatpush2.xpose.msra.mxu0 0.0
        %1468 = vmatprep.subr.mxu0 0.0
        %1469 = vmatpush2.xpose.msra.mxu0 0.0
        %1470 = vmatprep.subr.mxu0 0.0
        %1471 = vmatpush2.xpose.msra.mxu0 0.0
        %1472 = vmatprep.subr.mxu0 0.0
        %1473 = vmatpush2.xpose.msra.mxu0 0.0
        %1474 = vmatprep.subr.mxu0 0.0
        %1475 = vmatpush2.xpose.msra.mxu0 0.0
        %1476 = vmatprep.mubr.f32.mxu0 0.0
        %1477 = vmatmul.mubr.f32.gmra.mxu0 %v1401
        %v1478 = vpop.f32.mrf.mxu0
        %v1479 = vadd.f32 %v1209, %v1478
        %v1480 = vpop.f32.mrf.mxu0
        %1481 = vmatprep.mubr.f32.mxu0 0.0
        %1482 = vmatmul.mubr.f32.gmra.mxu0 %v1404
        %v1483 = vpop.f32.mrf.mxu0
        %v1484 = vadd.f32 %v1210, %v1483
        %v1485 = vpop.f32.mrf.mxu0
        %1486 = vdwg.mxu0
        %v1488 = vsel %vm1225, %v1082, 0
        %v1491 = vsel %vm1225, %v1083, 0
        %v1494 = vsel %vm1225, %v1191, 0
        %v1497 = vsel %vm1225, %v1192, 0
        %1499 = vmatprep.subr.mxu0 0.0
        %1500 = vmatpush1.xpose.msra.mxu0 0.0
        %1501 = vmatprep.subr.mxu0 0.0
        %1502 = vmatpush1.xpose.msra.mxu0 0.0
        %1503 = vmatprep.subr.mxu0 0.0
        %1504 = vmatpush1.xpose.msra.mxu0 0.0
        %1505 = vmatprep.subr.mxu0 0.0
        %1506 = vmatpush1.xpose.msra.mxu0 0.0
        %1507 = vmatprep.subr.mxu0 0.0
        %1508 = vmatpush1.xpose.msra.mxu0 0.0
        %1509 = vmatprep.subr.mxu0 0.0
        %1510 = vmatpush1.xpose.msra.mxu0 0.0
        %1511 = vmatprep.subr.mxu0 0.0
        %1512 = vmatpush1.xpose.msra.mxu0 0.0
        %1513 = vmatprep.subr.mxu0 0.0
        %1514 = vmatpush1.xpose.msra.mxu0 0.0
        %1515 = vmatprep.subr.mxu0 0.0
        %1516 = vmatpush1.xpose.msra.mxu0 0.0
        %1517 = vmatprep.subr.mxu0 0.0
        %1518 = vmatpush1.xpose.msra.mxu0 0.0
        %1519 = vmatprep.subr.mxu0 0.0
        %1520 = vmatpush1.xpose.msra.mxu0 0.0
        %1521 = vmatprep.subr.mxu0 0.0
        %1522 = vmatpush1.xpose.msra.mxu0 0.0
        %1523 = vmatprep.subr.mxu0 0.0
        %1524 = vmatpush1.xpose.msra.mxu0 0.0
        %1525 = vmatprep.subr.mxu0 0.0
        %1526 = vmatpush1.xpose.msra.mxu0 0.0
        %1527 = vmatprep.subr.mxu0 0.0
        %1528 = vmatpush1.xpose.msra.mxu0 %v1497
        %1529 = vmatprep.subr.mxu0 0.0
        %1530 = vmatpush1.xpose.msra.mxu0 %v1494
        %1531 = vmatprep.subr.mxu0 0.0
        %1532 = vmatpush2.xpose.msra.mxu0 0.0
        %1533 = vmatprep.subr.mxu0 0.0
        %1534 = vmatpush2.xpose.msra.mxu0 0.0
        %1535 = vmatprep.subr.mxu0 0.0
        %1536 = vmatpush2.xpose.msra.mxu0 0.0
        %1537 = vmatprep.subr.mxu0 0.0
        %1538 = vmatpush2.xpose.msra.mxu0 0.0
        %1539 = vmatprep.subr.mxu0 0.0
        %1540 = vmatpush2.xpose.msra.mxu0 0.0
        %1541 = vmatprep.subr.mxu0 0.0
        %1542 = vmatpush2.xpose.msra.mxu0 0.0
        %1543 = vmatprep.subr.mxu0 0.0
        %1544 = vmatpush2.xpose.msra.mxu0 0.0
        %1545 = vmatprep.subr.mxu0 0.0
        %1546 = vmatpush2.xpose.msra.mxu0 0.0
        %1547 = vmatprep.subr.mxu0 0.0
        %1548 = vmatpush2.xpose.msra.mxu0 0.0
        %1549 = vmatprep.subr.mxu0 0.0
        %1550 = vmatpush2.xpose.msra.mxu0 0.0
        %1551 = vmatprep.subr.mxu0 0.0
        %1552 = vmatpush2.xpose.msra.mxu0 0.0
        %1553 = vmatprep.subr.mxu0 0.0
        %1554 = vmatpush2.xpose.msra.mxu0 0.0
        %1555 = vmatprep.subr.mxu0 0.0
        %1556 = vmatpush2.xpose.msra.mxu0 0.0
        %1557 = vmatprep.subr.mxu0 0.0
        %1558 = vmatpush2.xpose.msra.mxu0 0.0
        %1559 = vmatprep.subr.mxu0 0.0
        %1560 = vmatpush2.xpose.msra.mxu0 0.0
        %1561 = vmatprep.subr.mxu0 0.0
        %1562 = vmatpush2.xpose.msra.mxu0 0.0
        %1563 = vmatprep.mubr.f32.mxu0 0.0
        %1564 = vmatmul.mubr.f32.gmra.mxu0 %v1488
        %v1565 = vpop.f32.mrf.mxu0
        %v1566 = vadd.f32 %v1209, %v1565
        %v1567 = vpop.f32.mrf.mxu0
        %1568 = vmatprep.mubr.f32.mxu0 0.0
        %1569 = vmatmul.mubr.f32.gmra.mxu0 %v1491
        %v1570 = vpop.f32.mrf.mxu0
        %v1571 = vadd.f32 %v1210, %v1570
        %v1572 = vpop.f32.mrf.mxu0
        %1573 = vdwg.mxu0
        %v1574 = vadd.f32 %v1305, %v1217
        %v1575 = vadd.f32 %v1310, %v1218
        %v1576 = vadd.f32 %v1392, %v1219
        %v1577 = vadd.f32 %v1397, %v1220
        %v1578 = vadd.f32 %v1479, %v1221
        %v1579 = vadd.f32 %v1484, %v1222
        %v1580 = vadd.f32 %v1566, %v1223
        %v1581 = vadd.f32 %v1571, %v1224
        %vm1582 = vcmask 130048
        %v1583 = vsel %vm1582, %v1574, -inf
        %1584 = vmax.xlane.f32.xlu0 %v1583
        %v1585 = vpop.xlane.xlu0 %1584
        %v1586 = vsel %vm1582, %v1575, -inf
        %1587 = vmax.xlane.f32.xlu0 %v1586
        %v1588 = vpop.xlane.xlu0 %1587
        %v1589 = vsel %vm1582, %v1576, -inf
        %1590 = vmax.xlane.f32.xlu0 %v1589
        %v1591 = vpop.xlane.xlu0 %1590
        %v1592 = vsel %vm1582, %v1577, -inf
        %1593 = vmax.xlane.f32.xlu0 %v1592
        %v1594 = vpop.xlane.xlu0 %1593
        %v1595 = vsel %vm1582, %v1578, -inf
        %1596 = vmax.xlane.f32.xlu0 %v1595
        %v1597 = vpop.xlane.xlu0 %1596
        %v1598 = vsel %vm1582, %v1579, -inf
        %1599 = vmax.xlane.f32.xlu0 %v1598
        %v1600 = vpop.xlane.xlu0 %1599
        %v1601 = vsel %vm1582, %v1580, -inf
        %1602 = vmax.xlane.f32.xlu0 %v1601
        %v1603 = vpop.xlane.xlu0 %1602
        %v1604 = vsel %vm1582, %v1581, -inf
        %1605 = vmax.xlane.f32.xlu0 %v1604
        %v1606 = vpop.xlane.xlu0 %1605
        %v1607 = vsub.f32 %v1574, %v1585
        %v1608 = vsub.f32 %v1575, %v1588
        %v1609 = vsub.f32 %v1576, %v1591
        %v1610 = vsub.f32 %v1577, %v1594
        %v1611 = vsub.f32 %v1578, %v1597
        %v1612 = vsub.f32 %v1579, %v1600
        %v1613 = vsub.f32 %v1580, %v1603
        %v1614 = vsub.f32 %v1581, %v1606
        %v1615 = vmul.f32 %v1607, 1.442695
        %v1616 = vpow.pop %v1615
        %v1617 = vmul.f32 %v1608, 1.442695
        %v1618 = vpow.pop %v1617
        %v1619 = vmul.f32 %v1609, 1.442695
        %v1620 = vpow.pop %v1619
        %v1621 = vmul.f32 %v1610, 1.442695
        %v1622 = vpow.pop %v1621
        %v1623 = vmul.f32 %v1611, 1.442695
        %v1624 = vpow.pop %v1623
        %v1625 = vmul.f32 %v1612, 1.442695
        %v1626 = vpow.pop %v1625
        %v1627 = vmul.f32 %v1613, 1.442695
        %v1628 = vpow.pop %v1627
        %v1629 = vmul.f32 %v1614, 1.442695
        %v1630 = vpow.pop %v1629
        %v1631 = vsel %vm1582, %v1616, 0.0
        %1632 = vadd.xlane.f32.xlu0 %v1631
        %v1633 = vpop.xlane.xlu0 %1632
        %v1634 = vsel %vm1582, %v1618, 0.0
        %1635 = vadd.xlane.f32.xlu0 %v1634
        %v1636 = vpop.xlane.xlu0 %1635
        %v1637 = vsel %vm1582, %v1620, 0.0
        %1638 = vadd.xlane.f32.xlu0 %v1637
        %v1639 = vpop.xlane.xlu0 %1638
        %v1640 = vsel %vm1582, %v1622, 0.0
        %1641 = vadd.xlane.f32.xlu0 %v1640
        %v1642 = vpop.xlane.xlu0 %1641
        %v1643 = vsel %vm1582, %v1624, 0.0
        %1644 = vadd.xlane.f32.xlu0 %v1643
        %v1645 = vpop.xlane.xlu0 %1644
        %v1646 = vsel %vm1582, %v1626, 0.0
        %1647 = vadd.xlane.f32.xlu0 %v1646
        %v1648 = vpop.xlane.xlu0 %1647
        %v1649 = vsel %vm1582, %v1628, 0.0
        %1650 = vadd.xlane.f32.xlu0 %v1649
        %v1651 = vpop.xlane.xlu0 %1650
        %v1652 = vsel %vm1582, %v1630, 0.0
        %1653 = vadd.xlane.f32.xlu0 %v1652
        %v1654 = vpop.xlane.xlu0 %1653
        %v1655 = vrcp.pop %v1633
        %v1656 = vrcp.pop %v1636
        %v1657 = vrcp.pop %v1639
        %v1658 = vrcp.pop %v1642
        %v1659 = vrcp.pop %v1645
        %v1660 = vrcp.pop %v1648
        %v1661 = vrcp.pop %v1651
        %v1662 = vrcp.pop %v1654
        %v1663 = vmul.f32 %v1616, %v1655
        %v1664 = vmul.f32 %v1618, %v1656
        %v1665 = vmul.f32 %v1620, %v1657
        %v1666 = vmul.f32 %v1622, %v1658
        %v1667 = vmul.f32 %v1624, %v1659
        %v1668 = vmul.f32 %v1626, %v1660
        %v1669 = vmul.f32 %v1628, %v1661
        %v1670 = vmul.f32 %v1630, %v1662
        %v1671 = vlaneseq
        %v1672 = vshrl.u32 %v1671, 7
        %v1673 = vsub.s32 4, %v1672
        %v1674 = vrot.slane %v716, %v1673
        %1676 = vrot.lane.b32.xlu0 %v1674, 32
        %v1677 = vpop.permute.xlu0 %1676
        %v1679 = vmul.f32 %v1201, %v1677
        %v1680 = vmul.f32 %v1202, %v1677
        %v1681 = vmul.f32 %v1203, %v1677
        %v1682 = vmul.f32 %v1204, %v1677
        %v1683 = vmul.f32 %v1205, %v1677
        %v1684 = vmul.f32 %v1206, %v1677
        %v1685 = vmul.f32 %v1207, %v1677
        %v1686 = vmul.f32 %v1208, %v1677
        %1687 = vrot.lane.b32.xlu0 %v1076, 120
        %v1688 = vpop.permute.xlu0 %1687
        %1689 = vrot.lane.b32.xlu0 %v1077, 120
        %v1690 = vpop.permute.xlu0 %1689
        %1691 = vrot.lane.b32.xlu0 %v1185, 120
        %v1692 = vpop.permute.xlu0 %1691
        %1693 = vrot.lane.b32.xlu0 %v1186, 120
        %v1694 = vpop.permute.xlu0 %1693
        %v1695 = vsel %vm1225, %v1688, 0
        %v1697 = vsel %vm1225, %v1690, 0
        %v1699 = vsel %vm1225, %v1692, 0
        %v1701 = vsel %vm1225, %v1694, 0
        %1703 = vmatprep.subr.mxu0 0.0
        %1704 = vmatpush1.xpose.msra.mxu0 0.0
        %1705 = vmatprep.subr.mxu0 0.0
        %1706 = vmatpush1.xpose.msra.mxu0 0.0
        %1707 = vmatprep.subr.mxu0 0.0
        %1708 = vmatpush1.xpose.msra.mxu0 0.0
        %1709 = vmatprep.subr.mxu0 0.0
        %1710 = vmatpush1.xpose.msra.mxu0 0.0
        %1711 = vmatprep.subr.mxu0 0.0
        %1712 = vmatpush1.xpose.msra.mxu0 0.0
        %1713 = vmatprep.subr.mxu0 0.0
        %1714 = vmatpush1.xpose.msra.mxu0 0.0
        %1715 = vmatprep.subr.mxu0 0.0
        %1716 = vmatpush1.xpose.msra.mxu0 0.0
        %1717 = vmatprep.subr.mxu0 0.0
        %1718 = vmatpush1.xpose.msra.mxu0 0.0
        %1719 = vmatprep.subr.mxu0 0.0
        %1720 = vmatpush1.xpose.msra.mxu0 0.0
        %1721 = vmatprep.subr.mxu0 0.0
        %1722 = vmatpush1.xpose.msra.mxu0 0.0
        %1723 = vmatprep.subr.mxu0 0.0
        %1724 = vmatpush1.xpose.msra.mxu0 0.0
        %1725 = vmatprep.subr.mxu0 0.0
        %1726 = vmatpush1.xpose.msra.mxu0 0.0
        %1727 = vmatprep.subr.mxu0 0.0
        %1728 = vmatpush1.xpose.msra.mxu0 0.0
        %1729 = vmatprep.subr.mxu0 0.0
        %1730 = vmatpush1.xpose.msra.mxu0 0.0
        %1731 = vmatprep.subr.mxu0 0.0
        %1732 = vmatpush1.xpose.msra.mxu0 %v1701
        %1733 = vmatprep.subr.mxu0 0.0
        %1734 = vmatpush1.xpose.msra.mxu0 %v1699
        %1735 = vmatprep.subr.mxu0 0.0
        %1736 = vmatpush2.xpose.msra.mxu0 0.0
        %1737 = vmatprep.subr.mxu0 0.0
        %1738 = vmatpush2.xpose.msra.mxu0 0.0
        %1739 = vmatprep.subr.mxu0 0.0
        %1740 = vmatpush2.xpose.msra.mxu0 0.0
        %1741 = vmatprep.subr.mxu0 0.0
        %1742 = vmatpush2.xpose.msra.mxu0 0.0
        %1743 = vmatprep.subr.mxu0 0.0
        %1744 = vmatpush2.xpose.msra.mxu0 0.0
        %1745 = vmatprep.subr.mxu0 0.0
        %1746 = vmatpush2.xpose.msra.mxu0 0.0
        %1747 = vmatprep.subr.mxu0 0.0
        %1748 = vmatpush2.xpose.msra.mxu0 0.0
        %1749 = vmatprep.subr.mxu0 0.0
        %1750 = vmatpush2.xpose.msra.mxu0 0.0
        %1751 = vmatprep.subr.mxu0 0.0
        %1752 = vmatpush2.xpose.msra.mxu0 0.0
        %1753 = vmatprep.subr.mxu0 0.0
        %1754 = vmatpush2.xpose.msra.mxu0 0.0
        %1755 = vmatprep.subr.mxu0 0.0
        %1756 = vmatpush2.xpose.msra.mxu0 0.0
        %1757 = vmatprep.subr.mxu0 0.0
        %1758 = vmatpush2.xpose.msra.mxu0 0.0
        %1759 = vmatprep.subr.mxu0 0.0
        %1760 = vmatpush2.xpose.msra.mxu0 0.0
        %1761 = vmatprep.subr.mxu0 0.0
        %1762 = vmatpush2.xpose.msra.mxu0 0.0
        %1763 = vmatprep.subr.mxu0 0.0
        %1764 = vmatpush2.xpose.msra.mxu0 0.0
        %1765 = vmatprep.subr.mxu0 0.0
        %1766 = vmatpush2.xpose.msra.mxu0 0.0
        %1767 = vmatprep.mubr.f32.mxu0 0.0
        %1768 = vmatmul.mubr.f32.gmra.mxu0 %v1695
        %v1769 = vpop.f32.mrf.mxu0
        %v1770 = vadd.f32 %v1211, %v1769
        %v1771 = vpop.f32.mrf.mxu0
        %1772 = vmatprep.mubr.f32.mxu0 0.0
        %1773 = vmatmul.mubr.f32.gmra.mxu0 %v1697
        %v1774 = vpop.f32.mrf.mxu0
        %v1775 = vadd.f32 %v1212, %v1774
        %v1776 = vpop.f32.mrf.mxu0
        %1777 = vdwg.mxu0
        %1778 = vrot.lane.b32.xlu0 %v1078, 120
        %v1779 = vpop.permute.xlu0 %1778
        %1780 = vrot.lane.b32.xlu0 %v1079, 120
        %v1781 = vpop.permute.xlu0 %1780
        %1782 = vrot.lane.b32.xlu0 %v1187, 120
        %v1783 = vpop.permute.xlu0 %1782
        %1784 = vrot.lane.b32.xlu0 %v1188, 120
        %v1785 = vpop.permute.xlu0 %1784
        %v1786 = vsel %vm1225, %v1779, 0
        %v1788 = vsel %vm1225, %v1781, 0
        %v1790 = vsel %vm1225, %v1783, 0
        %v1792 = vsel %vm1225, %v1785, 0
        %1794 = vmatprep.subr.mxu0 0.0
        %1795 = vmatpush1.xpose.msra.mxu0 0.0
        %1796 = vmatprep.subr.mxu0 0.0
        %1797 = vmatpush1.xpose.msra.mxu0 0.0
        %1798 = vmatprep.subr.mxu0 0.0
        %1799 = vmatpush1.xpose.msra.mxu0 0.0
        %1800 = vmatprep.subr.mxu0 0.0
        %1801 = vmatpush1.xpose.msra.mxu0 0.0
        %1802 = vmatprep.subr.mxu0 0.0
        %1803 = vmatpush1.xpose.msra.mxu0 0.0
        %1804 = vmatprep.subr.mxu0 0.0
        %1805 = vmatpush1.xpose.msra.mxu0 0.0
        %1806 = vmatprep.subr.mxu0 0.0
        %1807 = vmatpush1.xpose.msra.mxu0 0.0
        %1808 = vmatprep.subr.mxu0 0.0
        %1809 = vmatpush1.xpose.msra.mxu0 0.0
        %1810 = vmatprep.subr.mxu0 0.0
        %1811 = vmatpush1.xpose.msra.mxu0 0.0
        %1812 = vmatprep.subr.mxu0 0.0
        %1813 = vmatpush1.xpose.msra.mxu0 0.0
        %1814 = vmatprep.subr.mxu0 0.0
        %1815 = vmatpush1.xpose.msra.mxu0 0.0
        %1816 = vmatprep.subr.mxu0 0.0
        %1817 = vmatpush1.xpose.msra.mxu0 0.0
        %1818 = vmatprep.subr.mxu0 0.0
        %1819 = vmatpush1.xpose.msra.mxu0 0.0
        %1820 = vmatprep.subr.mxu0 0.0
        %1821 = vmatpush1.xpose.msra.mxu0 0.0
        %1822 = vmatprep.subr.mxu0 0.0
        %1823 = vmatpush1.xpose.msra.mxu0 %v1792
        %1824 = vmatprep.subr.mxu0 0.0
        %1825 = vmatpush1.xpose.msra.mxu0 %v1790
        %1826 = vmatprep.subr.mxu0 0.0
        %1827 = vmatpush2.xpose.msra.mxu0 0.0
        %1828 = vmatprep.subr.mxu0 0.0
        %1829 = vmatpush2.xpose.msra.mxu0 0.0
        %1830 = vmatprep.subr.mxu0 0.0
        %1831 = vmatpush2.xpose.msra.mxu0 0.0
        %1832 = vmatprep.subr.mxu0 0.0
        %1833 = vmatpush2.xpose.msra.mxu0 0.0
        %1834 = vmatprep.subr.mxu0 0.0
        %1835 = vmatpush2.xpose.msra.mxu0 0.0
        %1836 = vmatprep.subr.mxu0 0.0
        %1837 = vmatpush2.xpose.msra.mxu0 0.0
        %1838 = vmatprep.subr.mxu0 0.0
        %1839 = vmatpush2.xpose.msra.mxu0 0.0
        %1840 = vmatprep.subr.mxu0 0.0
        %1841 = vmatpush2.xpose.msra.mxu0 0.0
        %1842 = vmatprep.subr.mxu0 0.0
        %1843 = vmatpush2.xpose.msra.mxu0 0.0
        %1844 = vmatprep.subr.mxu0 0.0
        %1845 = vmatpush2.xpose.msra.mxu0 0.0
        %1846 = vmatprep.subr.mxu0 0.0
        %1847 = vmatpush2.xpose.msra.mxu0 0.0
        %1848 = vmatprep.subr.mxu0 0.0
        %1849 = vmatpush2.xpose.msra.mxu0 0.0
        %1850 = vmatprep.subr.mxu0 0.0
        %1851 = vmatpush2.xpose.msra.mxu0 0.0
        %1852 = vmatprep.subr.mxu0 0.0
        %1853 = vmatpush2.xpose.msra.mxu0 0.0
        %1854 = vmatprep.subr.mxu0 0.0
        %1855 = vmatpush2.xpose.msra.mxu0 0.0
        %1856 = vmatprep.subr.mxu0 0.0
        %1857 = vmatpush2.xpose.msra.mxu0 0.0
        %1858 = vmatprep.mubr.f32.mxu0 0.0
        %1859 = vmatmul.mubr.f32.gmra.mxu0 %v1786
        %v1860 = vpop.f32.mrf.mxu0
        %v1861 = vadd.f32 %v1211, %v1860
        %v1862 = vpop.f32.mrf.mxu0
        %1863 = vmatprep.mubr.f32.mxu0 0.0
        %1864 = vmatmul.mubr.f32.gmra.mxu0 %v1788
        %v1865 = vpop.f32.mrf.mxu0
        %v1866 = vadd.f32 %v1212, %v1865
        %v1867 = vpop.f32.mrf.mxu0
        %1868 = vdwg.mxu0
        %1869 = vrot.lane.b32.xlu0 %v1080, 120
        %v1870 = vpop.permute.xlu0 %1869
        %1871 = vrot.lane.b32.xlu0 %v1081, 120
        %v1872 = vpop.permute.xlu0 %1871
        %1873 = vrot.lane.b32.xlu0 %v1189, 120
        %v1874 = vpop.permute.xlu0 %1873
        %1875 = vrot.lane.b32.xlu0 %v1190, 120
        %v1876 = vpop.permute.xlu0 %1875
        %v1877 = vsel %vm1225, %v1870, 0
        %v1879 = vsel %vm1225, %v1872, 0
        %v1881 = vsel %vm1225, %v1874, 0
        %v1883 = vsel %vm1225, %v1876, 0
        %1885 = vmatprep.subr.mxu0 0.0
        %1886 = vmatpush1.xpose.msra.mxu0 0.0
        %1887 = vmatprep.subr.mxu0 0.0
        %1888 = vmatpush1.xpose.msra.mxu0 0.0
        %1889 = vmatprep.subr.mxu0 0.0
        %1890 = vmatpush1.xpose.msra.mxu0 0.0
        %1891 = vmatprep.subr.mxu0 0.0
        %1892 = vmatpush1.xpose.msra.mxu0 0.0
        %1893 = vmatprep.subr.mxu0 0.0
        %1894 = vmatpush1.xpose.msra.mxu0 0.0
        %1895 = vmatprep.subr.mxu0 0.0
        %1896 = vmatpush1.xpose.msra.mxu0 0.0
        %1897 = vmatprep.subr.mxu0 0.0
        %1898 = vmatpush1.xpose.msra.mxu0 0.0
        %1899 = vmatprep.subr.mxu0 0.0
        %1900 = vmatpush1.xpose.msra.mxu0 0.0
        %1901 = vmatprep.subr.mxu0 0.0
        %1902 = vmatpush1.xpose.msra.mxu0 0.0
        %1903 = vmatprep.subr.mxu0 0.0
        %1904 = vmatpush1.xpose.msra.mxu0 0.0
        %1905 = vmatprep.subr.mxu0 0.0
        %1906 = vmatpush1.xpose.msra.mxu0 0.0
        %1907 = vmatprep.subr.mxu0 0.0
        %1908 = vmatpush1.xpose.msra.mxu0 0.0
        %1909 = vmatprep.subr.mxu0 0.0
        %1910 = vmatpush1.xpose.msra.mxu0 0.0
        %1911 = vmatprep.subr.mxu0 0.0
        %1912 = vmatpush1.xpose.msra.mxu0 0.0
        %1913 = vmatprep.subr.mxu0 0.0
        %1914 = vmatpush1.xpose.msra.mxu0 %v1883
        %1915 = vmatprep.subr.mxu0 0.0
        %1916 = vmatpush1.xpose.msra.mxu0 %v1881
        %1917 = vmatprep.subr.mxu0 0.0
        %1918 = vmatpush2.xpose.msra.mxu0 0.0
        %1919 = vmatprep.subr.mxu0 0.0
        %1920 = vmatpush2.xpose.msra.mxu0 0.0
        %1921 = vmatprep.subr.mxu0 0.0
        %1922 = vmatpush2.xpose.msra.mxu0 0.0
        %1923 = vmatprep.subr.mxu0 0.0
        %1924 = vmatpush2.xpose.msra.mxu0 0.0
        %1925 = vmatprep.subr.mxu0 0.0
        %1926 = vmatpush2.xpose.msra.mxu0 0.0
        %1927 = vmatprep.subr.mxu0 0.0
        %1928 = vmatpush2.xpose.msra.mxu0 0.0
        %1929 = vmatprep.subr.mxu0 0.0
        %1930 = vmatpush2.xpose.msra.mxu0 0.0
        %1931 = vmatprep.subr.mxu0 0.0
        %1932 = vmatpush2.xpose.msra.mxu0 0.0
        %1933 = vmatprep.subr.mxu0 0.0
        %1934 = vmatpush2.xpose.msra.mxu0 0.0
        %1935 = vmatprep.subr.mxu0 0.0
        %1936 = vmatpush2.xpose.msra.mxu0 0.0
        %1937 = vmatprep.subr.mxu0 0.0
        %1938 = vmatpush2.xpose.msra.mxu0 0.0
        %1939 = vmatprep.subr.mxu0 0.0
        %1940 = vmatpush2.xpose.msra.mxu0 0.0
        %1941 = vmatprep.subr.mxu0 0.0
        %1942 = vmatpush2.xpose.msra.mxu0 0.0
        %1943 = vmatprep.subr.mxu0 0.0
        %1944 = vmatpush2.xpose.msra.mxu0 0.0
        %1945 = vmatprep.subr.mxu0 0.0
        %1946 = vmatpush2.xpose.msra.mxu0 0.0
        %1947 = vmatprep.subr.mxu0 0.0
        %1948 = vmatpush2.xpose.msra.mxu0 0.0
        %1949 = vmatprep.mubr.f32.mxu0 0.0
        %1950 = vmatmul.mubr.f32.gmra.mxu0 %v1877
        %v1951 = vpop.f32.mrf.mxu0
        %v1952 = vadd.f32 %v1211, %v1951
        %v1953 = vpop.f32.mrf.mxu0
        %1954 = vmatprep.mubr.f32.mxu0 0.0
        %1955 = vmatmul.mubr.f32.gmra.mxu0 %v1879
        %v1956 = vpop.f32.mrf.mxu0
        %v1957 = vadd.f32 %v1212, %v1956
        %v1958 = vpop.f32.mrf.mxu0
        %1959 = vdwg.mxu0
        %1960 = vrot.lane.b32.xlu0 %v1082, 120
        %v1961 = vpop.permute.xlu0 %1960
        %1962 = vrot.lane.b32.xlu0 %v1083, 120
        %v1963 = vpop.permute.xlu0 %1962
        %1964 = vrot.lane.b32.xlu0 %v1191, 120
        %v1965 = vpop.permute.xlu0 %1964
        %1966 = vrot.lane.b32.xlu0 %v1192, 120
        %v1967 = vpop.permute.xlu0 %1966
        %v1968 = vsel %vm1225, %v1961, 0
        %v1970 = vsel %vm1225, %v1963, 0
        %v1972 = vsel %vm1225, %v1965, 0
        %v1974 = vsel %vm1225, %v1967, 0
        %1976 = vmatprep.subr.mxu0 0.0
        %1977 = vmatpush1.xpose.msra.mxu0 0.0
        %1978 = vmatprep.subr.mxu0 0.0
        %1979 = vmatpush1.xpose.msra.mxu0 0.0
        %1980 = vmatprep.subr.mxu0 0.0
        %1981 = vmatpush1.xpose.msra.mxu0 0.0
        %1982 = vmatprep.subr.mxu0 0.0
        %1983 = vmatpush1.xpose.msra.mxu0 0.0
        %1984 = vmatprep.subr.mxu0 0.0
        %1985 = vmatpush1.xpose.msra.mxu0 0.0
        %1986 = vmatprep.subr.mxu0 0.0
        %1987 = vmatpush1.xpose.msra.mxu0 0.0
        %1988 = vmatprep.subr.mxu0 0.0
        %1989 = vmatpush1.xpose.msra.mxu0 0.0
        %1990 = vmatprep.subr.mxu0 0.0
        %1991 = vmatpush1.xpose.msra.mxu0 0.0
        %1992 = vmatprep.subr.mxu0 0.0
        %1993 = vmatpush1.xpose.msra.mxu0 0.0
        %1994 = vmatprep.subr.mxu0 0.0
        %1995 = vmatpush1.xpose.msra.mxu0 0.0
        %1996 = vmatprep.subr.mxu0 0.0
        %1997 = vmatpush1.xpose.msra.mxu0 0.0
        %1998 = vmatprep.subr.mxu0 0.0
        %1999 = vmatpush1.xpose.msra.mxu0 0.0
        %2000 = vmatprep.subr.mxu0 0.0
        %2001 = vmatpush1.xpose.msra.mxu0 0.0
        %2002 = vmatprep.subr.mxu0 0.0
        %2003 = vmatpush1.xpose.msra.mxu0 0.0
        %2004 = vmatprep.subr.mxu0 0.0
        %2005 = vmatpush1.xpose.msra.mxu0 %v1974
        %2006 = vmatprep.subr.mxu0 0.0
        %2007 = vmatpush1.xpose.msra.mxu0 %v1972
        %2008 = vmatprep.subr.mxu0 0.0
        %2009 = vmatpush2.xpose.msra.mxu0 0.0
        %2010 = vmatprep.subr.mxu0 0.0
        %2011 = vmatpush2.xpose.msra.mxu0 0.0
        %2012 = vmatprep.subr.mxu0 0.0
        %2013 = vmatpush2.xpose.msra.mxu0 0.0
        %2014 = vmatprep.subr.mxu0 0.0
        %2015 = vmatpush2.xpose.msra.mxu0 0.0
        %2016 = vmatprep.subr.mxu0 0.0
        %2017 = vmatpush2.xpose.msra.mxu0 0.0
        %2018 = vmatprep.subr.mxu0 0.0
        %2019 = vmatpush2.xpose.msra.mxu0 0.0
        %2020 = vmatprep.subr.mxu0 0.0
        %2021 = vmatpush2.xpose.msra.mxu0 0.0
        %2022 = vmatprep.subr.mxu0 0.0
        %2023 = vmatpush2.xpose.msra.mxu0 0.0
        %2024 = vmatprep.subr.mxu0 0.0
        %2025 = vmatpush2.xpose.msra.mxu0 0.0
        %2026 = vmatprep.subr.mxu0 0.0
        %2027 = vmatpush2.xpose.msra.mxu0 0.0
        %2028 = vmatprep.subr.mxu0 0.0
        %2029 = vmatpush2.xpose.msra.mxu0 0.0
        %2030 = vmatprep.subr.mxu0 0.0
        %2031 = vmatpush2.xpose.msra.mxu0 0.0
        %2032 = vmatprep.subr.mxu0 0.0
        %2033 = vmatpush2.xpose.msra.mxu0 0.0
        %2034 = vmatprep.subr.mxu0 0.0
        %2035 = vmatpush2.xpose.msra.mxu0 0.0
        %2036 = vmatprep.subr.mxu0 0.0
        %2037 = vmatpush2.xpose.msra.mxu0 0.0
        %2038 = vmatprep.subr.mxu0 0.0
        %2039 = vmatpush2.xpose.msra.mxu0 0.0
        %2040 = vmatprep.mubr.f32.mxu0 0.0
        %2041 = vmatmul.mubr.f32.gmra.mxu0 %v1968
        %v2042 = vpop.f32.mrf.mxu0
        %v2043 = vadd.f32 %v1211, %v2042
        %v2044 = vpop.f32.mrf.mxu0
        %2045 = vmatprep.mubr.f32.mxu0 0.0
        %2046 = vmatmul.mubr.f32.gmra.mxu0 %v1970
        %v2047 = vpop.f32.mrf.mxu0
        %v2048 = vadd.f32 %v1212, %v2047
        %v2049 = vpop.f32.mrf.mxu0
        %2050 = vdwg.mxu0
        %v2051 = vadd.f32 %v1770, %v1217
        %v2052 = vadd.f32 %v1775, %v1218
        %v2053 = vadd.f32 %v1861, %v1219
        %v2054 = vadd.f32 %v1866, %v1220
        %v2055 = vadd.f32 %v1952, %v1221
        %v2056 = vadd.f32 %v1957, %v1222
        %v2057 = vadd.f32 %v2043, %v1223
        %v2058 = vadd.f32 %v2048, %v1224
        %v2059 = vsel %vm1582, %v2051, -inf
        %2060 = vmax.xlane.f32.xlu0 %v2059
        %v2061 = vpop.xlane.xlu0 %2060
        %v2062 = vsel %vm1582, %v2052, -inf
        %2063 = vmax.xlane.f32.xlu0 %v2062
        %v2064 = vpop.xlane.xlu0 %2063
        %v2065 = vsel %vm1582, %v2053, -inf
        %2066 = vmax.xlane.f32.xlu0 %v2065
        %v2067 = vpop.xlane.xlu0 %2066
        %v2068 = vsel %vm1582, %v2054, -inf
        %2069 = vmax.xlane.f32.xlu0 %v2068
        %v2070 = vpop.xlane.xlu0 %2069
        %v2071 = vsel %vm1582, %v2055, -inf
        %2072 = vmax.xlane.f32.xlu0 %v2071
        %v2073 = vpop.xlane.xlu0 %2072
        %v2074 = vsel %vm1582, %v2056, -inf
        %2075 = vmax.xlane.f32.xlu0 %v2074
        %v2076 = vpop.xlane.xlu0 %2075
        %v2077 = vsel %vm1582, %v2057, -inf
        %2078 = vmax.xlane.f32.xlu0 %v2077
        %v2079 = vpop.xlane.xlu0 %2078
        %v2080 = vsel %vm1582, %v2058, -inf
        %2081 = vmax.xlane.f32.xlu0 %v2080
        %v2082 = vpop.xlane.xlu0 %2081
        %v2083 = vsub.f32 %v2051, %v2061
        %v2084 = vsub.f32 %v2052, %v2064
        %v2085 = vsub.f32 %v2053, %v2067
        %v2086 = vsub.f32 %v2054, %v2070
        %v2087 = vsub.f32 %v2055, %v2073
        %v2088 = vsub.f32 %v2056, %v2076
        %v2089 = vsub.f32 %v2057, %v2079
        %v2090 = vsub.f32 %v2058, %v2082
        %v2091 = vmul.f32 %v2083, 1.442695
        %v2092 = vpow.pop %v2091
        %v2093 = vmul.f32 %v2084, 1.442695
        %v2094 = vpow.pop %v2093
        %v2095 = vmul.f32 %v2085, 1.442695
        %v2096 = vpow.pop %v2095
        %v2097 = vmul.f32 %v2086, 1.442695
        %v2098 = vpow.pop %v2097
        %v2099 = vmul.f32 %v2087, 1.442695
        %v2100 = vpow.pop %v2099
        %v2101 = vmul.f32 %v2088, 1.442695
        %v2102 = vpow.pop %v2101
        %v2103 = vmul.f32 %v2089, 1.442695
        %v2104 = vpow.pop %v2103
        %v2105 = vmul.f32 %v2090, 1.442695
        %v2106 = vpow.pop %v2105
        %v2107 = vsel %vm1582, %v2092, 0.0
        %2108 = vadd.xlane.f32.xlu0 %v2107
        %v2109 = vpop.xlane.xlu0 %2108
        %v2110 = vsel %vm1582, %v2094, 0.0
        %2111 = vadd.xlane.f32.xlu0 %v2110
        %v2112 = vpop.xlane.xlu0 %2111
        %v2113 = vsel %vm1582, %v2096, 0.0
        %2114 = vadd.xlane.f32.xlu0 %v2113
        %v2115 = vpop.xlane.xlu0 %2114
        %v2116 = vsel %vm1582, %v2098, 0.0
        %2117 = vadd.xlane.f32.xlu0 %v2116
        %v2118 = vpop.xlane.xlu0 %2117
        %v2119 = vsel %vm1582, %v2100, 0.0
        %2120 = vadd.xlane.f32.xlu0 %v2119
        %v2121 = vpop.xlane.xlu0 %2120
        %v2122 = vsel %vm1582, %v2102, 0.0
        %2123 = vadd.xlane.f32.xlu0 %v2122
        %v2124 = vpop.xlane.xlu0 %2123
        %v2125 = vsel %vm1582, %v2104, 0.0
        %2126 = vadd.xlane.f32.xlu0 %v2125
        %v2127 = vpop.xlane.xlu0 %2126
        %v2128 = vsel %vm1582, %v2106, 0.0
        %2129 = vadd.xlane.f32.xlu0 %v2128
        %v2130 = vpop.xlane.xlu0 %2129
        %v2131 = vrcp.pop %v2109
        %v2132 = vrcp.pop %v2112
        %v2133 = vrcp.pop %v2115
        %v2134 = vrcp.pop %v2118
        %v2135 = vrcp.pop %v2121
        %v2136 = vrcp.pop %v2124
        %v2137 = vrcp.pop %v2127
        %v2138 = vrcp.pop %v2130
        %v2139 = vmul.f32 %v2092, %v2131
        %v2140 = vmul.f32 %v2094, %v2132
        %v2141 = vmul.f32 %v2096, %v2133
        %v2142 = vmul.f32 %v2098, %v2134
        %v2143 = vmul.f32 %v2100, %v2135
        %v2144 = vmul.f32 %v2102, %v2136
        %v2145 = vmul.f32 %v2104, %v2137
        %v2146 = vmul.f32 %v2106, %v2138
        %v2147 = vlaneseq
        %v2148 = vshrl.u32 %v2147, 7
        %v2149 = vsub.s32 5, %v2148
        %v2150 = vrot.slane %v716, %v2149
        %2152 = vrot.lane.b32.xlu0 %v2150, 32
        %v2153 = vpop.permute.xlu0 %2152
        %v2155 = vmul.f32 %v1201, %v2153
        %v2156 = vmul.f32 %v1202, %v2153
        %v2157 = vmul.f32 %v1203, %v2153
        %v2158 = vmul.f32 %v1204, %v2153
        %v2159 = vmul.f32 %v1205, %v2153
        %v2160 = vmul.f32 %v1206, %v2153
        %v2161 = vmul.f32 %v1207, %v2153
        %v2162 = vmul.f32 %v1208, %v2153
        %2165 = vrot.lane.b32.xlu0 %v2155, 96
        %v2166 = vpop.permute.xlu0 %2165
        %2167 = vrot.lane.b32.xlu0 %v2156, 96
        %v2168 = vpop.permute.xlu0 %2167
        %v2172 = vsel %vm1582, %v2139, 0
        %v2175 = vsel %vm1582, %v2140, 0
        %2177 = vmatprep.subr.mxu0 0.0
        %2178 = vmatpush1.msra.mxu0 0.0
        %2179 = vmatprep.subr.mxu0 0.0
        %2180 = vmatpush1.msra.mxu0 0.0
        %2181 = vmatprep.subr.mxu0 0.0
        %2182 = vmatpush1.msra.mxu0 0.0
        %2183 = vmatprep.subr.mxu0 0.0
        %2184 = vmatpush1.msra.mxu0 0.0
        %2185 = vmatprep.subr.mxu0 0.0
        %2186 = vmatpush1.msra.mxu0 0.0
        %2187 = vmatprep.subr.mxu0 0.0
        %2188 = vmatpush1.msra.mxu0 0.0
        %2189 = vmatprep.subr.mxu0 0.0
        %2190 = vmatpush1.msra.mxu0 0.0
        %2191 = vmatprep.subr.mxu0 0.0
        %2192 = vmatpush1.msra.mxu0 0.0
        %2193 = vmatprep.subr.mxu0 0.0
        %2194 = vmatpush1.msra.mxu0 0.0
        %2195 = vmatprep.subr.mxu0 0.0
        %2196 = vmatpush1.msra.mxu0 0.0
        %2197 = vmatprep.subr.mxu0 0.0
        %2198 = vmatpush1.msra.mxu0 0.0
        %2199 = vmatprep.subr.mxu0 0.0
        %2200 = vmatpush1.msra.mxu0 0.0
        %2201 = vmatprep.subr.mxu0 0.0
        %2202 = vmatpush1.msra.mxu0 0.0
        %2203 = vmatprep.subr.mxu0 0.0
        %2204 = vmatpush1.msra.mxu0 0.0
        %2205 = vmatprep.subr.mxu0 0.0
        %2206 = vmatpush1.msra.mxu0 %v2168
        %2207 = vmatprep.subr.mxu0 0.0
        %2208 = vmatpush1.msra.mxu0 %v2166
        %2209 = vmatprep.subr.mxu0 0.0
        %2210 = vmatpush2.msra.mxu0 0.0
        %2211 = vmatprep.subr.mxu0 0.0
        %2212 = vmatpush2.msra.mxu0 0.0
        %2213 = vmatprep.subr.mxu0 0.0
        %2214 = vmatpush2.msra.mxu0 0.0
        %2215 = vmatprep.subr.mxu0 0.0
        %2216 = vmatpush2.msra.mxu0 0.0
        %2217 = vmatprep.subr.mxu0 0.0
        %2218 = vmatpush2.msra.mxu0 0.0
        %2219 = vmatprep.subr.mxu0 0.0
        %2220 = vmatpush2.msra.mxu0 0.0
        %2221 = vmatprep.subr.mxu0 0.0
        %2222 = vmatpush2.msra.mxu0 0.0
        %2223 = vmatprep.subr.mxu0 0.0
        %2224 = vmatpush2.msra.mxu0 0.0
        %2225 = vmatprep.subr.mxu0 0.0
        %2226 = vmatpush2.msra.mxu0 0.0
        %2227 = vmatprep.subr.mxu0 0.0
        %2228 = vmatpush2.msra.mxu0 0.0
        %2229 = vmatprep.subr.mxu0 0.0
        %2230 = vmatpush2.msra.mxu0 0.0
        %2231 = vmatprep.subr.mxu0 0.0
        %2232 = vmatpush2.msra.mxu0 0.0
        %2233 = vmatprep.subr.mxu0 0.0
        %2234 = vmatpush2.msra.mxu0 0.0
        %2235 = vmatprep.subr.mxu0 0.0
        %2236 = vmatpush2.msra.mxu0 0.0
        %2237 = vmatprep.subr.mxu0 0.0
        %2238 = vmatpush2.msra.mxu0 0.0
        %2239 = vmatprep.subr.mxu0 0.0
        %2240 = vmatpush2.msra.mxu0 0.0
        %2241 = vmatprep.mubr.f32.mxu0 0.0
        %2242 = vmatmul.mubr.f32.gmra.mxu0 %v2172
        %v2243 = vpop.f32.mrf.mxu0
        %v2244 = vadd.f32 0.0, %v2243
        %v2245 = vpop.f32.mrf.mxu0
        %2246 = vmatprep.mubr.f32.mxu0 0.0
        %2247 = vmatmul.mubr.f32.gmra.mxu0 %v2175
        %v2248 = vpop.f32.mrf.mxu0
        %v2249 = vadd.f32 0.0, %v2248
        %v2250 = vpop.f32.mrf.mxu0
        %2251 = vdwg.mxu0
        %2254 = vrot.lane.b32.xlu0 %v2157, 96
        %v2255 = vpop.permute.xlu0 %2254
        %2256 = vrot.lane.b32.xlu0 %v2158, 96
        %v2257 = vpop.permute.xlu0 %2256
        %v2261 = vsel %vm1582, %v2141, 0
        %v2264 = vsel %vm1582, %v2142, 0
        %2266 = vmatprep.subr.mxu0 0.0
        %2267 = vmatpush1.msra.mxu0 0.0
        %2268 = vmatprep.subr.mxu0 0.0
        %2269 = vmatpush1.msra.mxu0 0.0
        %2270 = vmatprep.subr.mxu0 0.0
        %2271 = vmatpush1.msra.mxu0 0.0
        %2272 = vmatprep.subr.mxu0 0.0
        %2273 = vmatpush1.msra.mxu0 0.0
        %2274 = vmatprep.subr.mxu0 0.0
        %2275 = vmatpush1.msra.mxu0 0.0
        %2276 = vmatprep.subr.mxu0 0.0
        %2277 = vmatpush1.msra.mxu0 0.0
        %2278 = vmatprep.subr.mxu0 0.0
        %2279 = vmatpush1.msra.mxu0 0.0
        %2280 = vmatprep.subr.mxu0 0.0
        %2281 = vmatpush1.msra.mxu0 0.0
        %2282 = vmatprep.subr.mxu0 0.0
        %2283 = vmatpush1.msra.mxu0 0.0
        %2284 = vmatprep.subr.mxu0 0.0
        %2285 = vmatpush1.msra.mxu0 0.0
        %2286 = vmatprep.subr.mxu0 0.0
        %2287 = vmatpush1.msra.mxu0 0.0
        %2288 = vmatprep.subr.mxu0 0.0
        %2289 = vmatpush1.msra.mxu0 0.0
        %2290 = vmatprep.subr.mxu0 0.0
        %2291 = vmatpush1.msra.mxu0 0.0
        %2292 = vmatprep.subr.mxu0 0.0
        %2293 = vmatpush1.msra.mxu0 0.0
        %2294 = vmatprep.subr.mxu0 0.0
        %2295 = vmatpush1.msra.mxu0 %v2257
        %2296 = vmatprep.subr.mxu0 0.0
        %2297 = vmatpush1.msra.mxu0 %v2255
        %2298 = vmatprep.subr.mxu0 0.0
        %2299 = vmatpush2.msra.mxu0 0.0
        %2300 = vmatprep.subr.mxu0 0.0
        %2301 = vmatpush2.msra.mxu0 0.0
        %2302 = vmatprep.subr.mxu0 0.0
        %2303 = vmatpush2.msra.mxu0 0.0
        %2304 = vmatprep.subr.mxu0 0.0
        %2305 = vmatpush2.msra.mxu0 0.0
        %2306 = vmatprep.subr.mxu0 0.0
        %2307 = vmatpush2.msra.mxu0 0.0
        %2308 = vmatprep.subr.mxu0 0.0
        %2309 = vmatpush2.msra.mxu0 0.0
        %2310 = vmatprep.subr.mxu0 0.0
        %2311 = vmatpush2.msra.mxu0 0.0
        %2312 = vmatprep.subr.mxu0 0.0
        %2313 = vmatpush2.msra.mxu0 0.0
        %2314 = vmatprep.subr.mxu0 0.0
        %2315 = vmatpush2.msra.mxu0 0.0
        %2316 = vmatprep.subr.mxu0 0.0
        %2317 = vmatpush2.msra.mxu0 0.0
        %2318 = vmatprep.subr.mxu0 0.0
        %2319 = vmatpush2.msra.mxu0 0.0
        %2320 = vmatprep.subr.mxu0 0.0
        %2321 = vmatpush2.msra.mxu0 0.0
        %2322 = vmatprep.subr.mxu0 0.0
        %2323 = vmatpush2.msra.mxu0 0.0
        %2324 = vmatprep.subr.mxu0 0.0
        %2325 = vmatpush2.msra.mxu0 0.0
        %2326 = vmatprep.subr.mxu0 0.0
        %2327 = vmatpush2.msra.mxu0 0.0
        %2328 = vmatprep.subr.mxu0 0.0
        %2329 = vmatpush2.msra.mxu0 0.0
        %2330 = vmatprep.mubr.f32.mxu0 0.0
        %2331 = vmatmul.mubr.f32.gmra.mxu0 %v2261
        %v2332 = vpop.f32.mrf.mxu0
        %v2333 = vadd.f32 0.0, %v2332
        %v2334 = vpop.f32.mrf.mxu0
        %2335 = vmatprep.mubr.f32.mxu0 0.0
        %2336 = vmatmul.mubr.f32.gmra.mxu0 %v2264
        %v2337 = vpop.f32.mrf.mxu0
        %v2338 = vadd.f32 0.0, %v2337
        %v2339 = vpop.f32.mrf.mxu0
        %2340 = vdwg.mxu0
        %2343 = vrot.lane.b32.xlu0 %v2159, 96
        %v2344 = vpop.permute.xlu0 %2343
        %2345 = vrot.lane.b32.xlu0 %v2160, 96
        %v2346 = vpop.permute.xlu0 %2345
        %v2350 = vsel %vm1582, %v2143, 0
        %v2353 = vsel %vm1582, %v2144, 0
        %2355 = vmatprep.subr.mxu0 0.0
        %2356 = vmatpush1.msra.mxu0 0.0
        %2357 = vmatprep.subr.mxu0 0.0
        %2358 = vmatpush1.msra.mxu0 0.0
        %2359 = vmatprep.subr.mxu0 0.0
        %2360 = vmatpush1.msra.mxu0 0.0
        %2361 = vmatprep.subr.mxu0 0.0
        %2362 = vmatpush1.msra.mxu0 0.0
        %2363 = vmatprep.subr.mxu0 0.0
        %2364 = vmatpush1.msra.mxu0 0.0
        %2365 = vmatprep.subr.mxu0 0.0
        %2366 = vmatpush1.msra.mxu0 0.0
        %2367 = vmatprep.subr.mxu0 0.0
        %2368 = vmatpush1.msra.mxu0 0.0
        %2369 = vmatprep.subr.mxu0 0.0
        %2370 = vmatpush1.msra.mxu0 0.0
        %2371 = vmatprep.subr.mxu0 0.0
        %2372 = vmatpush1.msra.mxu0 0.0
        %2373 = vmatprep.subr.mxu0 0.0
        %2374 = vmatpush1.msra.mxu0 0.0
        %2375 = vmatprep.subr.mxu0 0.0
        %2376 = vmatpush1.msra.mxu0 0.0
        %2377 = vmatprep.subr.mxu0 0.0
        %2378 = vmatpush1.msra.mxu0 0.0
        %2379 = vmatprep.subr.mxu0 0.0
        %2380 = vmatpush1.msra.mxu0 0.0
        %2381 = vmatprep.subr.mxu0 0.0
        %2382 = vmatpush1.msra.mxu0 0.0
        %2383 = vmatprep.subr.mxu0 0.0
        %2384 = vmatpush1.msra.mxu0 %v2346
        %2385 = vmatprep.subr.mxu0 0.0
        %2386 = vmatpush1.msra.mxu0 %v2344
        %2387 = vmatprep.subr.mxu0 0.0
        %2388 = vmatpush2.msra.mxu0 0.0
        %2389 = vmatprep.subr.mxu0 0.0
        %2390 = vmatpush2.msra.mxu0 0.0
        %2391 = vmatprep.subr.mxu0 0.0
        %2392 = vmatpush2.msra.mxu0 0.0
        %2393 = vmatprep.subr.mxu0 0.0
        %2394 = vmatpush2.msra.mxu0 0.0
        %2395 = vmatprep.subr.mxu0 0.0
        %2396 = vmatpush2.msra.mxu0 0.0
        %2397 = vmatprep.subr.mxu0 0.0
        %2398 = vmatpush2.msra.mxu0 0.0
        %2399 = vmatprep.subr.mxu0 0.0
        %2400 = vmatpush2.msra.mxu0 0.0
        %2401 = vmatprep.subr.mxu0 0.0
        %2402 = vmatpush2.msra.mxu0 0.0
        %2403 = vmatprep.subr.mxu0 0.0
        %2404 = vmatpush2.msra.mxu0 0.0
        %2405 = vmatprep.subr.mxu0 0.0
        %2406 = vmatpush2.msra.mxu0 0.0
        %2407 = vmatprep.subr.mxu0 0.0
        %2408 = vmatpush2.msra.mxu0 0.0
        %2409 = vmatprep.subr.mxu0 0.0
        %2410 = vmatpush2.msra.mxu0 0.0
        %2411 = vmatprep.subr.mxu0 0.0
        %2412 = vmatpush2.msra.mxu0 0.0
        %2413 = vmatprep.subr.mxu0 0.0
        %2414 = vmatpush2.msra.mxu0 0.0
        %2415 = vmatprep.subr.mxu0 0.0
        %2416 = vmatpush2.msra.mxu0 0.0
        %2417 = vmatprep.subr.mxu0 0.0
        %2418 = vmatpush2.msra.mxu0 0.0
        %2419 = vmatprep.mubr.f32.mxu0 0.0
        %2420 = vmatmul.mubr.f32.gmra.mxu0 %v2350
        %v2421 = vpop.f32.mrf.mxu0
        %v2422 = vadd.f32 0.0, %v2421
        %v2423 = vpop.f32.mrf.mxu0
        %2424 = vmatprep.mubr.f32.mxu0 0.0
        %2425 = vmatmul.mubr.f32.gmra.mxu0 %v2353
        %v2426 = vpop.f32.mrf.mxu0
        %v2427 = vadd.f32 0.0, %v2426
        %v2428 = vpop.f32.mrf.mxu0
        %2429 = vdwg.mxu0
        %2432 = vrot.lane.b32.xlu0 %v2161, 96
        %v2433 = vpop.permute.xlu0 %2432
        %2434 = vrot.lane.b32.xlu0 %v2162, 96
        %v2435 = vpop.permute.xlu0 %2434
        %v2439 = vsel %vm1582, %v2145, 0
        %v2442 = vsel %vm1582, %v2146, 0
        %2444 = vmatprep.subr.mxu0 0.0
        %2445 = vmatpush1.msra.mxu0 0.0
        %2446 = vmatprep.subr.mxu0 0.0
        %2447 = vmatpush1.msra.mxu0 0.0
        %2448 = vmatprep.subr.mxu0 0.0
        %2449 = vmatpush1.msra.mxu0 0.0
        %2450 = vmatprep.subr.mxu0 0.0
        %2451 = vmatpush1.msra.mxu0 0.0
        %2452 = vmatprep.subr.mxu0 0.0
        %2453 = vmatpush1.msra.mxu0 0.0
        %2454 = vmatprep.subr.mxu0 0.0
        %2455 = vmatpush1.msra.mxu0 0.0
        %2456 = vmatprep.subr.mxu0 0.0
        %2457 = vmatpush1.msra.mxu0 0.0
        %2458 = vmatprep.subr.mxu0 0.0
        %2459 = vmatpush1.msra.mxu0 0.0
        %2460 = vmatprep.subr.mxu0 0.0
        %2461 = vmatpush1.msra.mxu0 0.0
        %2462 = vmatprep.subr.mxu0 0.0
        %2463 = vmatpush1.msra.mxu0 0.0
        %2464 = vmatprep.subr.mxu0 0.0
        %2465 = vmatpush1.msra.mxu0 0.0
        %2466 = vmatprep.subr.mxu0 0.0
        %2467 = vmatpush1.msra.mxu0 0.0
        %2468 = vmatprep.subr.mxu0 0.0
        %2469 = vmatpush1.msra.mxu0 0.0
        %2470 = vmatprep.subr.mxu0 0.0
        %2471 = vmatpush1.msra.mxu0 0.0
        %2472 = vmatprep.subr.mxu0 0.0
        %2473 = vmatpush1.msra.mxu0 %v2435
        %2474 = vmatprep.subr.mxu0 0.0
        %2475 = vmatpush1.msra.mxu0 %v2433
        %2476 = vmatprep.subr.mxu0 0.0
        %2477 = vmatpush2.msra.mxu0 0.0
        %2478 = vmatprep.subr.mxu0 0.0
        %2479 = vmatpush2.msra.mxu0 0.0
        %2480 = vmatprep.subr.mxu0 0.0
        %2481 = vmatpush2.msra.mxu0 0.0
        %2482 = vmatprep.subr.mxu0 0.0
        %2483 = vmatpush2.msra.mxu0 0.0
        %2484 = vmatprep.subr.mxu0 0.0
        %2485 = vmatpush2.msra.mxu0 0.0
        %2486 = vmatprep.subr.mxu0 0.0
        %2487 = vmatpush2.msra.mxu0 0.0
        %2488 = vmatprep.subr.mxu0 0.0
        %2489 = vmatpush2.msra.mxu0 0.0
        %2490 = vmatprep.subr.mxu0 0.0
        %2491 = vmatpush2.msra.mxu0 0.0
        %2492 = vmatprep.subr.mxu0 0.0
        %2493 = vmatpush2.msra.mxu0 0.0
        %2494 = vmatprep.subr.mxu0 0.0
        %2495 = vmatpush2.msra.mxu0 0.0
        %2496 = vmatprep.subr.mxu0 0.0
        %2497 = vmatpush2.msra.mxu0 0.0
        %2498 = vmatprep.subr.mxu0 0.0
        %2499 = vmatpush2.msra.mxu0 0.0
        %2500 = vmatprep.subr.mxu0 0.0
        %2501 = vmatpush2.msra.mxu0 0.0
        %2502 = vmatprep.subr.mxu0 0.0
        %2503 = vmatpush2.msra.mxu0 0.0
        %2504 = vmatprep.subr.mxu0 0.0
        %2505 = vmatpush2.msra.mxu0 0.0
        %2506 = vmatprep.subr.mxu0 0.0
        %2507 = vmatpush2.msra.mxu0 0.0
        %2508 = vmatprep.mubr.f32.mxu0 0.0
        %2509 = vmatmul.mubr.f32.gmra.mxu0 %v2439
        %v2510 = vpop.f32.mrf.mxu0
        %v2511 = vadd.f32 0.0, %v2510
        %v2512 = vpop.f32.mrf.mxu0
        %2513 = vmatprep.mubr.f32.mxu0 0.0
        %2514 = vmatmul.mubr.f32.gmra.mxu0 %v2442
        %v2515 = vpop.f32.mrf.mxu0
        %v2516 = vadd.f32 0.0, %v2515
        %v2517 = vpop.f32.mrf.mxu0
        %2518 = vdwg.mxu0
        %2521 = vrot.lane.b32.xlu0 %v1679, 96
        %v2522 = vpop.permute.xlu0 %2521
        %2523 = vrot.lane.b32.xlu0 %v1680, 96
        %v2524 = vpop.permute.xlu0 %2523
        %v2528 = vsel %vm1582, %v1663, 0
        %v2531 = vsel %vm1582, %v1664, 0
        %2533 = vmatprep.subr.mxu0 0.0
        %2534 = vmatpush1.msra.mxu0 0.0
        %2535 = vmatprep.subr.mxu0 0.0
        %2536 = vmatpush1.msra.mxu0 0.0
        %2537 = vmatprep.subr.mxu0 0.0
        %2538 = vmatpush1.msra.mxu0 0.0
        %2539 = vmatprep.subr.mxu0 0.0
        %2540 = vmatpush1.msra.mxu0 0.0
        %2541 = vmatprep.subr.mxu0 0.0
        %2542 = vmatpush1.msra.mxu0 0.0
        %2543 = vmatprep.subr.mxu0 0.0
        %2544 = vmatpush1.msra.mxu0 0.0
        %2545 = vmatprep.subr.mxu0 0.0
        %2546 = vmatpush1.msra.mxu0 0.0
        %2547 = vmatprep.subr.mxu0 0.0
        %2548 = vmatpush1.msra.mxu0 0.0
        %2549 = vmatprep.subr.mxu0 0.0
        %2550 = vmatpush1.msra.mxu0 0.0
        %2551 = vmatprep.subr.mxu0 0.0
        %2552 = vmatpush1.msra.mxu0 0.0
        %2553 = vmatprep.subr.mxu0 0.0
        %2554 = vmatpush1.msra.mxu0 0.0
        %2555 = vmatprep.subr.mxu0 0.0
        %2556 = vmatpush1.msra.mxu0 0.0
        %2557 = vmatprep.subr.mxu0 0.0
        %2558 = vmatpush1.msra.mxu0 0.0
        %2559 = vmatprep.subr.mxu0 0.0
        %2560 = vmatpush1.msra.mxu0 0.0
        %2561 = vmatprep.subr.mxu0 0.0
        %2562 = vmatpush1.msra.mxu0 %v2524
        %2563 = vmatprep.subr.mxu0 0.0
        %2564 = vmatpush1.msra.mxu0 %v2522
        %2565 = vmatprep.subr.mxu0 0.0
        %2566 = vmatpush2.msra.mxu0 0.0
        %2567 = vmatprep.subr.mxu0 0.0
        %2568 = vmatpush2.msra.mxu0 0.0
        %2569 = vmatprep.subr.mxu0 0.0
        %2570 = vmatpush2.msra.mxu0 0.0
        %2571 = vmatprep.subr.mxu0 0.0
        %2572 = vmatpush2.msra.mxu0 0.0
        %2573 = vmatprep.subr.mxu0 0.0
        %2574 = vmatpush2.msra.mxu0 0.0
        %2575 = vmatprep.subr.mxu0 0.0
        %2576 = vmatpush2.msra.mxu0 0.0
        %2577 = vmatprep.subr.mxu0 0.0
        %2578 = vmatpush2.msra.mxu0 0.0
        %2579 = vmatprep.subr.mxu0 0.0
        %2580 = vmatpush2.msra.mxu0 0.0
        %2581 = vmatprep.subr.mxu0 0.0
        %2582 = vmatpush2.msra.mxu0 0.0
        %2583 = vmatprep.subr.mxu0 0.0
        %2584 = vmatpush2.msra.mxu0 0.0
        %2585 = vmatprep.subr.mxu0 0.0
        %2586 = vmatpush2.msra.mxu0 0.0
        %2587 = vmatprep.subr.mxu0 0.0
        %2588 = vmatpush2.msra.mxu0 0.0
        %2589 = vmatprep.subr.mxu0 0.0
        %2590 = vmatpush2.msra.mxu0 0.0
        %2591 = vmatprep.subr.mxu0 0.0
        %2592 = vmatpush2.msra.mxu0 0.0
        %2593 = vmatprep.subr.mxu0 0.0
        %2594 = vmatpush2.msra.mxu0 0.0
        %2595 = vmatprep.subr.mxu0 0.0
        %2596 = vmatpush2.msra.mxu0 0.0
        %2597 = vmatprep.mubr.f32.mxu0 0.0
        %2598 = vmatmul.mubr.f32.gmra.mxu0 %v2528
        %v2599 = vpop.f32.mrf.mxu0
        %v2600 = vadd.f32 %v2244, %v2599
        %v2601 = vpop.f32.mrf.mxu0
        %2602 = vmatprep.mubr.f32.mxu0 0.0
        %2603 = vmatmul.mubr.f32.gmra.mxu0 %v2531
        %v2604 = vpop.f32.mrf.mxu0
        %v2605 = vadd.f32 %v2249, %v2604
        %v2606 = vpop.f32.mrf.mxu0
        %2607 = vdwg.mxu0
        %2610 = vrot.lane.b32.xlu0 %v1681, 96
        %v2611 = vpop.permute.xlu0 %2610
        %2612 = vrot.lane.b32.xlu0 %v1682, 96
        %v2613 = vpop.permute.xlu0 %2612
        %v2617 = vsel %vm1582, %v1665, 0
        %v2620 = vsel %vm1582, %v1666, 0
        %2622 = vmatprep.subr.mxu0 0.0
        %2623 = vmatpush1.msra.mxu0 0.0
        %2624 = vmatprep.subr.mxu0 0.0
        %2625 = vmatpush1.msra.mxu0 0.0
        %2626 = vmatprep.subr.mxu0 0.0
        %2627 = vmatpush1.msra.mxu0 0.0
        %2628 = vmatprep.subr.mxu0 0.0
        %2629 = vmatpush1.msra.mxu0 0.0
        %2630 = vmatprep.subr.mxu0 0.0
        %2631 = vmatpush1.msra.mxu0 0.0
        %2632 = vmatprep.subr.mxu0 0.0
        %2633 = vmatpush1.msra.mxu0 0.0
        %2634 = vmatprep.subr.mxu0 0.0
        %2635 = vmatpush1.msra.mxu0 0.0
        %2636 = vmatprep.subr.mxu0 0.0
        %2637 = vmatpush1.msra.mxu0 0.0
        %2638 = vmatprep.subr.mxu0 0.0
        %2639 = vmatpush1.msra.mxu0 0.0
        %2640 = vmatprep.subr.mxu0 0.0
        %2641 = vmatpush1.msra.mxu0 0.0
        %2642 = vmatprep.subr.mxu0 0.0
        %2643 = vmatpush1.msra.mxu0 0.0
        %2644 = vmatprep.subr.mxu0 0.0
        %2645 = vmatpush1.msra.mxu0 0.0
        %2646 = vmatprep.subr.mxu0 0.0
        %2647 = vmatpush1.msra.mxu0 0.0
        %2648 = vmatprep.subr.mxu0 0.0
        %2649 = vmatpush1.msra.mxu0 0.0
        %2650 = vmatprep.subr.mxu0 0.0
        %2651 = vmatpush1.msra.mxu0 %v2613
        %2652 = vmatprep.subr.mxu0 0.0
        %2653 = vmatpush1.msra.mxu0 %v2611
        %2654 = vmatprep.subr.mxu0 0.0
        %2655 = vmatpush2.msra.mxu0 0.0
        %2656 = vmatprep.subr.mxu0 0.0
        %2657 = vmatpush2.msra.mxu0 0.0
        %2658 = vmatprep.subr.mxu0 0.0
        %2659 = vmatpush2.msra.mxu0 0.0
        %2660 = vmatprep.subr.mxu0 0.0
        %2661 = vmatpush2.msra.mxu0 0.0
        %2662 = vmatprep.subr.mxu0 0.0
        %2663 = vmatpush2.msra.mxu0 0.0
        %2664 = vmatprep.subr.mxu0 0.0
        %2665 = vmatpush2.msra.mxu0 0.0
        %2666 = vmatprep.subr.mxu0 0.0
        %2667 = vmatpush2.msra.mxu0 0.0
        %2668 = vmatprep.subr.mxu0 0.0
        %2669 = vmatpush2.msra.mxu0 0.0
        %2670 = vmatprep.subr.mxu0 0.0
        %2671 = vmatpush2.msra.mxu0 0.0
        %2672 = vmatprep.subr.mxu0 0.0
        %2673 = vmatpush2.msra.mxu0 0.0
        %2674 = vmatprep.subr.mxu0 0.0
        %2675 = vmatpush2.msra.mxu0 0.0
        %2676 = vmatprep.subr.mxu0 0.0
        %2677 = vmatpush2.msra.mxu0 0.0
        %2678 = vmatprep.subr.mxu0 0.0
        %2679 = vmatpush2.msra.mxu0 0.0
        %2680 = vmatprep.subr.mxu0 0.0
        %2681 = vmatpush2.msra.mxu0 0.0
        %2682 = vmatprep.subr.mxu0 0.0
        %2683 = vmatpush2.msra.mxu0 0.0
        %2684 = vmatprep.subr.mxu0 0.0
        %2685 = vmatpush2.msra.mxu0 0.0
        %2686 = vmatprep.mubr.f32.mxu0 0.0
        %2687 = vmatmul.mubr.f32.gmra.mxu0 %v2617
        %v2688 = vpop.f32.mrf.mxu0
        %v2689 = vadd.f32 %v2333, %v2688
        %v2690 = vpop.f32.mrf.mxu0
        %2691 = vmatprep.mubr.f32.mxu0 0.0
        %2692 = vmatmul.mubr.f32.gmra.mxu0 %v2620
        %v2693 = vpop.f32.mrf.mxu0
        %v2694 = vadd.f32 %v2338, %v2693
        %v2695 = vpop.f32.mrf.mxu0
        %2696 = vdwg.mxu0
        %2699 = vrot.lane.b32.xlu0 %v1683, 96
        %v2700 = vpop.permute.xlu0 %2699
        %2701 = vrot.lane.b32.xlu0 %v1684, 96
        %v2702 = vpop.permute.xlu0 %2701
        %v2706 = vsel %vm1582, %v1667, 0
        %v2709 = vsel %vm1582, %v1668, 0
        %2711 = vmatprep.subr.mxu0 0.0
        %2712 = vmatpush1.msra.mxu0 0.0
        %2713 = vmatprep.subr.mxu0 0.0
        %2714 = vmatpush1.msra.mxu0 0.0
        %2715 = vmatprep.subr.mxu0 0.0
        %2716 = vmatpush1.msra.mxu0 0.0
        %2717 = vmatprep.subr.mxu0 0.0
        %2718 = vmatpush1.msra.mxu0 0.0
        %2719 = vmatprep.subr.mxu0 0.0
        %2720 = vmatpush1.msra.mxu0 0.0
        %2721 = vmatprep.subr.mxu0 0.0
        %2722 = vmatpush1.msra.mxu0 0.0
        %2723 = vmatprep.subr.mxu0 0.0
        %2724 = vmatpush1.msra.mxu0 0.0
        %2725 = vmatprep.subr.mxu0 0.0
        %2726 = vmatpush1.msra.mxu0 0.0
        %2727 = vmatprep.subr.mxu0 0.0
        %2728 = vmatpush1.msra.mxu0 0.0
        %2729 = vmatprep.subr.mxu0 0.0
        %2730 = vmatpush1.msra.mxu0 0.0
        %2731 = vmatprep.subr.mxu0 0.0
        %2732 = vmatpush1.msra.mxu0 0.0
        %2733 = vmatprep.subr.mxu0 0.0
        %2734 = vmatpush1.msra.mxu0 0.0
        %2735 = vmatprep.subr.mxu0 0.0
        %2736 = vmatpush1.msra.mxu0 0.0
        %2737 = vmatprep.subr.mxu0 0.0
        %2738 = vmatpush1.msra.mxu0 0.0
        %2739 = vmatprep.subr.mxu0 0.0
        %2740 = vmatpush1.msra.mxu0 %v2702
        %2741 = vmatprep.subr.mxu0 0.0
        %2742 = vmatpush1.msra.mxu0 %v2700
        %2743 = vmatprep.subr.mxu0 0.0
        %2744 = vmatpush2.msra.mxu0 0.0
        %2745 = vmatprep.subr.mxu0 0.0
        %2746 = vmatpush2.msra.mxu0 0.0
        %2747 = vmatprep.subr.mxu0 0.0
        %2748 = vmatpush2.msra.mxu0 0.0
        %2749 = vmatprep.subr.mxu0 0.0
        %2750 = vmatpush2.msra.mxu0 0.0
        %2751 = vmatprep.subr.mxu0 0.0
        %2752 = vmatpush2.msra.mxu0 0.0
        %2753 = vmatprep.subr.mxu0 0.0
        %2754 = vmatpush2.msra.mxu0 0.0
        %2755 = vmatprep.subr.mxu0 0.0
        %2756 = vmatpush2.msra.mxu0 0.0
        %2757 = vmatprep.subr.mxu0 0.0
        %2758 = vmatpush2.msra.mxu0 0.0
        %2759 = vmatprep.subr.mxu0 0.0
        %2760 = vmatpush2.msra.mxu0 0.0
        %2761 = vmatprep.subr.mxu0 0.0
        %2762 = vmatpush2.msra.mxu0 0.0
        %2763 = vmatprep.subr.mxu0 0.0
        %2764 = vmatpush2.msra.mxu0 0.0
        %2765 = vmatprep.subr.mxu0 0.0
        %2766 = vmatpush2.msra.mxu0 0.0
        %2767 = vmatprep.subr.mxu0 0.0
        %2768 = vmatpush2.msra.mxu0 0.0
        %2769 = vmatprep.subr.mxu0 0.0
        %2770 = vmatpush2.msra.mxu0 0.0
        %2771 = vmatprep.subr.mxu0 0.0
        %2772 = vmatpush2.msra.mxu0 0.0
        %2773 = vmatprep.subr.mxu0 0.0
        %2774 = vmatpush2.msra.mxu0 0.0
        %2775 = vmatprep.mubr.f32.mxu0 0.0
        %2776 = vmatmul.mubr.f32.gmra.mxu0 %v2706
        %v2777 = vpop.f32.mrf.mxu0
        %v2778 = vadd.f32 %v2422, %v2777
        %v2779 = vpop.f32.mrf.mxu0
        %2780 = vmatprep.mubr.f32.mxu0 0.0
        %2781 = vmatmul.mubr.f32.gmra.mxu0 %v2709
        %v2782 = vpop.f32.mrf.mxu0
        %v2783 = vadd.f32 %v2427, %v2782
        %v2784 = vpop.f32.mrf.mxu0
        %2785 = vdwg.mxu0
        %2788 = vrot.lane.b32.xlu0 %v1685, 96
        %v2789 = vpop.permute.xlu0 %2788
        %2790 = vrot.lane.b32.xlu0 %v1686, 96
        %v2791 = vpop.permute.xlu0 %2790
        %v2795 = vsel %vm1582, %v1669, 0
        %v2798 = vsel %vm1582, %v1670, 0
        %2800 = vmatprep.subr.mxu0 0.0
        %2801 = vmatpush1.msra.mxu0 0.0
        %2802 = vmatprep.subr.mxu0 0.0
        %2803 = vmatpush1.msra.mxu0 0.0
        %2804 = vmatprep.subr.mxu0 0.0
        %2805 = vmatpush1.msra.mxu0 0.0
        %2806 = vmatprep.subr.mxu0 0.0
        %2807 = vmatpush1.msra.mxu0 0.0
        %2808 = vmatprep.subr.mxu0 0.0
        %2809 = vmatpush1.msra.mxu0 0.0
        %2810 = vmatprep.subr.mxu0 0.0
        %2811 = vmatpush1.msra.mxu0 0.0
        %2812 = vmatprep.subr.mxu0 0.0
        %2813 = vmatpush1.msra.mxu0 0.0
        %2814 = vmatprep.subr.mxu0 0.0
        %2815 = vmatpush1.msra.mxu0 0.0
        %2816 = vmatprep.subr.mxu0 0.0
        %2817 = vmatpush1.msra.mxu0 0.0
        %2818 = vmatprep.subr.mxu0 0.0
        %2819 = vmatpush1.msra.mxu0 0.0
        %2820 = vmatprep.subr.mxu0 0.0
        %2821 = vmatpush1.msra.mxu0 0.0
        %2822 = vmatprep.subr.mxu0 0.0
        %2823 = vmatpush1.msra.mxu0 0.0
        %2824 = vmatprep.subr.mxu0 0.0
        %2825 = vmatpush1.msra.mxu0 0.0
        %2826 = vmatprep.subr.mxu0 0.0
        %2827 = vmatpush1.msra.mxu0 0.0
        %2828 = vmatprep.subr.mxu0 0.0
        %2829 = vmatpush1.msra.mxu0 %v2791
        %2830 = vmatprep.subr.mxu0 0.0
        %2831 = vmatpush1.msra.mxu0 %v2789
        %2832 = vmatprep.subr.mxu0 0.0
        %2833 = vmatpush2.msra.mxu0 0.0
        %2834 = vmatprep.subr.mxu0 0.0
        %2835 = vmatpush2.msra.mxu0 0.0
        %2836 = vmatprep.subr.mxu0 0.0
        %2837 = vmatpush2.msra.mxu0 0.0
        %2838 = vmatprep.subr.mxu0 0.0
        %2839 = vmatpush2.msra.mxu0 0.0
        %2840 = vmatprep.subr.mxu0 0.0
        %2841 = vmatpush2.msra.mxu0 0.0
        %2842 = vmatprep.subr.mxu0 0.0
        %2843 = vmatpush2.msra.mxu0 0.0
        %2844 = vmatprep.subr.mxu0 0.0
        %2845 = vmatpush2.msra.mxu0 0.0
        %2846 = vmatprep.subr.mxu0 0.0
        %2847 = vmatpush2.msra.mxu0 0.0
        %2848 = vmatprep.subr.mxu0 0.0
        %2849 = vmatpush2.msra.mxu0 0.0
        %2850 = vmatprep.subr.mxu0 0.0
        %2851 = vmatpush2.msra.mxu0 0.0
        %2852 = vmatprep.subr.mxu0 0.0
        %2853 = vmatpush2.msra.mxu0 0.0
        %2854 = vmatprep.subr.mxu0 0.0
        %2855 = vmatpush2.msra.mxu0 0.0
        %2856 = vmatprep.subr.mxu0 0.0
        %2857 = vmatpush2.msra.mxu0 0.0
        %2858 = vmatprep.subr.mxu0 0.0
        %2859 = vmatpush2.msra.mxu0 0.0
        %2860 = vmatprep.subr.mxu0 0.0
        %2861 = vmatpush2.msra.mxu0 0.0
        %2862 = vmatprep.subr.mxu0 0.0
        %2863 = vmatpush2.msra.mxu0 0.0
        %2864 = vmatprep.mubr.f32.mxu0 0.0
        %2865 = vmatmul.mubr.f32.gmra.mxu0 %v2795
        %v2866 = vpop.f32.mrf.mxu0
        %v2867 = vadd.f32 %v2511, %v2866
        %v2868 = vpop.f32.mrf.mxu0
        %2869 = vmatprep.mubr.f32.mxu0 0.0
        %2870 = vmatmul.mubr.f32.gmra.mxu0 %v2798
        %v2871 = vpop.f32.mrf.mxu0
        %v2872 = vadd.f32 %v2516, %v2871
        %v2873 = vpop.f32.mrf.mxu0
        %2874 = vdwg.mxu0
        %2875 = vrot.lane.b32.xlu0 %v1076, 112
        %v2876 = vpop.permute.xlu0 %2875
        %2877 = vrot.lane.b32.xlu0 %v1077, 112
        %v2878 = vpop.permute.xlu0 %2877
        %2879 = vrot.lane.b32.xlu0 %v1185, 112
        %v2880 = vpop.permute.xlu0 %2879
        %2881 = vrot.lane.b32.xlu0 %v1186, 112
        %v2882 = vpop.permute.xlu0 %2881
        %v2883 = vsel %vm1225, %v2876, 0
        %v2885 = vsel %vm1225, %v2878, 0
        %v2887 = vsel %vm1225, %v2880, 0
        %v2889 = vsel %vm1225, %v2882, 0
        %2891 = vmatprep.subr.mxu0 0.0
        %2892 = vmatpush1.xpose.msra.mxu0 0.0
        %2893 = vmatprep.subr.mxu0 0.0
        %2894 = vmatpush1.xpose.msra.mxu0 0.0
        %2895 = vmatprep.subr.mxu0 0.0
        %2896 = vmatpush1.xpose.msra.mxu0 0.0
        %2897 = vmatprep.subr.mxu0 0.0
        %2898 = vmatpush1.xpose.msra.mxu0 0.0
        %2899 = vmatprep.subr.mxu0 0.0
        %2900 = vmatpush1.xpose.msra.mxu0 0.0
        %2901 = vmatprep.subr.mxu0 0.0
        %2902 = vmatpush1.xpose.msra.mxu0 0.0
        %2903 = vmatprep.subr.mxu0 0.0
        %2904 = vmatpush1.xpose.msra.mxu0 0.0
        %2905 = vmatprep.subr.mxu0 0.0
        %2906 = vmatpush1.xpose.msra.mxu0 0.0
        %2907 = vmatprep.subr.mxu0 0.0
        %2908 = vmatpush1.xpose.msra.mxu0 0.0
        %2909 = vmatprep.subr.mxu0 0.0
        %2910 = vmatpush1.xpose.msra.mxu0 0.0
        %2911 = vmatprep.subr.mxu0 0.0
        %2912 = vmatpush1.xpose.msra.mxu0 0.0
        %2913 = vmatprep.subr.mxu0 0.0
        %2914 = vmatpush1.xpose.msra.mxu0 0.0
        %2915 = vmatprep.subr.mxu0 0.0
        %2916 = vmatpush1.xpose.msra.mxu0 0.0
        %2917 = vmatprep.subr.mxu0 0.0
        %2918 = vmatpush1.xpose.msra.mxu0 0.0
        %2919 = vmatprep.subr.mxu0 0.0
        %2920 = vmatpush1.xpose.msra.mxu0 %v2889
        %2921 = vmatprep.subr.mxu0 0.0
        %2922 = vmatpush1.xpose.msra.mxu0 %v2887
        %2923 = vmatprep.subr.mxu0 0.0
        %2924 = vmatpush2.xpose.msra.mxu0 0.0
        %2925 = vmatprep.subr.mxu0 0.0
        %2926 = vmatpush2.xpose.msra.mxu0 0.0
        %2927 = vmatprep.subr.mxu0 0.0
        %2928 = vmatpush2.xpose.msra.mxu0 0.0
        %2929 = vmatprep.subr.mxu0 0.0
        %2930 = vmatpush2.xpose.msra.mxu0 0.0
        %2931 = vmatprep.subr.mxu0 0.0
        %2932 = vmatpush2.xpose.msra.mxu0 0.0
        %2933 = vmatprep.subr.mxu0 0.0
        %2934 = vmatpush2.xpose.msra.mxu0 0.0
        %2935 = vmatprep.subr.mxu0 0.0
        %2936 = vmatpush2.xpose.msra.mxu0 0.0
        %2937 = vmatprep.subr.mxu0 0.0
        %2938 = vmatpush2.xpose.msra.mxu0 0.0
        %2939 = vmatprep.subr.mxu0 0.0
        %2940 = vmatpush2.xpose.msra.mxu0 0.0
        %2941 = vmatprep.subr.mxu0 0.0
        %2942 = vmatpush2.xpose.msra.mxu0 0.0
        %2943 = vmatprep.subr.mxu0 0.0
        %2944 = vmatpush2.xpose.msra.mxu0 0.0
        %2945 = vmatprep.subr.mxu0 0.0
        %2946 = vmatpush2.xpose.msra.mxu0 0.0
        %2947 = vmatprep.subr.mxu0 0.0
        %2948 = vmatpush2.xpose.msra.mxu0 0.0
        %2949 = vmatprep.subr.mxu0 0.0
        %2950 = vmatpush2.xpose.msra.mxu0 0.0
        %2951 = vmatprep.subr.mxu0 0.0
        %2952 = vmatpush2.xpose.msra.mxu0 0.0
        %2953 = vmatprep.subr.mxu0 0.0
        %2954 = vmatpush2.xpose.msra.mxu0 0.0
        %2955 = vmatprep.mubr.f32.mxu0 0.0
        %2956 = vmatmul.mubr.f32.gmra.mxu0 %v2883
        %v2957 = vpop.f32.mrf.mxu0
        %v2958 = vadd.f32 %v1213, %v2957
        %v2959 = vpop.f32.mrf.mxu0
        %2960 = vmatprep.mubr.f32.mxu0 0.0
        %2961 = vmatmul.mubr.f32.gmra.mxu0 %v2885
        %v2962 = vpop.f32.mrf.mxu0
        %v2963 = vadd.f32 %v1214, %v2962
        %v2964 = vpop.f32.mrf.mxu0
        %2965 = vdwg.mxu0
        %2966 = vrot.lane.b32.xlu0 %v1078, 112
        %v2967 = vpop.permute.xlu0 %2966
        %2968 = vrot.lane.b32.xlu0 %v1079, 112
        %v2969 = vpop.permute.xlu0 %2968
        %2970 = vrot.lane.b32.xlu0 %v1187, 112
        %v2971 = vpop.permute.xlu0 %2970
        %2972 = vrot.lane.b32.xlu0 %v1188, 112
        %v2973 = vpop.permute.xlu0 %2972
        %v2974 = vsel %vm1225, %v2967, 0
        %v2976 = vsel %vm1225, %v2969, 0
        %v2978 = vsel %vm1225, %v2971, 0
        %v2980 = vsel %vm1225, %v2973, 0
        %2982 = vmatprep.subr.mxu0 0.0
        %2983 = vmatpush1.xpose.msra.mxu0 0.0
        %2984 = vmatprep.subr.mxu0 0.0
        %2985 = vmatpush1.xpose.msra.mxu0 0.0
        %2986 = vmatprep.subr.mxu0 0.0
        %2987 = vmatpush1.xpose.msra.mxu0 0.0
        %2988 = vmatprep.subr.mxu0 0.0
        %2989 = vmatpush1.xpose.msra.mxu0 0.0
        %2990 = vmatprep.subr.mxu0 0.0
        %2991 = vmatpush1.xpose.msra.mxu0 0.0
        %2992 = vmatprep.subr.mxu0 0.0
        %2993 = vmatpush1.xpose.msra.mxu0 0.0
        %2994 = vmatprep.subr.mxu0 0.0
        %2995 = vmatpush1.xpose.msra.mxu0 0.0
        %2996 = vmatprep.subr.mxu0 0.0
        %2997 = vmatpush1.xpose.msra.mxu0 0.0
        %2998 = vmatprep.subr.mxu0 0.0
        %2999 = vmatpush1.xpose.msra.mxu0 0.0
        %3000 = vmatprep.subr.mxu0 0.0
        %3001 = vmatpush1.xpose.msra.mxu0 0.0
        %3002 = vmatprep.subr.mxu0 0.0
        %3003 = vmatpush1.xpose.msra.mxu0 0.0
        %3004 = vmatprep.subr.mxu0 0.0
        %3005 = vmatpush1.xpose.msra.mxu0 0.0
        %3006 = vmatprep.subr.mxu0 0.0
        %3007 = vmatpush1.xpose.msra.mxu0 0.0
        %3008 = vmatprep.subr.mxu0 0.0
        %3009 = vmatpush1.xpose.msra.mxu0 0.0
        %3010 = vmatprep.subr.mxu0 0.0
        %3011 = vmatpush1.xpose.msra.mxu0 %v2980
        %3012 = vmatprep.subr.mxu0 0.0
        %3013 = vmatpush1.xpose.msra.mxu0 %v2978
        %3014 = vmatprep.subr.mxu0 0.0
        %3015 = vmatpush2.xpose.msra.mxu0 0.0
        %3016 = vmatprep.subr.mxu0 0.0
        %3017 = vmatpush2.xpose.msra.mxu0 0.0
        %3018 = vmatprep.subr.mxu0 0.0
        %3019 = vmatpush2.xpose.msra.mxu0 0.0
        %3020 = vmatprep.subr.mxu0 0.0
        %3021 = vmatpush2.xpose.msra.mxu0 0.0
        %3022 = vmatprep.subr.mxu0 0.0
        %3023 = vmatpush2.xpose.msra.mxu0 0.0
        %3024 = vmatprep.subr.mxu0 0.0
        %3025 = vmatpush2.xpose.msra.mxu0 0.0
        %3026 = vmatprep.subr.mxu0 0.0
        %3027 = vmatpush2.xpose.msra.mxu0 0.0
        %3028 = vmatprep.subr.mxu0 0.0
        %3029 = vmatpush2.xpose.msra.mxu0 0.0
        %3030 = vmatprep.subr.mxu0 0.0
        %3031 = vmatpush2.xpose.msra.mxu0 0.0
        %3032 = vmatprep.subr.mxu0 0.0
        %3033 = vmatpush2.xpose.msra.mxu0 0.0
        %3034 = vmatprep.subr.mxu0 0.0
        %3035 = vmatpush2.xpose.msra.mxu0 0.0
        %3036 = vmatprep.subr.mxu0 0.0
        %3037 = vmatpush2.xpose.msra.mxu0 0.0
        %3038 = vmatprep.subr.mxu0 0.0
        %3039 = vmatpush2.xpose.msra.mxu0 0.0
        %3040 = vmatprep.subr.mxu0 0.0
        %3041 = vmatpush2.xpose.msra.mxu0 0.0
        %3042 = vmatprep.subr.mxu0 0.0
        %3043 = vmatpush2.xpose.msra.mxu0 0.0
        %3044 = vmatprep.subr.mxu0 0.0
        %3045 = vmatpush2.xpose.msra.mxu0 0.0
        %3046 = vmatprep.mubr.f32.mxu0 0.0
        %3047 = vmatmul.mubr.f32.gmra.mxu0 %v2974
        %v3048 = vpop.f32.mrf.mxu0
        %v3049 = vadd.f32 %v1213, %v3048
        %v3050 = vpop.f32.mrf.mxu0
        %3051 = vmatprep.mubr.f32.mxu0 0.0
        %3052 = vmatmul.mubr.f32.gmra.mxu0 %v2976
        %v3053 = vpop.f32.mrf.mxu0
        %v3054 = vadd.f32 %v1214, %v3053
        %v3055 = vpop.f32.mrf.mxu0
        %3056 = vdwg.mxu0
        %3057 = vrot.lane.b32.xlu0 %v1080, 112
        %v3058 = vpop.permute.xlu0 %3057
        %3059 = vrot.lane.b32.xlu0 %v1081, 112
        %v3060 = vpop.permute.xlu0 %3059
        %3061 = vrot.lane.b32.xlu0 %v1189, 112
        %v3062 = vpop.permute.xlu0 %3061
        %3063 = vrot.lane.b32.xlu0 %v1190, 112
        %v3064 = vpop.permute.xlu0 %3063
        %v3065 = vsel %vm1225, %v3058, 0
        %v3067 = vsel %vm1225, %v3060, 0
        %v3069 = vsel %vm1225, %v3062, 0
        %v3071 = vsel %vm1225, %v3064, 0
        %3073 = vmatprep.subr.mxu0 0.0
        %3074 = vmatpush1.xpose.msra.mxu0 0.0
        %3075 = vmatprep.subr.mxu0 0.0
        %3076 = vmatpush1.xpose.msra.mxu0 0.0
        %3077 = vmatprep.subr.mxu0 0.0
        %3078 = vmatpush1.xpose.msra.mxu0 0.0
        %3079 = vmatprep.subr.mxu0 0.0
        %3080 = vmatpush1.xpose.msra.mxu0 0.0
        %3081 = vmatprep.subr.mxu0 0.0
        %3082 = vmatpush1.xpose.msra.mxu0 0.0
        %3083 = vmatprep.subr.mxu0 0.0
        %3084 = vmatpush1.xpose.msra.mxu0 0.0
        %3085 = vmatprep.subr.mxu0 0.0
        %3086 = vmatpush1.xpose.msra.mxu0 0.0
        %3087 = vmatprep.subr.mxu0 0.0
        %3088 = vmatpush1.xpose.msra.mxu0 0.0
        %3089 = vmatprep.subr.mxu0 0.0
        %3090 = vmatpush1.xpose.msra.mxu0 0.0
        %3091 = vmatprep.subr.mxu0 0.0
        %3092 = vmatpush1.xpose.msra.mxu0 0.0
        %3093 = vmatprep.subr.mxu0 0.0
        %3094 = vmatpush1.xpose.msra.mxu0 0.0
        %3095 = vmatprep.subr.mxu0 0.0
        %3096 = vmatpush1.xpose.msra.mxu0 0.0
        %3097 = vmatprep.subr.mxu0 0.0
        %3098 = vmatpush1.xpose.msra.mxu0 0.0
        %3099 = vmatprep.subr.mxu0 0.0
        %3100 = vmatpush1.xpose.msra.mxu0 0.0
        %3101 = vmatprep.subr.mxu0 0.0
        %3102 = vmatpush1.xpose.msra.mxu0 %v3071
        %3103 = vmatprep.subr.mxu0 0.0
        %3104 = vmatpush1.xpose.msra.mxu0 %v3069
        %3105 = vmatprep.subr.mxu0 0.0
        %3106 = vmatpush2.xpose.msra.mxu0 0.0
        %3107 = vmatprep.subr.mxu0 0.0
        %3108 = vmatpush2.xpose.msra.mxu0 0.0
        %3109 = vmatprep.subr.mxu0 0.0
        %3110 = vmatpush2.xpose.msra.mxu0 0.0
        %3111 = vmatprep.subr.mxu0 0.0
        %3112 = vmatpush2.xpose.msra.mxu0 0.0
        %3113 = vmatprep.subr.mxu0 0.0
        %3114 = vmatpush2.xpose.msra.mxu0 0.0
        %3115 = vmatprep.subr.mxu0 0.0
        %3116 = vmatpush2.xpose.msra.mxu0 0.0
        %3117 = vmatprep.subr.mxu0 0.0
        %3118 = vmatpush2.xpose.msra.mxu0 0.0
        %3119 = vmatprep.subr.mxu0 0.0
        %3120 = vmatpush2.xpose.msra.mxu0 0.0
        %3121 = vmatprep.subr.mxu0 0.0
        %3122 = vmatpush2.xpose.msra.mxu0 0.0
        %3123 = vmatprep.subr.mxu0 0.0
        %3124 = vmatpush2.xpose.msra.mxu0 0.0
        %3125 = vmatprep.subr.mxu0 0.0
        %3126 = vmatpush2.xpose.msra.mxu0 0.0
        %3127 = vmatprep.subr.mxu0 0.0
        %3128 = vmatpush2.xpose.msra.mxu0 0.0
        %3129 = vmatprep.subr.mxu0 0.0
        %3130 = vmatpush2.xpose.msra.mxu0 0.0
        %3131 = vmatprep.subr.mxu0 0.0
        %3132 = vmatpush2.xpose.msra.mxu0 0.0
        %3133 = vmatprep.subr.mxu0 0.0
        %3134 = vmatpush2.xpose.msra.mxu0 0.0
        %3135 = vmatprep.subr.mxu0 0.0
        %3136 = vmatpush2.xpose.msra.mxu0 0.0
        %3137 = vmatprep.mubr.f32.mxu0 0.0
        %3138 = vmatmul.mubr.f32.gmra.mxu0 %v3065
        %v3139 = vpop.f32.mrf.mxu0
        %v3140 = vadd.f32 %v1213, %v3139
        %v3141 = vpop.f32.mrf.mxu0
        %3142 = vmatprep.mubr.f32.mxu0 0.0
        %3143 = vmatmul.mubr.f32.gmra.mxu0 %v3067
        %v3144 = vpop.f32.mrf.mxu0
        %v3145 = vadd.f32 %v1214, %v3144
        %v3146 = vpop.f32.mrf.mxu0
        %3147 = vdwg.mxu0
        %3148 = vrot.lane.b32.xlu0 %v1082, 112
        %v3149 = vpop.permute.xlu0 %3148
        %3150 = vrot.lane.b32.xlu0 %v1083, 112
        %v3151 = vpop.permute.xlu0 %3150
        %3152 = vrot.lane.b32.xlu0 %v1191, 112
        %v3153 = vpop.permute.xlu0 %3152
        %3154 = vrot.lane.b32.xlu0 %v1192, 112
        %v3155 = vpop.permute.xlu0 %3154
        %v3156 = vsel %vm1225, %v3149, 0
        %v3158 = vsel %vm1225, %v3151, 0
        %v3160 = vsel %vm1225, %v3153, 0
        %v3162 = vsel %vm1225, %v3155, 0
        %3164 = vmatprep.subr.mxu0 0.0
        %3165 = vmatpush1.xpose.msra.mxu0 0.0
        %3166 = vmatprep.subr.mxu0 0.0
        %3167 = vmatpush1.xpose.msra.mxu0 0.0
        %3168 = vmatprep.subr.mxu0 0.0
        %3169 = vmatpush1.xpose.msra.mxu0 0.0
        %3170 = vmatprep.subr.mxu0 0.0
        %3171 = vmatpush1.xpose.msra.mxu0 0.0
        %3172 = vmatprep.subr.mxu0 0.0
        %3173 = vmatpush1.xpose.msra.mxu0 0.0
        %3174 = vmatprep.subr.mxu0 0.0
        %3175 = vmatpush1.xpose.msra.mxu0 0.0
        %3176 = vmatprep.subr.mxu0 0.0
        %3177 = vmatpush1.xpose.msra.mxu0 0.0
        %3178 = vmatprep.subr.mxu0 0.0
        %3179 = vmatpush1.xpose.msra.mxu0 0.0
        %3180 = vmatprep.subr.mxu0 0.0
        %3181 = vmatpush1.xpose.msra.mxu0 0.0
        %3182 = vmatprep.subr.mxu0 0.0
        %3183 = vmatpush1.xpose.msra.mxu0 0.0
        %3184 = vmatprep.subr.mxu0 0.0
        %3185 = vmatpush1.xpose.msra.mxu0 0.0
        %3186 = vmatprep.subr.mxu0 0.0
        %3187 = vmatpush1.xpose.msra.mxu0 0.0
        %3188 = vmatprep.subr.mxu0 0.0
        %3189 = vmatpush1.xpose.msra.mxu0 0.0
        %3190 = vmatprep.subr.mxu0 0.0
        %3191 = vmatpush1.xpose.msra.mxu0 0.0
        %3192 = vmatprep.subr.mxu0 0.0
        %3193 = vmatpush1.xpose.msra.mxu0 %v3162
        %3194 = vmatprep.subr.mxu0 0.0
        %3195 = vmatpush1.xpose.msra.mxu0 %v3160
        %3196 = vmatprep.subr.mxu0 0.0
        %3197 = vmatpush2.xpose.msra.mxu0 0.0
        %3198 = vmatprep.subr.mxu0 0.0
        %3199 = vmatpush2.xpose.msra.mxu0 0.0
        %3200 = vmatprep.subr.mxu0 0.0
        %3201 = vmatpush2.xpose.msra.mxu0 0.0
        %3202 = vmatprep.subr.mxu0 0.0
        %3203 = vmatpush2.xpose.msra.mxu0 0.0
        %3204 = vmatprep.subr.mxu0 0.0
        %3205 = vmatpush2.xpose.msra.mxu0 0.0
        %3206 = vmatprep.subr.mxu0 0.0
        %3207 = vmatpush2.xpose.msra.mxu0 0.0
        %3208 = vmatprep.subr.mxu0 0.0
        %3209 = vmatpush2.xpose.msra.mxu0 0.0
        %3210 = vmatprep.subr.mxu0 0.0
        %3211 = vmatpush2.xpose.msra.mxu0 0.0
        %3212 = vmatprep.subr.mxu0 0.0
        %3213 = vmatpush2.xpose.msra.mxu0 0.0
        %3214 = vmatprep.subr.mxu0 0.0
        %3215 = vmatpush2.xpose.msra.mxu0 0.0
        %3216 = vmatprep.subr.mxu0 0.0
        %3217 = vmatpush2.xpose.msra.mxu0 0.0
        %3218 = vmatprep.subr.mxu0 0.0
        %3219 = vmatpush2.xpose.msra.mxu0 0.0
        %3220 = vmatprep.subr.mxu0 0.0
        %3221 = vmatpush2.xpose.msra.mxu0 0.0
        %3222 = vmatprep.subr.mxu0 0.0
        %3223 = vmatpush2.xpose.msra.mxu0 0.0
        %3224 = vmatprep.subr.mxu0 0.0
        %3225 = vmatpush2.xpose.msra.mxu0 0.0
        %3226 = vmatprep.subr.mxu0 0.0
        %3227 = vmatpush2.xpose.msra.mxu0 0.0
        %3228 = vmatprep.mubr.f32.mxu0 0.0
        %3229 = vmatmul.mubr.f32.gmra.mxu0 %v3156
        %v3230 = vpop.f32.mrf.mxu0
        %v3231 = vadd.f32 %v1213, %v3230
        %v3232 = vpop.f32.mrf.mxu0
        %3233 = vmatprep.mubr.f32.mxu0 0.0
        %3234 = vmatmul.mubr.f32.gmra.mxu0 %v3158
        %v3235 = vpop.f32.mrf.mxu0
        %v3236 = vadd.f32 %v1214, %v3235
        %v3237 = vpop.f32.mrf.mxu0
        %3238 = vdwg.mxu0
        %v3239 = vadd.f32 %v2958, %v1217
        %v3240 = vadd.f32 %v2963, %v1218
        %v3241 = vadd.f32 %v3049, %v1219
        %v3242 = vadd.f32 %v3054, %v1220
        %v3243 = vadd.f32 %v3140, %v1221
        %v3244 = vadd.f32 %v3145, %v1222
        %v3245 = vadd.f32 %v3231, %v1223
        %v3246 = vadd.f32 %v3236, %v1224
        %v3247 = vsel %vm1582, %v3239, -inf
        %3248 = vmax.xlane.f32.xlu0 %v3247
        %v3249 = vpop.xlane.xlu0 %3248
        %v3250 = vsel %vm1582, %v3240, -inf
        %3251 = vmax.xlane.f32.xlu0 %v3250
        %v3252 = vpop.xlane.xlu0 %3251
        %v3253 = vsel %vm1582, %v3241, -inf
        %3254 = vmax.xlane.f32.xlu0 %v3253
        %v3255 = vpop.xlane.xlu0 %3254
        %v3256 = vsel %vm1582, %v3242, -inf
        %3257 = vmax.xlane.f32.xlu0 %v3256
        %v3258 = vpop.xlane.xlu0 %3257
        %v3259 = vsel %vm1582, %v3243, -inf
        %3260 = vmax.xlane.f32.xlu0 %v3259
        %v3261 = vpop.xlane.xlu0 %3260
        %v3262 = vsel %vm1582, %v3244, -inf
        %3263 = vmax.xlane.f32.xlu0 %v3262
        %v3264 = vpop.xlane.xlu0 %3263
        %v3265 = vsel %vm1582, %v3245, -inf
        %3266 = vmax.xlane.f32.xlu0 %v3265
        %v3267 = vpop.xlane.xlu0 %3266
        %v3268 = vsel %vm1582, %v3246, -inf
        %3269 = vmax.xlane.f32.xlu0 %v3268
        %v3270 = vpop.xlane.xlu0 %3269
        %v3271 = vsub.f32 %v3239, %v3249
        %v3272 = vsub.f32 %v3240, %v3252
        %v3273 = vsub.f32 %v3241, %v3255
        %v3274 = vsub.f32 %v3242, %v3258
        %v3275 = vsub.f32 %v3243, %v3261
        %v3276 = vsub.f32 %v3244, %v3264
        %v3277 = vsub.f32 %v3245, %v3267
        %v3278 = vsub.f32 %v3246, %v3270
        %v3279 = vmul.f32 %v3271, 1.442695
        %v3280 = vpow.pop %v3279
        %v3281 = vmul.f32 %v3272, 1.442695
        %v3282 = vpow.pop %v3281
        %v3283 = vmul.f32 %v3273, 1.442695
        %v3284 = vpow.pop %v3283
        %v3285 = vmul.f32 %v3274, 1.442695
        %v3286 = vpow.pop %v3285
        %v3287 = vmul.f32 %v3275, 1.442695
        %v3288 = vpow.pop %v3287
        %v3289 = vmul.f32 %v3276, 1.442695
        %v3290 = vpow.pop %v3289
        %v3291 = vmul.f32 %v3277, 1.442695
        %v3292 = vpow.pop %v3291
        %v3293 = vmul.f32 %v3278, 1.442695
        %v3294 = vpow.pop %v3293
        %v3295 = vsel %vm1582, %v3280, 0.0
        %3296 = vadd.xlane.f32.xlu0 %v3295
        %v3297 = vpop.xlane.xlu0 %3296
        %v3298 = vsel %vm1582, %v3282, 0.0
        %3299 = vadd.xlane.f32.xlu0 %v3298
        %v3300 = vpop.xlane.xlu0 %3299
        %v3301 = vsel %vm1582, %v3284, 0.0
        %3302 = vadd.xlane.f32.xlu0 %v3301
        %v3303 = vpop.xlane.xlu0 %3302
        %v3304 = vsel %vm1582, %v3286, 0.0
        %3305 = vadd.xlane.f32.xlu0 %v3304
        %v3306 = vpop.xlane.xlu0 %3305
        %v3307 = vsel %vm1582, %v3288, 0.0
        %3308 = vadd.xlane.f32.xlu0 %v3307
        %v3309 = vpop.xlane.xlu0 %3308
        %v3310 = vsel %vm1582, %v3290, 0.0
        %3311 = vadd.xlane.f32.xlu0 %v3310
        %v3312 = vpop.xlane.xlu0 %3311
        %v3313 = vsel %vm1582, %v3292, 0.0
        %3314 = vadd.xlane.f32.xlu0 %v3313
        %v3315 = vpop.xlane.xlu0 %3314
        %v3316 = vsel %vm1582, %v3294, 0.0
        %3317 = vadd.xlane.f32.xlu0 %v3316
        %v3318 = vpop.xlane.xlu0 %3317
        %v3319 = vrcp.pop %v3297
        %v3320 = vrcp.pop %v3300
        %v3321 = vrcp.pop %v3303
        %v3322 = vrcp.pop %v3306
        %v3323 = vrcp.pop %v3309
        %v3324 = vrcp.pop %v3312
        %v3325 = vrcp.pop %v3315
        %v3326 = vrcp.pop %v3318
        %v3327 = vmul.f32 %v3280, %v3319
        %v3328 = vmul.f32 %v3282, %v3320
        %v3329 = vmul.f32 %v3284, %v3321
        %v3330 = vmul.f32 %v3286, %v3322
        %v3331 = vmul.f32 %v3288, %v3323
        %v3332 = vmul.f32 %v3290, %v3324
        %v3333 = vmul.f32 %v3292, %v3325
        %v3334 = vmul.f32 %v3294, %v3326
        %v3335 = vlaneseq
        %v3336 = vshrl.u32 %v3335, 7
        %v3337 = vsub.s32 6, %v3336
        %v3338 = vrot.slane %v716, %v3337
        %3340 = vrot.lane.b32.xlu0 %v3338, 32
        %v3341 = vpop.permute.xlu0 %3340
        %v3343 = vmul.f32 %v1201, %v3341
        %v3344 = vmul.f32 %v1202, %v3341
        %v3345 = vmul.f32 %v1203, %v3341
        %v3346 = vmul.f32 %v1204, %v3341
        %v3347 = vmul.f32 %v1205, %v3341
        %v3348 = vmul.f32 %v1206, %v3341
        %v3349 = vmul.f32 %v1207, %v3341
        %v3350 = vmul.f32 %v1208, %v3341
        %3353 = vrot.lane.b32.xlu0 %v3343, 96
        %v3354 = vpop.permute.xlu0 %3353
        %3355 = vrot.lane.b32.xlu0 %v3344, 96
        %v3356 = vpop.permute.xlu0 %3355
        %v3360 = vsel %vm1582, %v3327, 0
        %v3363 = vsel %vm1582, %v3328, 0
        %3365 = vmatprep.subr.mxu0 0.0
        %3366 = vmatpush1.msra.mxu0 0.0
        %3367 = vmatprep.subr.mxu0 0.0
        %3368 = vmatpush1.msra.mxu0 0.0
        %3369 = vmatprep.subr.mxu0 0.0
        %3370 = vmatpush1.msra.mxu0 0.0
        %3371 = vmatprep.subr.mxu0 0.0
        %3372 = vmatpush1.msra.mxu0 0.0
        %3373 = vmatprep.subr.mxu0 0.0
        %3374 = vmatpush1.msra.mxu0 0.0
        %3375 = vmatprep.subr.mxu0 0.0
        %3376 = vmatpush1.msra.mxu0 0.0
        %3377 = vmatprep.subr.mxu0 0.0
        %3378 = vmatpush1.msra.mxu0 0.0
        %3379 = vmatprep.subr.mxu0 0.0
        %3380 = vmatpush1.msra.mxu0 0.0
        %3381 = vmatprep.subr.mxu0 0.0
        %3382 = vmatpush1.msra.mxu0 0.0
        %3383 = vmatprep.subr.mxu0 0.0
        %3384 = vmatpush1.msra.mxu0 0.0
        %3385 = vmatprep.subr.mxu0 0.0
        %3386 = vmatpush1.msra.mxu0 0.0
        %3387 = vmatprep.subr.mxu0 0.0
        %3388 = vmatpush1.msra.mxu0 0.0
        %3389 = vmatprep.subr.mxu0 0.0
        %3390 = vmatpush1.msra.mxu0 0.0
        %3391 = vmatprep.subr.mxu0 0.0
        %3392 = vmatpush1.msra.mxu0 0.0
        %3393 = vmatprep.subr.mxu0 0.0
        %3394 = vmatpush1.msra.mxu0 %v3356
        %3395 = vmatprep.subr.mxu0 0.0
        %3396 = vmatpush1.msra.mxu0 %v3354
        %3397 = vmatprep.subr.mxu0 0.0
        %3398 = vmatpush2.msra.mxu0 0.0
        %3399 = vmatprep.subr.mxu0 0.0
        %3400 = vmatpush2.msra.mxu0 0.0
        %3401 = vmatprep.subr.mxu0 0.0
        %3402 = vmatpush2.msra.mxu0 0.0
        %3403 = vmatprep.subr.mxu0 0.0
        %3404 = vmatpush2.msra.mxu0 0.0
        %3405 = vmatprep.subr.mxu0 0.0
        %3406 = vmatpush2.msra.mxu0 0.0
        %3407 = vmatprep.subr.mxu0 0.0
        %3408 = vmatpush2.msra.mxu0 0.0
        %3409 = vmatprep.subr.mxu0 0.0
        %3410 = vmatpush2.msra.mxu0 0.0
        %3411 = vmatprep.subr.mxu0 0.0
        %3412 = vmatpush2.msra.mxu0 0.0
        %3413 = vmatprep.subr.mxu0 0.0
        %3414 = vmatpush2.msra.mxu0 0.0
        %3415 = vmatprep.subr.mxu0 0.0
        %3416 = vmatpush2.msra.mxu0 0.0
        %3417 = vmatprep.subr.mxu0 0.0
        %3418 = vmatpush2.msra.mxu0 0.0
        %3419 = vmatprep.subr.mxu0 0.0
        %3420 = vmatpush2.msra.mxu0 0.0
        %3421 = vmatprep.subr.mxu0 0.0
        %3422 = vmatpush2.msra.mxu0 0.0
        %3423 = vmatprep.subr.mxu0 0.0
        %3424 = vmatpush2.msra.mxu0 0.0
        %3425 = vmatprep.subr.mxu0 0.0
        %3426 = vmatpush2.msra.mxu0 0.0
        %3427 = vmatprep.subr.mxu0 0.0
        %3428 = vmatpush2.msra.mxu0 0.0
        %3429 = vmatprep.mubr.f32.mxu0 0.0
        %3430 = vmatmul.mubr.f32.gmra.mxu0 %v3360
        %v3431 = vpop.f32.mrf.mxu0
        %v3432 = vadd.f32 0.0, %v3431
        %v3433 = vpop.f32.mrf.mxu0
        %3434 = vmatprep.mubr.f32.mxu0 0.0
        %3435 = vmatmul.mubr.f32.gmra.mxu0 %v3363
        %v3436 = vpop.f32.mrf.mxu0
        %v3437 = vadd.f32 0.0, %v3436
        %v3438 = vpop.f32.mrf.mxu0
        %3439 = vdwg.mxu0
        %3442 = vrot.lane.b32.xlu0 %v3345, 96
        %v3443 = vpop.permute.xlu0 %3442
        %3444 = vrot.lane.b32.xlu0 %v3346, 96
        %v3445 = vpop.permute.xlu0 %3444
        %v3449 = vsel %vm1582, %v3329, 0
        %v3452 = vsel %vm1582, %v3330, 0
        %3454 = vmatprep.subr.mxu0 0.0
        %3455 = vmatpush1.msra.mxu0 0.0
        %3456 = vmatprep.subr.mxu0 0.0
        %3457 = vmatpush1.msra.mxu0 0.0
        %3458 = vmatprep.subr.mxu0 0.0
        %3459 = vmatpush1.msra.mxu0 0.0
        %3460 = vmatprep.subr.mxu0 0.0
        %3461 = vmatpush1.msra.mxu0 0.0
        %3462 = vmatprep.subr.mxu0 0.0
        %3463 = vmatpush1.msra.mxu0 0.0
        %3464 = vmatprep.subr.mxu0 0.0
        %3465 = vmatpush1.msra.mxu0 0.0
        %3466 = vmatprep.subr.mxu0 0.0
        %3467 = vmatpush1.msra.mxu0 0.0
        %3468 = vmatprep.subr.mxu0 0.0
        %3469 = vmatpush1.msra.mxu0 0.0
        %3470 = vmatprep.subr.mxu0 0.0
        %3471 = vmatpush1.msra.mxu0 0.0
        %3472 = vmatprep.subr.mxu0 0.0
        %3473 = vmatpush1.msra.mxu0 0.0
        %3474 = vmatprep.subr.mxu0 0.0
        %3475 = vmatpush1.msra.mxu0 0.0
        %3476 = vmatprep.subr.mxu0 0.0
        %3477 = vmatpush1.msra.mxu0 0.0
        %3478 = vmatprep.subr.mxu0 0.0
        %3479 = vmatpush1.msra.mxu0 0.0
        %3480 = vmatprep.subr.mxu0 0.0
        %3481 = vmatpush1.msra.mxu0 0.0
        %3482 = vmatprep.subr.mxu0 0.0
        %3483 = vmatpush1.msra.mxu0 %v3445
        %3484 = vmatprep.subr.mxu0 0.0
        %3485 = vmatpush1.msra.mxu0 %v3443
        %3486 = vmatprep.subr.mxu0 0.0
        %3487 = vmatpush2.msra.mxu0 0.0
        %3488 = vmatprep.subr.mxu0 0.0
        %3489 = vmatpush2.msra.mxu0 0.0
        %3490 = vmatprep.subr.mxu0 0.0
        %3491 = vmatpush2.msra.mxu0 0.0
        %3492 = vmatprep.subr.mxu0 0.0
        %3493 = vmatpush2.msra.mxu0 0.0
        %3494 = vmatprep.subr.mxu0 0.0
        %3495 = vmatpush2.msra.mxu0 0.0
        %3496 = vmatprep.subr.mxu0 0.0
        %3497 = vmatpush2.msra.mxu0 0.0
        %3498 = vmatprep.subr.mxu0 0.0
        %3499 = vmatpush2.msra.mxu0 0.0
        %3500 = vmatprep.subr.mxu0 0.0
        %3501 = vmatpush2.msra.mxu0 0.0
        %3502 = vmatprep.subr.mxu0 0.0
        %3503 = vmatpush2.msra.mxu0 0.0
        %3504 = vmatprep.subr.mxu0 0.0
        %3505 = vmatpush2.msra.mxu0 0.0
        %3506 = vmatprep.subr.mxu0 0.0
        %3507 = vmatpush2.msra.mxu0 0.0
        %3508 = vmatprep.subr.mxu0 0.0
        %3509 = vmatpush2.msra.mxu0 0.0
        %3510 = vmatprep.subr.mxu0 0.0
        %3511 = vmatpush2.msra.mxu0 0.0
        %3512 = vmatprep.subr.mxu0 0.0
        %3513 = vmatpush2.msra.mxu0 0.0
        %3514 = vmatprep.subr.mxu0 0.0
        %3515 = vmatpush2.msra.mxu0 0.0
        %3516 = vmatprep.subr.mxu0 0.0
        %3517 = vmatpush2.msra.mxu0 0.0
        %3518 = vmatprep.mubr.f32.mxu0 0.0
        %3519 = vmatmul.mubr.f32.gmra.mxu0 %v3449
        %v3520 = vpop.f32.mrf.mxu0
        %v3521 = vadd.f32 0.0, %v3520
        %v3522 = vpop.f32.mrf.mxu0
        %3523 = vmatprep.mubr.f32.mxu0 0.0
        %3524 = vmatmul.mubr.f32.gmra.mxu0 %v3452
        %v3525 = vpop.f32.mrf.mxu0
        %v3526 = vadd.f32 0.0, %v3525
        %v3527 = vpop.f32.mrf.mxu0
        %3528 = vdwg.mxu0
        %3531 = vrot.lane.b32.xlu0 %v3347, 96
        %v3532 = vpop.permute.xlu0 %3531
        %3533 = vrot.lane.b32.xlu0 %v3348, 96
        %v3534 = vpop.permute.xlu0 %3533
        %v3538 = vsel %vm1582, %v3331, 0
        %v3541 = vsel %vm1582, %v3332, 0
        %3543 = vmatprep.subr.mxu0 0.0
        %3544 = vmatpush1.msra.mxu0 0.0
        %3545 = vmatprep.subr.mxu0 0.0
        %3546 = vmatpush1.msra.mxu0 0.0
        %3547 = vmatprep.subr.mxu0 0.0
        %3548 = vmatpush1.msra.mxu0 0.0
        %3549 = vmatprep.subr.mxu0 0.0
        %3550 = vmatpush1.msra.mxu0 0.0
        %3551 = vmatprep.subr.mxu0 0.0
        %3552 = vmatpush1.msra.mxu0 0.0
        %3553 = vmatprep.subr.mxu0 0.0
        %3554 = vmatpush1.msra.mxu0 0.0
        %3555 = vmatprep.subr.mxu0 0.0
        %3556 = vmatpush1.msra.mxu0 0.0
        %3557 = vmatprep.subr.mxu0 0.0
        %3558 = vmatpush1.msra.mxu0 0.0
        %3559 = vmatprep.subr.mxu0 0.0
        %3560 = vmatpush1.msra.mxu0 0.0
        %3561 = vmatprep.subr.mxu0 0.0
        %3562 = vmatpush1.msra.mxu0 0.0
        %3563 = vmatprep.subr.mxu0 0.0
        %3564 = vmatpush1.msra.mxu0 0.0
        %3565 = vmatprep.subr.mxu0 0.0
        %3566 = vmatpush1.msra.mxu0 0.0
        %3567 = vmatprep.subr.mxu0 0.0
        %3568 = vmatpush1.msra.mxu0 0.0
        %3569 = vmatprep.subr.mxu0 0.0
        %3570 = vmatpush1.msra.mxu0 0.0
        %3571 = vmatprep.subr.mxu0 0.0
        %3572 = vmatpush1.msra.mxu0 %v3534
        %3573 = vmatprep.subr.mxu0 0.0
        %3574 = vmatpush1.msra.mxu0 %v3532
        %3575 = vmatprep.subr.mxu0 0.0
        %3576 = vmatpush2.msra.mxu0 0.0
        %3577 = vmatprep.subr.mxu0 0.0
        %3578 = vmatpush2.msra.mxu0 0.0
        %3579 = vmatprep.subr.mxu0 0.0
        %3580 = vmatpush2.msra.mxu0 0.0
        %3581 = vmatprep.subr.mxu0 0.0
        %3582 = vmatpush2.msra.mxu0 0.0
        %3583 = vmatprep.subr.mxu0 0.0
        %3584 = vmatpush2.msra.mxu0 0.0
        %3585 = vmatprep.subr.mxu0 0.0
        %3586 = vmatpush2.msra.mxu0 0.0
        %3587 = vmatprep.subr.mxu0 0.0
        %3588 = vmatpush2.msra.mxu0 0.0
        %3589 = vmatprep.subr.mxu0 0.0
        %3590 = vmatpush2.msra.mxu0 0.0
        %3591 = vmatprep.subr.mxu0 0.0
        %3592 = vmatpush2.msra.mxu0 0.0
        %3593 = vmatprep.subr.mxu0 0.0
        %3594 = vmatpush2.msra.mxu0 0.0
        %3595 = vmatprep.subr.mxu0 0.0
        %3596 = vmatpush2.msra.mxu0 0.0
        %3597 = vmatprep.subr.mxu0 0.0
        %3598 = vmatpush2.msra.mxu0 0.0
        %3599 = vmatprep.subr.mxu0 0.0
        %3600 = vmatpush2.msra.mxu0 0.0
        %3601 = vmatprep.subr.mxu0 0.0
        %3602 = vmatpush2.msra.mxu0 0.0
        %3603 = vmatprep.subr.mxu0 0.0
        %3604 = vmatpush2.msra.mxu0 0.0
        %3605 = vmatprep.subr.mxu0 0.0
        %3606 = vmatpush2.msra.mxu0 0.0
        %3607 = vmatprep.mubr.f32.mxu0 0.0
        %3608 = vmatmul.mubr.f32.gmra.mxu0 %v3538
        %v3609 = vpop.f32.mrf.mxu0
        %v3610 = vadd.f32 0.0, %v3609
        %v3611 = vpop.f32.mrf.mxu0
        %3612 = vmatprep.mubr.f32.mxu0 0.0
        %3613 = vmatmul.mubr.f32.gmra.mxu0 %v3541
        %v3614 = vpop.f32.mrf.mxu0
        %v3615 = vadd.f32 0.0, %v3614
        %v3616 = vpop.f32.mrf.mxu0
        %3617 = vdwg.mxu0
        %3620 = vrot.lane.b32.xlu0 %v3349, 96
        %v3621 = vpop.permute.xlu0 %3620
        %3622 = vrot.lane.b32.xlu0 %v3350, 96
        %v3623 = vpop.permute.xlu0 %3622
        %v3627 = vsel %vm1582, %v3333, 0
        %v3630 = vsel %vm1582, %v3334, 0
        %3632 = vmatprep.subr.mxu0 0.0
        %3633 = vmatpush1.msra.mxu0 0.0
        %3634 = vmatprep.subr.mxu0 0.0
        %3635 = vmatpush1.msra.mxu0 0.0
        %3636 = vmatprep.subr.mxu0 0.0
        %3637 = vmatpush1.msra.mxu0 0.0
        %3638 = vmatprep.subr.mxu0 0.0
        %3639 = vmatpush1.msra.mxu0 0.0
        %3640 = vmatprep.subr.mxu0 0.0
        %3641 = vmatpush1.msra.mxu0 0.0
        %3642 = vmatprep.subr.mxu0 0.0
        %3643 = vmatpush1.msra.mxu0 0.0
        %3644 = vmatprep.subr.mxu0 0.0
        %3645 = vmatpush1.msra.mxu0 0.0
        %3646 = vmatprep.subr.mxu0 0.0
        %3647 = vmatpush1.msra.mxu0 0.0
        %3648 = vmatprep.subr.mxu0 0.0
        %3649 = vmatpush1.msra.mxu0 0.0
        %3650 = vmatprep.subr.mxu0 0.0
        %3651 = vmatpush1.msra.mxu0 0.0
        %3652 = vmatprep.subr.mxu0 0.0
        %3653 = vmatpush1.msra.mxu0 0.0
        %3654 = vmatprep.subr.mxu0 0.0
        %3655 = vmatpush1.msra.mxu0 0.0
        %3656 = vmatprep.subr.mxu0 0.0
        %3657 = vmatpush1.msra.mxu0 0.0
        %3658 = vmatprep.subr.mxu0 0.0
        %3659 = vmatpush1.msra.mxu0 0.0
        %3660 = vmatprep.subr.mxu0 0.0
        %3661 = vmatpush1.msra.mxu0 %v3623
        %3662 = vmatprep.subr.mxu0 0.0
        %3663 = vmatpush1.msra.mxu0 %v3621
        %3664 = vmatprep.subr.mxu0 0.0
        %3665 = vmatpush2.msra.mxu0 0.0
        %3666 = vmatprep.subr.mxu0 0.0
        %3667 = vmatpush2.msra.mxu0 0.0
        %3668 = vmatprep.subr.mxu0 0.0
        %3669 = vmatpush2.msra.mxu0 0.0
        %3670 = vmatprep.subr.mxu0 0.0
        %3671 = vmatpush2.msra.mxu0 0.0
        %3672 = vmatprep.subr.mxu0 0.0
        %3673 = vmatpush2.msra.mxu0 0.0
        %3674 = vmatprep.subr.mxu0 0.0
        %3675 = vmatpush2.msra.mxu0 0.0
        %3676 = vmatprep.subr.mxu0 0.0
        %3677 = vmatpush2.msra.mxu0 0.0
        %3678 = vmatprep.subr.mxu0 0.0
        %3679 = vmatpush2.msra.mxu0 0.0
        %3680 = vmatprep.subr.mxu0 0.0
        %3681 = vmatpush2.msra.mxu0 0.0
        %3682 = vmatprep.subr.mxu0 0.0
        %3683 = vmatpush2.msra.mxu0 0.0
        %3684 = vmatprep.subr.mxu0 0.0
        %3685 = vmatpush2.msra.mxu0 0.0
        %3686 = vmatprep.subr.mxu0 0.0
        %3687 = vmatpush2.msra.mxu0 0.0
        %3688 = vmatprep.subr.mxu0 0.0
        %3689 = vmatpush2.msra.mxu0 0.0
        %3690 = vmatprep.subr.mxu0 0.0
        %3691 = vmatpush2.msra.mxu0 0.0
        %3692 = vmatprep.subr.mxu0 0.0
        %3693 = vmatpush2.msra.mxu0 0.0
        %3694 = vmatprep.subr.mxu0 0.0
        %3695 = vmatpush2.msra.mxu0 0.0
        %3696 = vmatprep.mubr.f32.mxu0 0.0
        %3697 = vmatmul.mubr.f32.gmra.mxu0 %v3627
        %v3698 = vpop.f32.mrf.mxu0
        %v3699 = vadd.f32 0.0, %v3698
        %v3700 = vpop.f32.mrf.mxu0
        %3701 = vmatprep.mubr.f32.mxu0 0.0
        %3702 = vmatmul.mubr.f32.gmra.mxu0 %v3630
        %v3703 = vpop.f32.mrf.mxu0
        %v3704 = vadd.f32 0.0, %v3703
        %v3705 = vpop.f32.mrf.mxu0
        %3706 = vdwg.mxu0
        %v3707 = vadd.f32 %v2600, %v3432
        %v3708 = vadd.f32 %v2605, %v3437
        %v3709 = vadd.f32 %v2689, %v3521
        %v3710 = vadd.f32 %v2694, %v3526
        %v3711 = vadd.f32 %v2778, %v3610
        %v3712 = vadd.f32 %v2783, %v3615
        %v3713 = vadd.f32 %v2867, %v3699
        %v3714 = vadd.f32 %v2872, %v3704
        %3715 = vrot.lane.b32.xlu0 %v1076, 104
        %v3716 = vpop.permute.xlu0 %3715
        %3717 = vrot.lane.b32.xlu0 %v1077, 104
        %v3718 = vpop.permute.xlu0 %3717
        %3719 = vrot.lane.b32.xlu0 %v1185, 104
        %v3720 = vpop.permute.xlu0 %3719
        %3721 = vrot.lane.b32.xlu0 %v1186, 104
        %v3722 = vpop.permute.xlu0 %3721
        %v3723 = vsel %vm1225, %v3716, 0
        %v3725 = vsel %vm1225, %v3718, 0
        %v3727 = vsel %vm1225, %v3720, 0
        %v3729 = vsel %vm1225, %v3722, 0
        %3731 = vmatprep.subr.mxu0 0.0
        %3732 = vmatpush1.xpose.msra.mxu0 0.0
        %3733 = vmatprep.subr.mxu0 0.0
        %3734 = vmatpush1.xpose.msra.mxu0 0.0
        %3735 = vmatprep.subr.mxu0 0.0
        %3736 = vmatpush1.xpose.msra.mxu0 0.0
        %3737 = vmatprep.subr.mxu0 0.0
        %3738 = vmatpush1.xpose.msra.mxu0 0.0
        %3739 = vmatprep.subr.mxu0 0.0
        %3740 = vmatpush1.xpose.msra.mxu0 0.0
        %3741 = vmatprep.subr.mxu0 0.0
        %3742 = vmatpush1.xpose.msra.mxu0 0.0
        %3743 = vmatprep.subr.mxu0 0.0
        %3744 = vmatpush1.xpose.msra.mxu0 0.0
        %3745 = vmatprep.subr.mxu0 0.0
        %3746 = vmatpush1.xpose.msra.mxu0 0.0
        %3747 = vmatprep.subr.mxu0 0.0
        %3748 = vmatpush1.xpose.msra.mxu0 0.0
        %3749 = vmatprep.subr.mxu0 0.0
        %3750 = vmatpush1.xpose.msra.mxu0 0.0
        %3751 = vmatprep.subr.mxu0 0.0
        %3752 = vmatpush1.xpose.msra.mxu0 0.0
        %3753 = vmatprep.subr.mxu0 0.0
        %3754 = vmatpush1.xpose.msra.mxu0 0.0
        %3755 = vmatprep.subr.mxu0 0.0
        %3756 = vmatpush1.xpose.msra.mxu0 0.0
        %3757 = vmatprep.subr.mxu0 0.0
        %3758 = vmatpush1.xpose.msra.mxu0 0.0
        %3759 = vmatprep.subr.mxu0 0.0
        %3760 = vmatpush1.xpose.msra.mxu0 %v3729
        %3761 = vmatprep.subr.mxu0 0.0
        %3762 = vmatpush1.xpose.msra.mxu0 %v3727
        %3763 = vmatprep.subr.mxu0 0.0
        %3764 = vmatpush2.xpose.msra.mxu0 0.0
        %3765 = vmatprep.subr.mxu0 0.0
        %3766 = vmatpush2.xpose.msra.mxu0 0.0
        %3767 = vmatprep.subr.mxu0 0.0
        %3768 = vmatpush2.xpose.msra.mxu0 0.0
        %3769 = vmatprep.subr.mxu0 0.0
        %3770 = vmatpush2.xpose.msra.mxu0 0.0
        %3771 = vmatprep.subr.mxu0 0.0
        %3772 = vmatpush2.xpose.msra.mxu0 0.0
        %3773 = vmatprep.subr.mxu0 0.0
        %3774 = vmatpush2.xpose.msra.mxu0 0.0
        %3775 = vmatprep.subr.mxu0 0.0
        %3776 = vmatpush2.xpose.msra.mxu0 0.0
        %3777 = vmatprep.subr.mxu0 0.0
        %3778 = vmatpush2.xpose.msra.mxu0 0.0
        %3779 = vmatprep.subr.mxu0 0.0
        %3780 = vmatpush2.xpose.msra.mxu0 0.0
        %3781 = vmatprep.subr.mxu0 0.0
        %3782 = vmatpush2.xpose.msra.mxu0 0.0
        %3783 = vmatprep.subr.mxu0 0.0
        %3784 = vmatpush2.xpose.msra.mxu0 0.0
        %3785 = vmatprep.subr.mxu0 0.0
        %3786 = vmatpush2.xpose.msra.mxu0 0.0
        %3787 = vmatprep.subr.mxu0 0.0
        %3788 = vmatpush2.xpose.msra.mxu0 0.0
        %3789 = vmatprep.subr.mxu0 0.0
        %3790 = vmatpush2.xpose.msra.mxu0 0.0
        %3791 = vmatprep.subr.mxu0 0.0
        %3792 = vmatpush2.xpose.msra.mxu0 0.0
        %3793 = vmatprep.subr.mxu0 0.0
        %3794 = vmatpush2.xpose.msra.mxu0 0.0
        %3795 = vmatprep.mubr.f32.mxu0 0.0
        %3796 = vmatmul.mubr.f32.gmra.mxu0 %v3723
        %v3797 = vpop.f32.mrf.mxu0
        %v3798 = vadd.f32 %v1215, %v3797
        %v3799 = vpop.f32.mrf.mxu0
        %3800 = vmatprep.mubr.f32.mxu0 0.0
        %3801 = vmatmul.mubr.f32.gmra.mxu0 %v3725
        %v3802 = vpop.f32.mrf.mxu0
        %v3803 = vadd.f32 %v1216, %v3802
        %v3804 = vpop.f32.mrf.mxu0
        %3805 = vdwg.mxu0
        %3806 = vrot.lane.b32.xlu0 %v1078, 104
        %v3807 = vpop.permute.xlu0 %3806
        %3808 = vrot.lane.b32.xlu0 %v1079, 104
        %v3809 = vpop.permute.xlu0 %3808
        %3810 = vrot.lane.b32.xlu0 %v1187, 104
        %v3811 = vpop.permute.xlu0 %3810
        %3812 = vrot.lane.b32.xlu0 %v1188, 104
        %v3813 = vpop.permute.xlu0 %3812
        %v3814 = vsel %vm1225, %v3807, 0
        %v3816 = vsel %vm1225, %v3809, 0
        %v3818 = vsel %vm1225, %v3811, 0
        %v3820 = vsel %vm1225, %v3813, 0
        %3822 = vmatprep.subr.mxu0 0.0
        %3823 = vmatpush1.xpose.msra.mxu0 0.0
        %3824 = vmatprep.subr.mxu0 0.0
        %3825 = vmatpush1.xpose.msra.mxu0 0.0
        %3826 = vmatprep.subr.mxu0 0.0
        %3827 = vmatpush1.xpose.msra.mxu0 0.0
        %3828 = vmatprep.subr.mxu0 0.0
        %3829 = vmatpush1.xpose.msra.mxu0 0.0
        %3830 = vmatprep.subr.mxu0 0.0
        %3831 = vmatpush1.xpose.msra.mxu0 0.0
        %3832 = vmatprep.subr.mxu0 0.0
        %3833 = vmatpush1.xpose.msra.mxu0 0.0
        %3834 = vmatprep.subr.mxu0 0.0
        %3835 = vmatpush1.xpose.msra.mxu0 0.0
        %3836 = vmatprep.subr.mxu0 0.0
        %3837 = vmatpush1.xpose.msra.mxu0 0.0
        %3838 = vmatprep.subr.mxu0 0.0
        %3839 = vmatpush1.xpose.msra.mxu0 0.0
        %3840 = vmatprep.subr.mxu0 0.0
        %3841 = vmatpush1.xpose.msra.mxu0 0.0
        %3842 = vmatprep.subr.mxu0 0.0
        %3843 = vmatpush1.xpose.msra.mxu0 0.0
        %3844 = vmatprep.subr.mxu0 0.0
        %3845 = vmatpush1.xpose.msra.mxu0 0.0
        %3846 = vmatprep.subr.mxu0 0.0
        %3847 = vmatpush1.xpose.msra.mxu0 0.0
        %3848 = vmatprep.subr.mxu0 0.0
        %3849 = vmatpush1.xpose.msra.mxu0 0.0
        %3850 = vmatprep.subr.mxu0 0.0
        %3851 = vmatpush1.xpose.msra.mxu0 %v3820
        %3852 = vmatprep.subr.mxu0 0.0
        %3853 = vmatpush1.xpose.msra.mxu0 %v3818
        %3854 = vmatprep.subr.mxu0 0.0
        %3855 = vmatpush2.xpose.msra.mxu0 0.0
        %3856 = vmatprep.subr.mxu0 0.0
        %3857 = vmatpush2.xpose.msra.mxu0 0.0
        %3858 = vmatprep.subr.mxu0 0.0
        %3859 = vmatpush2.xpose.msra.mxu0 0.0
        %3860 = vmatprep.subr.mxu0 0.0
        %3861 = vmatpush2.xpose.msra.mxu0 0.0
        %3862 = vmatprep.subr.mxu0 0.0
        %3863 = vmatpush2.xpose.msra.mxu0 0.0
        %3864 = vmatprep.subr.mxu0 0.0
        %3865 = vmatpush2.xpose.msra.mxu0 0.0
        %3866 = vmatprep.subr.mxu0 0.0
        %3867 = vmatpush2.xpose.msra.mxu0 0.0
        %3868 = vmatprep.subr.mxu0 0.0
        %3869 = vmatpush2.xpose.msra.mxu0 0.0
        %3870 = vmatprep.subr.mxu0 0.0
        %3871 = vmatpush2.xpose.msra.mxu0 0.0
        %3872 = vmatprep.subr.mxu0 0.0
        %3873 = vmatpush2.xpose.msra.mxu0 0.0
        %3874 = vmatprep.subr.mxu0 0.0
        %3875 = vmatpush2.xpose.msra.mxu0 0.0
        %3876 = vmatprep.subr.mxu0 0.0
        %3877 = vmatpush2.xpose.msra.mxu0 0.0
        %3878 = vmatprep.subr.mxu0 0.0
        %3879 = vmatpush2.xpose.msra.mxu0 0.0
        %3880 = vmatprep.subr.mxu0 0.0
        %3881 = vmatpush2.xpose.msra.mxu0 0.0
        %3882 = vmatprep.subr.mxu0 0.0
        %3883 = vmatpush2.xpose.msra.mxu0 0.0
        %3884 = vmatprep.subr.mxu0 0.0
        %3885 = vmatpush2.xpose.msra.mxu0 0.0
        %3886 = vmatprep.mubr.f32.mxu0 0.0
        %3887 = vmatmul.mubr.f32.gmra.mxu0 %v3814
        %v3888 = vpop.f32.mrf.mxu0
        %v3889 = vadd.f32 %v1215, %v3888
        %v3890 = vpop.f32.mrf.mxu0
        %3891 = vmatprep.mubr.f32.mxu0 0.0
        %3892 = vmatmul.mubr.f32.gmra.mxu0 %v3816
        %v3893 = vpop.f32.mrf.mxu0
        %v3894 = vadd.f32 %v1216, %v3893
        %v3895 = vpop.f32.mrf.mxu0
        %3896 = vdwg.mxu0
        %3897 = vrot.lane.b32.xlu0 %v1080, 104
        %v3898 = vpop.permute.xlu0 %3897
        %3899 = vrot.lane.b32.xlu0 %v1081, 104
        %v3900 = vpop.permute.xlu0 %3899
        %3901 = vrot.lane.b32.xlu0 %v1189, 104
        %v3902 = vpop.permute.xlu0 %3901
        %3903 = vrot.lane.b32.xlu0 %v1190, 104
        %v3904 = vpop.permute.xlu0 %3903
        %v3905 = vsel %vm1225, %v3898, 0
        %v3907 = vsel %vm1225, %v3900, 0
        %v3909 = vsel %vm1225, %v3902, 0
        %v3911 = vsel %vm1225, %v3904, 0
        %3913 = vmatprep.subr.mxu0 0.0
        %3914 = vmatpush1.xpose.msra.mxu0 0.0
        %3915 = vmatprep.subr.mxu0 0.0
        %3916 = vmatpush1.xpose.msra.mxu0 0.0
        %3917 = vmatprep.subr.mxu0 0.0
        %3918 = vmatpush1.xpose.msra.mxu0 0.0
        %3919 = vmatprep.subr.mxu0 0.0
        %3920 = vmatpush1.xpose.msra.mxu0 0.0
        %3921 = vmatprep.subr.mxu0 0.0
        %3922 = vmatpush1.xpose.msra.mxu0 0.0
        %3923 = vmatprep.subr.mxu0 0.0
        %3924 = vmatpush1.xpose.msra.mxu0 0.0
        %3925 = vmatprep.subr.mxu0 0.0
        %3926 = vmatpush1.xpose.msra.mxu0 0.0
        %3927 = vmatprep.subr.mxu0 0.0
        %3928 = vmatpush1.xpose.msra.mxu0 0.0
        %3929 = vmatprep.subr.mxu0 0.0
        %3930 = vmatpush1.xpose.msra.mxu0 0.0
        %3931 = vmatprep.subr.mxu0 0.0
        %3932 = vmatpush1.xpose.msra.mxu0 0.0
        %3933 = vmatprep.subr.mxu0 0.0
        %3934 = vmatpush1.xpose.msra.mxu0 0.0
        %3935 = vmatprep.subr.mxu0 0.0
        %3936 = vmatpush1.xpose.msra.mxu0 0.0
        %3937 = vmatprep.subr.mxu0 0.0
        %3938 = vmatpush1.xpose.msra.mxu0 0.0
        %3939 = vmatprep.subr.mxu0 0.0
        %3940 = vmatpush1.xpose.msra.mxu0 0.0
        %3941 = vmatprep.subr.mxu0 0.0
        %3942 = vmatpush1.xpose.msra.mxu0 %v3911
        %3943 = vmatprep.subr.mxu0 0.0
        %3944 = vmatpush1.xpose.msra.mxu0 %v3909
        %3945 = vmatprep.subr.mxu0 0.0
        %3946 = vmatpush2.xpose.msra.mxu0 0.0
        %3947 = vmatprep.subr.mxu0 0.0
        %3948 = vmatpush2.xpose.msra.mxu0 0.0
        %3949 = vmatprep.subr.mxu0 0.0
        %3950 = vmatpush2.xpose.msra.mxu0 0.0
        %3951 = vmatprep.subr.mxu0 0.0
        %3952 = vmatpush2.xpose.msra.mxu0 0.0
        %3953 = vmatprep.subr.mxu0 0.0
        %3954 = vmatpush2.xpose.msra.mxu0 0.0
        %3955 = vmatprep.subr.mxu0 0.0
        %3956 = vmatpush2.xpose.msra.mxu0 0.0
        %3957 = vmatprep.subr.mxu0 0.0
        %3958 = vmatpush2.xpose.msra.mxu0 0.0
        %3959 = vmatprep.subr.mxu0 0.0
        %3960 = vmatpush2.xpose.msra.mxu0 0.0
        %3961 = vmatprep.subr.mxu0 0.0
        %3962 = vmatpush2.xpose.msra.mxu0 0.0
        %3963 = vmatprep.subr.mxu0 0.0
        %3964 = vmatpush2.xpose.msra.mxu0 0.0
        %3965 = vmatprep.subr.mxu0 0.0
        %3966 = vmatpush2.xpose.msra.mxu0 0.0
        %3967 = vmatprep.subr.mxu0 0.0
        %3968 = vmatpush2.xpose.msra.mxu0 0.0
        %3969 = vmatprep.subr.mxu0 0.0
        %3970 = vmatpush2.xpose.msra.mxu0 0.0
        %3971 = vmatprep.subr.mxu0 0.0
        %3972 = vmatpush2.xpose.msra.mxu0 0.0
        %3973 = vmatprep.subr.mxu0 0.0
        %3974 = vmatpush2.xpose.msra.mxu0 0.0
        %3975 = vmatprep.subr.mxu0 0.0
        %3976 = vmatpush2.xpose.msra.mxu0 0.0
        %3977 = vmatprep.mubr.f32.mxu0 0.0
        %3978 = vmatmul.mubr.f32.gmra.mxu0 %v3905
        %v3979 = vpop.f32.mrf.mxu0
        %v3980 = vadd.f32 %v1215, %v3979
        %v3981 = vpop.f32.mrf.mxu0
        %3982 = vmatprep.mubr.f32.mxu0 0.0
        %3983 = vmatmul.mubr.f32.gmra.mxu0 %v3907
        %v3984 = vpop.f32.mrf.mxu0
        %v3985 = vadd.f32 %v1216, %v3984
        %v3986 = vpop.f32.mrf.mxu0
        %3987 = vdwg.mxu0
        %3988 = vrot.lane.b32.xlu0 %v1082, 104
        %v3989 = vpop.permute.xlu0 %3988
        %3990 = vrot.lane.b32.xlu0 %v1083, 104
        %v3991 = vpop.permute.xlu0 %3990
        %3992 = vrot.lane.b32.xlu0 %v1191, 104
        %v3993 = vpop.permute.xlu0 %3992
        %3994 = vrot.lane.b32.xlu0 %v1192, 104
        %v3995 = vpop.permute.xlu0 %3994
        %v3996 = vsel %vm1225, %v3989, 0
        %v3998 = vsel %vm1225, %v3991, 0
        %v4000 = vsel %vm1225, %v3993, 0
        %v4002 = vsel %vm1225, %v3995, 0
        %4004 = vmatprep.subr.mxu0 0.0
        %4005 = vmatpush1.xpose.msra.mxu0 0.0
        %4006 = vmatprep.subr.mxu0 0.0
        %4007 = vmatpush1.xpose.msra.mxu0 0.0
        %4008 = vmatprep.subr.mxu0 0.0
        %4009 = vmatpush1.xpose.msra.mxu0 0.0
        %4010 = vmatprep.subr.mxu0 0.0
        %4011 = vmatpush1.xpose.msra.mxu0 0.0
        %4012 = vmatprep.subr.mxu0 0.0
        %4013 = vmatpush1.xpose.msra.mxu0 0.0
        %4014 = vmatprep.subr.mxu0 0.0
        %4015 = vmatpush1.xpose.msra.mxu0 0.0
        %4016 = vmatprep.subr.mxu0 0.0
        %4017 = vmatpush1.xpose.msra.mxu0 0.0
        %4018 = vmatprep.subr.mxu0 0.0
        %4019 = vmatpush1.xpose.msra.mxu0 0.0
        %4020 = vmatprep.subr.mxu0 0.0
        %4021 = vmatpush1.xpose.msra.mxu0 0.0
        %4022 = vmatprep.subr.mxu0 0.0
        %4023 = vmatpush1.xpose.msra.mxu0 0.0
        %4024 = vmatprep.subr.mxu0 0.0
        %4025 = vmatpush1.xpose.msra.mxu0 0.0
        %4026 = vmatprep.subr.mxu0 0.0
        %4027 = vmatpush1.xpose.msra.mxu0 0.0
        %4028 = vmatprep.subr.mxu0 0.0
        %4029 = vmatpush1.xpose.msra.mxu0 0.0
        %4030 = vmatprep.subr.mxu0 0.0
        %4031 = vmatpush1.xpose.msra.mxu0 0.0
        %4032 = vmatprep.subr.mxu0 0.0
        %4033 = vmatpush1.xpose.msra.mxu0 %v4002
        %4034 = vmatprep.subr.mxu0 0.0
        %4035 = vmatpush1.xpose.msra.mxu0 %v4000
        %4036 = vmatprep.subr.mxu0 0.0
        %4037 = vmatpush2.xpose.msra.mxu0 0.0
        %4038 = vmatprep.subr.mxu0 0.0
        %4039 = vmatpush2.xpose.msra.mxu0 0.0
        %4040 = vmatprep.subr.mxu0 0.0
        %4041 = vmatpush2.xpose.msra.mxu0 0.0
        %4042 = vmatprep.subr.mxu0 0.0
        %4043 = vmatpush2.xpose.msra.mxu0 0.0
        %4044 = vmatprep.subr.mxu0 0.0
        %4045 = vmatpush2.xpose.msra.mxu0 0.0
        %4046 = vmatprep.subr.mxu0 0.0
        %4047 = vmatpush2.xpose.msra.mxu0 0.0
        %4048 = vmatprep.subr.mxu0 0.0
        %4049 = vmatpush2.xpose.msra.mxu0 0.0
        %4050 = vmatprep.subr.mxu0 0.0
        %4051 = vmatpush2.xpose.msra.mxu0 0.0
        %4052 = vmatprep.subr.mxu0 0.0
        %4053 = vmatpush2.xpose.msra.mxu0 0.0
        %4054 = vmatprep.subr.mxu0 0.0
        %4055 = vmatpush2.xpose.msra.mxu0 0.0
        %4056 = vmatprep.subr.mxu0 0.0
        %4057 = vmatpush2.xpose.msra.mxu0 0.0
        %4058 = vmatprep.subr.mxu0 0.0
        %4059 = vmatpush2.xpose.msra.mxu0 0.0
        %4060 = vmatprep.subr.mxu0 0.0
        %4061 = vmatpush2.xpose.msra.mxu0 0.0
        %4062 = vmatprep.subr.mxu0 0.0
        %4063 = vmatpush2.xpose.msra.mxu0 0.0
        %4064 = vmatprep.subr.mxu0 0.0
        %4065 = vmatpush2.xpose.msra.mxu0 0.0
        %4066 = vmatprep.subr.mxu0 0.0
        %4067 = vmatpush2.xpose.msra.mxu0 0.0
        %4068 = vmatprep.mubr.f32.mxu0 0.0
        %4069 = vmatmul.mubr.f32.gmra.mxu0 %v3996
        %v4070 = vpop.f32.mrf.mxu0
        %v4071 = vadd.f32 %v1215, %v4070
        %v4072 = vpop.f32.mrf.mxu0
        %4073 = vmatprep.mubr.f32.mxu0 0.0
        %4074 = vmatmul.mubr.f32.gmra.mxu0 %v3998
        %v4075 = vpop.f32.mrf.mxu0
        %v4076 = vadd.f32 %v1216, %v4075
        %v4077 = vpop.f32.mrf.mxu0
        %4078 = vdwg.mxu0
        %v4079 = vadd.f32 %v3798, %v1217
        %v4080 = vadd.f32 %v3803, %v1218
        %v4081 = vadd.f32 %v3889, %v1219
        %v4082 = vadd.f32 %v3894, %v1220
        %v4083 = vadd.f32 %v3980, %v1221
        %v4084 = vadd.f32 %v3985, %v1222
        %v4085 = vadd.f32 %v4071, %v1223
        %v4086 = vadd.f32 %v4076, %v1224
        %v4087 = vsel %vm1582, %v4079, -inf
        %4088 = vmax.xlane.f32.xlu0 %v4087
        %v4089 = vpop.xlane.xlu0 %4088
        %v4090 = vsel %vm1582, %v4080, -inf
        %4091 = vmax.xlane.f32.xlu0 %v4090
        %v4092 = vpop.xlane.xlu0 %4091
        %v4093 = vsel %vm1582, %v4081, -inf
        %4094 = vmax.xlane.f32.xlu0 %v4093
        %v4095 = vpop.xlane.xlu0 %4094
        %v4096 = vsel %vm1582, %v4082, -inf
        %4097 = vmax.xlane.f32.xlu0 %v4096
        %v4098 = vpop.xlane.xlu0 %4097
        %v4099 = vsel %vm1582, %v4083, -inf
        %4100 = vmax.xlane.f32.xlu0 %v4099
        %v4101 = vpop.xlane.xlu0 %4100
        %v4102 = vsel %vm1582, %v4084, -inf
        %4103 = vmax.xlane.f32.xlu0 %v4102
        %v4104 = vpop.xlane.xlu0 %4103
        %v4105 = vsel %vm1582, %v4085, -inf
        %4106 = vmax.xlane.f32.xlu0 %v4105
        %v4107 = vpop.xlane.xlu0 %4106
        %v4108 = vsel %vm1582, %v4086, -inf
        %4109 = vmax.xlane.f32.xlu0 %v4108
        %v4110 = vpop.xlane.xlu0 %4109
        %v4111 = vsub.f32 %v4079, %v4089
        %v4112 = vsub.f32 %v4080, %v4092
        %v4113 = vsub.f32 %v4081, %v4095
        %v4114 = vsub.f32 %v4082, %v4098
        %v4115 = vsub.f32 %v4083, %v4101
        %v4116 = vsub.f32 %v4084, %v4104
        %v4117 = vsub.f32 %v4085, %v4107
        %v4118 = vsub.f32 %v4086, %v4110
        %v4119 = vmul.f32 %v4111, 1.442695
        %v4120 = vpow.pop %v4119
        %v4121 = vmul.f32 %v4112, 1.442695
        %v4122 = vpow.pop %v4121
        %v4123 = vmul.f32 %v4113, 1.442695
        %v4124 = vpow.pop %v4123
        %v4125 = vmul.f32 %v4114, 1.442695
        %v4126 = vpow.pop %v4125
        %v4127 = vmul.f32 %v4115, 1.442695
        %v4128 = vpow.pop %v4127
        %v4129 = vmul.f32 %v4116, 1.442695
        %v4130 = vpow.pop %v4129
        %v4131 = vmul.f32 %v4117, 1.442695
        %v4132 = vpow.pop %v4131
        %v4133 = vmul.f32 %v4118, 1.442695
        %v4134 = vpow.pop %v4133
        %v4135 = vsel %vm1582, %v4120, 0.0
        %4136 = vadd.xlane.f32.xlu0 %v4135
        %v4137 = vpop.xlane.xlu0 %4136
        %v4138 = vsel %vm1582, %v4122, 0.0
        %4139 = vadd.xlane.f32.xlu0 %v4138
        %v4140 = vpop.xlane.xlu0 %4139
        %v4141 = vsel %vm1582, %v4124, 0.0
        %4142 = vadd.xlane.f32.xlu0 %v4141
        %v4143 = vpop.xlane.xlu0 %4142
        %v4144 = vsel %vm1582, %v4126, 0.0
        %4145 = vadd.xlane.f32.xlu0 %v4144
        %v4146 = vpop.xlane.xlu0 %4145
        %v4147 = vsel %vm1582, %v4128, 0.0
        %4148 = vadd.xlane.f32.xlu0 %v4147
        %v4149 = vpop.xlane.xlu0 %4148
        %v4150 = vsel %vm1582, %v4130, 0.0
        %4151 = vadd.xlane.f32.xlu0 %v4150
        %v4152 = vpop.xlane.xlu0 %4151
        %v4153 = vsel %vm1582, %v4132, 0.0
        %4154 = vadd.xlane.f32.xlu0 %v4153
        %v4155 = vpop.xlane.xlu0 %4154
        %v4156 = vsel %vm1582, %v4134, 0.0
        %4157 = vadd.xlane.f32.xlu0 %v4156
        %v4158 = vpop.xlane.xlu0 %4157
        %v4159 = vrcp.pop %v4137
        %v4160 = vrcp.pop %v4140
        %v4161 = vrcp.pop %v4143
        %v4162 = vrcp.pop %v4146
        %v4163 = vrcp.pop %v4149
        %v4164 = vrcp.pop %v4152
        %v4165 = vrcp.pop %v4155
        %v4166 = vrcp.pop %v4158
        %v4167 = vmul.f32 %v4120, %v4159
        %v4168 = vmul.f32 %v4122, %v4160
        %v4169 = vmul.f32 %v4124, %v4161
        %v4170 = vmul.f32 %v4126, %v4162
        %v4171 = vmul.f32 %v4128, %v4163
        %v4172 = vmul.f32 %v4130, %v4164
        %v4173 = vmul.f32 %v4132, %v4165
        %v4174 = vmul.f32 %v4134, %v4166
        %v4175 = vlaneseq
        %v4176 = vshrl.u32 %v4175, 7
        %v4177 = vsub.s32 7, %v4176
        %v4178 = vrot.slane %v716, %v4177
        %4180 = vrot.lane.b32.xlu0 %v4178, 32
        %v4181 = vpop.permute.xlu0 %4180
        %v4183 = vmul.f32 %v1201, %v4181
        %v4184 = vmul.f32 %v1202, %v4181
        %v4185 = vmul.f32 %v1203, %v4181
        %v4186 = vmul.f32 %v1204, %v4181
        %v4187 = vmul.f32 %v1205, %v4181
        %v4188 = vmul.f32 %v1206, %v4181
        %v4189 = vmul.f32 %v1207, %v4181
        %v4190 = vmul.f32 %v1208, %v4181
        %4193 = vrot.lane.b32.xlu0 %v4183, 96
        %v4194 = vpop.permute.xlu0 %4193
        %4195 = vrot.lane.b32.xlu0 %v4184, 96
        %v4196 = vpop.permute.xlu0 %4195
        %v4200 = vsel %vm1582, %v4167, 0
        %v4203 = vsel %vm1582, %v4168, 0
        %4205 = vmatprep.subr.mxu0 0.0
        %4206 = vmatpush1.msra.mxu0 0.0
        %4207 = vmatprep.subr.mxu0 0.0
        %4208 = vmatpush1.msra.mxu0 0.0
        %4209 = vmatprep.subr.mxu0 0.0
        %4210 = vmatpush1.msra.mxu0 0.0
        %4211 = vmatprep.subr.mxu0 0.0
        %4212 = vmatpush1.msra.mxu0 0.0
        %4213 = vmatprep.subr.mxu0 0.0
        %4214 = vmatpush1.msra.mxu0 0.0
        %4215 = vmatprep.subr.mxu0 0.0
        %4216 = vmatpush1.msra.mxu0 0.0
        %4217 = vmatprep.subr.mxu0 0.0
        %4218 = vmatpush1.msra.mxu0 0.0
        %4219 = vmatprep.subr.mxu0 0.0
        %4220 = vmatpush1.msra.mxu0 0.0
        %4221 = vmatprep.subr.mxu0 0.0
        %4222 = vmatpush1.msra.mxu0 0.0
        %4223 = vmatprep.subr.mxu0 0.0
        %4224 = vmatpush1.msra.mxu0 0.0
        %4225 = vmatprep.subr.mxu0 0.0
        %4226 = vmatpush1.msra.mxu0 0.0
        %4227 = vmatprep.subr.mxu0 0.0
        %4228 = vmatpush1.msra.mxu0 0.0
        %4229 = vmatprep.subr.mxu0 0.0
        %4230 = vmatpush1.msra.mxu0 0.0
        %4231 = vmatprep.subr.mxu0 0.0
        %4232 = vmatpush1.msra.mxu0 0.0
        %4233 = vmatprep.subr.mxu0 0.0
        %4234 = vmatpush1.msra.mxu0 %v4196
        %4235 = vmatprep.subr.mxu0 0.0
        %4236 = vmatpush1.msra.mxu0 %v4194
        %4237 = vmatprep.subr.mxu0 0.0
        %4238 = vmatpush2.msra.mxu0 0.0
        %4239 = vmatprep.subr.mxu0 0.0
        %4240 = vmatpush2.msra.mxu0 0.0
        %4241 = vmatprep.subr.mxu0 0.0
        %4242 = vmatpush2.msra.mxu0 0.0
        %4243 = vmatprep.subr.mxu0 0.0
        %4244 = vmatpush2.msra.mxu0 0.0
        %4245 = vmatprep.subr.mxu0 0.0
        %4246 = vmatpush2.msra.mxu0 0.0
        %4247 = vmatprep.subr.mxu0 0.0
        %4248 = vmatpush2.msra.mxu0 0.0
        %4249 = vmatprep.subr.mxu0 0.0
        %4250 = vmatpush2.msra.mxu0 0.0
        %4251 = vmatprep.subr.mxu0 0.0
        %4252 = vmatpush2.msra.mxu0 0.0
        %4253 = vmatprep.subr.mxu0 0.0
        %4254 = vmatpush2.msra.mxu0 0.0
        %4255 = vmatprep.subr.mxu0 0.0
        %4256 = vmatpush2.msra.mxu0 0.0
        %4257 = vmatprep.subr.mxu0 0.0
        %4258 = vmatpush2.msra.mxu0 0.0
        %4259 = vmatprep.subr.mxu0 0.0
        %4260 = vmatpush2.msra.mxu0 0.0
        %4261 = vmatprep.subr.mxu0 0.0
        %4262 = vmatpush2.msra.mxu0 0.0
        %4263 = vmatprep.subr.mxu0 0.0
        %4264 = vmatpush2.msra.mxu0 0.0
        %4265 = vmatprep.subr.mxu0 0.0
        %4266 = vmatpush2.msra.mxu0 0.0
        %4267 = vmatprep.subr.mxu0 0.0
        %4268 = vmatpush2.msra.mxu0 0.0
        %4269 = vmatprep.mubr.f32.mxu0 0.0
        %4270 = vmatmul.mubr.f32.gmra.mxu0 %v4200
        %v4271 = vpop.f32.mrf.mxu0
        %v4272 = vadd.f32 0.0, %v4271
        %v4273 = vpop.f32.mrf.mxu0
        %4274 = vmatprep.mubr.f32.mxu0 0.0
        %4275 = vmatmul.mubr.f32.gmra.mxu0 %v4203
        %v4276 = vpop.f32.mrf.mxu0
        %v4277 = vadd.f32 0.0, %v4276
        %v4278 = vpop.f32.mrf.mxu0
        %4279 = vdwg.mxu0
        %4282 = vrot.lane.b32.xlu0 %v4185, 96
        %v4283 = vpop.permute.xlu0 %4282
        %4284 = vrot.lane.b32.xlu0 %v4186, 96
        %v4285 = vpop.permute.xlu0 %4284
        %v4289 = vsel %vm1582, %v4169, 0
        %v4292 = vsel %vm1582, %v4170, 0
        %4294 = vmatprep.subr.mxu0 0.0
        %4295 = vmatpush1.msra.mxu0 0.0
        %4296 = vmatprep.subr.mxu0 0.0
        %4297 = vmatpush1.msra.mxu0 0.0
        %4298 = vmatprep.subr.mxu0 0.0
        %4299 = vmatpush1.msra.mxu0 0.0
        %4300 = vmatprep.subr.mxu0 0.0
        %4301 = vmatpush1.msra.mxu0 0.0
        %4302 = vmatprep.subr.mxu0 0.0
        %4303 = vmatpush1.msra.mxu0 0.0
        %4304 = vmatprep.subr.mxu0 0.0
        %4305 = vmatpush1.msra.mxu0 0.0
        %4306 = vmatprep.subr.mxu0 0.0
        %4307 = vmatpush1.msra.mxu0 0.0
        %4308 = vmatprep.subr.mxu0 0.0
        %4309 = vmatpush1.msra.mxu0 0.0
        %4310 = vmatprep.subr.mxu0 0.0
        %4311 = vmatpush1.msra.mxu0 0.0
        %4312 = vmatprep.subr.mxu0 0.0
        %4313 = vmatpush1.msra.mxu0 0.0
        %4314 = vmatprep.subr.mxu0 0.0
        %4315 = vmatpush1.msra.mxu0 0.0
        %4316 = vmatprep.subr.mxu0 0.0
        %4317 = vmatpush1.msra.mxu0 0.0
        %4318 = vmatprep.subr.mxu0 0.0
        %4319 = vmatpush1.msra.mxu0 0.0
        %4320 = vmatprep.subr.mxu0 0.0
        %4321 = vmatpush1.msra.mxu0 0.0
        %4322 = vmatprep.subr.mxu0 0.0
        %4323 = vmatpush1.msra.mxu0 %v4285
        %4324 = vmatprep.subr.mxu0 0.0
        %4325 = vmatpush1.msra.mxu0 %v4283
        %4326 = vmatprep.subr.mxu0 0.0
        %4327 = vmatpush2.msra.mxu0 0.0
        %4328 = vmatprep.subr.mxu0 0.0
        %4329 = vmatpush2.msra.mxu0 0.0
        %4330 = vmatprep.subr.mxu0 0.0
        %4331 = vmatpush2.msra.mxu0 0.0
        %4332 = vmatprep.subr.mxu0 0.0
        %4333 = vmatpush2.msra.mxu0 0.0
        %4334 = vmatprep.subr.mxu0 0.0
        %4335 = vmatpush2.msra.mxu0 0.0
        %4336 = vmatprep.subr.mxu0 0.0
        %4337 = vmatpush2.msra.mxu0 0.0
        %4338 = vmatprep.subr.mxu0 0.0
        %4339 = vmatpush2.msra.mxu0 0.0
        %4340 = vmatprep.subr.mxu0 0.0
        %4341 = vmatpush2.msra.mxu0 0.0
        %4342 = vmatprep.subr.mxu0 0.0
        %4343 = vmatpush2.msra.mxu0 0.0
        %4344 = vmatprep.subr.mxu0 0.0
        %4345 = vmatpush2.msra.mxu0 0.0
        %4346 = vmatprep.subr.mxu0 0.0
        %4347 = vmatpush2.msra.mxu0 0.0
        %4348 = vmatprep.subr.mxu0 0.0
        %4349 = vmatpush2.msra.mxu0 0.0
        %4350 = vmatprep.subr.mxu0 0.0
        %4351 = vmatpush2.msra.mxu0 0.0
        %4352 = vmatprep.subr.mxu0 0.0
        %4353 = vmatpush2.msra.mxu0 0.0
        %4354 = vmatprep.subr.mxu0 0.0
        %4355 = vmatpush2.msra.mxu0 0.0
        %4356 = vmatprep.subr.mxu0 0.0
        %4357 = vmatpush2.msra.mxu0 0.0
        %4358 = vmatprep.mubr.f32.mxu0 0.0
        %4359 = vmatmul.mubr.f32.gmra.mxu0 %v4289
        %v4360 = vpop.f32.mrf.mxu0
        %v4361 = vadd.f32 0.0, %v4360
        %v4362 = vpop.f32.mrf.mxu0
        %4363 = vmatprep.mubr.f32.mxu0 0.0
        %4364 = vmatmul.mubr.f32.gmra.mxu0 %v4292
        %v4365 = vpop.f32.mrf.mxu0
        %v4366 = vadd.f32 0.0, %v4365
        %v4367 = vpop.f32.mrf.mxu0
        %4368 = vdwg.mxu0
        %4371 = vrot.lane.b32.xlu0 %v4187, 96
        %v4372 = vpop.permute.xlu0 %4371
        %4373 = vrot.lane.b32.xlu0 %v4188, 96
        %v4374 = vpop.permute.xlu0 %4373
        %v4378 = vsel %vm1582, %v4171, 0
        %v4381 = vsel %vm1582, %v4172, 0
        %4383 = vmatprep.subr.mxu0 0.0
        %4384 = vmatpush1.msra.mxu0 0.0
        %4385 = vmatprep.subr.mxu0 0.0
        %4386 = vmatpush1.msra.mxu0 0.0
        %4387 = vmatprep.subr.mxu0 0.0
        %4388 = vmatpush1.msra.mxu0 0.0
        %4389 = vmatprep.subr.mxu0 0.0
        %4390 = vmatpush1.msra.mxu0 0.0
        %4391 = vmatprep.subr.mxu0 0.0
        %4392 = vmatpush1.msra.mxu0 0.0
        %4393 = vmatprep.subr.mxu0 0.0
        %4394 = vmatpush1.msra.mxu0 0.0
        %4395 = vmatprep.subr.mxu0 0.0
        %4396 = vmatpush1.msra.mxu0 0.0
        %4397 = vmatprep.subr.mxu0 0.0
        %4398 = vmatpush1.msra.mxu0 0.0
        %4399 = vmatprep.subr.mxu0 0.0
        %4400 = vmatpush1.msra.mxu0 0.0
        %4401 = vmatprep.subr.mxu0 0.0
        %4402 = vmatpush1.msra.mxu0 0.0
        %4403 = vmatprep.subr.mxu0 0.0
        %4404 = vmatpush1.msra.mxu0 0.0
        %4405 = vmatprep.subr.mxu0 0.0
        %4406 = vmatpush1.msra.mxu0 0.0
        %4407 = vmatprep.subr.mxu0 0.0
        %4408 = vmatpush1.msra.mxu0 0.0
        %4409 = vmatprep.subr.mxu0 0.0
        %4410 = vmatpush1.msra.mxu0 0.0
        %4411 = vmatprep.subr.mxu0 0.0
        %4412 = vmatpush1.msra.mxu0 %v4374
        %4413 = vmatprep.subr.mxu0 0.0
        %4414 = vmatpush1.msra.mxu0 %v4372
        %4415 = vmatprep.subr.mxu0 0.0
        %4416 = vmatpush2.msra.mxu0 0.0
        %4417 = vmatprep.subr.mxu0 0.0
        %4418 = vmatpush2.msra.mxu0 0.0
        %4419 = vmatprep.subr.mxu0 0.0
        %4420 = vmatpush2.msra.mxu0 0.0
        %4421 = vmatprep.subr.mxu0 0.0
        %4422 = vmatpush2.msra.mxu0 0.0
        %4423 = vmatprep.subr.mxu0 0.0
        %4424 = vmatpush2.msra.mxu0 0.0
        %4425 = vmatprep.subr.mxu0 0.0
        %4426 = vmatpush2.msra.mxu0 0.0
        %4427 = vmatprep.subr.mxu0 0.0
        %4428 = vmatpush2.msra.mxu0 0.0
        %4429 = vmatprep.subr.mxu0 0.0
        %4430 = vmatpush2.msra.mxu0 0.0
        %4431 = vmatprep.subr.mxu0 0.0
        %4432 = vmatpush2.msra.mxu0 0.0
        %4433 = vmatprep.subr.mxu0 0.0
        %4434 = vmatpush2.msra.mxu0 0.0
        %4435 = vmatprep.subr.mxu0 0.0
        %4436 = vmatpush2.msra.mxu0 0.0
        %4437 = vmatprep.subr.mxu0 0.0
        %4438 = vmatpush2.msra.mxu0 0.0
        %4439 = vmatprep.subr.mxu0 0.0
        %4440 = vmatpush2.msra.mxu0 0.0
        %4441 = vmatprep.subr.mxu0 0.0
        %4442 = vmatpush2.msra.mxu0 0.0
        %4443 = vmatprep.subr.mxu0 0.0
        %4444 = vmatpush2.msra.mxu0 0.0
        %4445 = vmatprep.subr.mxu0 0.0
        %4446 = vmatpush2.msra.mxu0 0.0
        %4447 = vmatprep.mubr.f32.mxu0 0.0
        %4448 = vmatmul.mubr.f32.gmra.mxu0 %v4378
        %v4449 = vpop.f32.mrf.mxu0
        %v4450 = vadd.f32 0.0, %v4449
        %v4451 = vpop.f32.mrf.mxu0
        %4452 = vmatprep.mubr.f32.mxu0 0.0
        %4453 = vmatmul.mubr.f32.gmra.mxu0 %v4381
        %v4454 = vpop.f32.mrf.mxu0
        %v4455 = vadd.f32 0.0, %v4454
        %v4456 = vpop.f32.mrf.mxu0
        %4457 = vdwg.mxu0
        %4460 = vrot.lane.b32.xlu0 %v4189, 96
        %v4461 = vpop.permute.xlu0 %4460
        %4462 = vrot.lane.b32.xlu0 %v4190, 96
        %v4463 = vpop.permute.xlu0 %4462
        %v4467 = vsel %vm1582, %v4173, 0
        %v4470 = vsel %vm1582, %v4174, 0
        %4472 = vmatprep.subr.mxu0 0.0
        %4473 = vmatpush1.msra.mxu0 0.0
        %4474 = vmatprep.subr.mxu0 0.0
        %4475 = vmatpush1.msra.mxu0 0.0
        %4476 = vmatprep.subr.mxu0 0.0
        %4477 = vmatpush1.msra.mxu0 0.0
        %4478 = vmatprep.subr.mxu0 0.0
        %4479 = vmatpush1.msra.mxu0 0.0
        %4480 = vmatprep.subr.mxu0 0.0
        %4481 = vmatpush1.msra.mxu0 0.0
        %4482 = vmatprep.subr.mxu0 0.0
        %4483 = vmatpush1.msra.mxu0 0.0
        %4484 = vmatprep.subr.mxu0 0.0
        %4485 = vmatpush1.msra.mxu0 0.0
        %4486 = vmatprep.subr.mxu0 0.0
        %4487 = vmatpush1.msra.mxu0 0.0
        %4488 = vmatprep.subr.mxu0 0.0
        %4489 = vmatpush1.msra.mxu0 0.0
        %4490 = vmatprep.subr.mxu0 0.0
        %4491 = vmatpush1.msra.mxu0 0.0
        %4492 = vmatprep.subr.mxu0 0.0
        %4493 = vmatpush1.msra.mxu0 0.0
        %4494 = vmatprep.subr.mxu0 0.0
        %4495 = vmatpush1.msra.mxu0 0.0
        %4496 = vmatprep.subr.mxu0 0.0
        %4497 = vmatpush1.msra.mxu0 0.0
        %4498 = vmatprep.subr.mxu0 0.0
        %4499 = vmatpush1.msra.mxu0 0.0
        %4500 = vmatprep.subr.mxu0 0.0
        %4501 = vmatpush1.msra.mxu0 %v4463
        %4502 = vmatprep.subr.mxu0 0.0
        %4503 = vmatpush1.msra.mxu0 %v4461
        %4504 = vmatprep.subr.mxu0 0.0
        %4505 = vmatpush2.msra.mxu0 0.0
        %4506 = vmatprep.subr.mxu0 0.0
        %4507 = vmatpush2.msra.mxu0 0.0
        %4508 = vmatprep.subr.mxu0 0.0
        %4509 = vmatpush2.msra.mxu0 0.0
        %4510 = vmatprep.subr.mxu0 0.0
        %4511 = vmatpush2.msra.mxu0 0.0
        %4512 = vmatprep.subr.mxu0 0.0
        %4513 = vmatpush2.msra.mxu0 0.0
        %4514 = vmatprep.subr.mxu0 0.0
        %4515 = vmatpush2.msra.mxu0 0.0
        %4516 = vmatprep.subr.mxu0 0.0
        %4517 = vmatpush2.msra.mxu0 0.0
        %4518 = vmatprep.subr.mxu0 0.0
        %4519 = vmatpush2.msra.mxu0 0.0
        %4520 = vmatprep.subr.mxu0 0.0
        %4521 = vmatpush2.msra.mxu0 0.0
        %4522 = vmatprep.subr.mxu0 0.0
        %4523 = vmatpush2.msra.mxu0 0.0
        %4524 = vmatprep.subr.mxu0 0.0
        %4525 = vmatpush2.msra.mxu0 0.0
        %4526 = vmatprep.subr.mxu0 0.0
        %4527 = vmatpush2.msra.mxu0 0.0
        %4528 = vmatprep.subr.mxu0 0.0
        %4529 = vmatpush2.msra.mxu0 0.0
        %4530 = vmatprep.subr.mxu0 0.0
        %4531 = vmatpush2.msra.mxu0 0.0
        %4532 = vmatprep.subr.mxu0 0.0
        %4533 = vmatpush2.msra.mxu0 0.0
        %4534 = vmatprep.subr.mxu0 0.0
        %4535 = vmatpush2.msra.mxu0 0.0
        %4536 = vmatprep.mubr.f32.mxu0 0.0
        %4537 = vmatmul.mubr.f32.gmra.mxu0 %v4467
        %v4538 = vpop.f32.mrf.mxu0
        %v4539 = vadd.f32 0.0, %v4538
        %v4540 = vpop.f32.mrf.mxu0
        %4541 = vmatprep.mubr.f32.mxu0 0.0
        %4542 = vmatmul.mubr.f32.gmra.mxu0 %v4470
        %v4543 = vpop.f32.mrf.mxu0
        %v4544 = vadd.f32 0.0, %v4543
        %v4545 = vpop.f32.mrf.mxu0
        %4546 = vdwg.mxu0
        %v4547 = vadd.f32 %v3707, %v4272
        %v4548 = vadd.f32 %v3708, %v4277
        %v4549 = vadd.f32 %v3709, %v4361
        %v4550 = vadd.f32 %v3710, %v4366
        %v4551 = vadd.f32 %v3711, %v4450
        %v4552 = vadd.f32 %v3712, %v4455
        %v4553 = vadd.f32 %v3713, %v4539
        %v4554 = vadd.f32 %v3714, %v4544
        %v4555 = vpack.c.bf16 %v4548, %v4547
        %v4556 = vpack.c.bf16 %v4550, %v4549
        %v4557 = vpack.c.bf16 %v4552, %v4551
        %v4558 = vpack.c.bf16 %v4554, %v4553
        %v4559 = vld [vmem:[%s570] sm:$0xf]
        %v4560 = vld [vmem:[%s570 + $0x4] sm:$0xf]
        %v4561 = vld [vmem:[%s570 + $0x8] sm:$0xf]
        %v4562 = vld [vmem:[%s570 + $0xc] sm:$0xf]
        %v4563 = vlaneseq
        %v4564 = vshrl.u32 %v4563, 7
        %v4565 = vsub.s32 7, %v4564
        %v4566 = vrot.slane %v715, %v4565
        %v4571 = vunpack.c.l.b16 %v4559
        %v4572 = vunpack.c.l.b16 %v4560
        %v4573 = vunpack.c.l.b16 %v4561
        %v4574 = vunpack.c.l.b16 %v4562
        %v4575 = vpack.c.b16 %v4572, %v4571
        %v4576 = vpack.c.b16 %v4574, %v4573
        %v4580 = vsel %vm717, %v4555, 0
        %v4583 = vsel %vm717, %v4556, 0
        %v4586 = vsel %vm717, %v4557, 0
        %v4589 = vsel %vm717, %v4558, 0
        %4591 = vmatprep.subr.bf16.mxu0 0
        %4592 = vmatpush1.bf16.msra.mxu0 0
        %4593 = vmatprep.subr.bf16.mxu0 0
        %4594 = vmatpush1.bf16.msra.mxu0 0
        %4595 = vmatprep.subr.bf16.mxu0 0
        %4596 = vmatpush1.bf16.msra.mxu0 0
        %4597 = vmatprep.subr.bf16.mxu0 0
        %4598 = vmatpush1.bf16.msra.mxu0 0
        %4599 = vmatprep.subr.bf16.mxu0 0
        %4600 = vmatpush1.bf16.msra.mxu0 0
        %4601 = vmatprep.subr.bf16.mxu0 0
        %4602 = vmatpush1.bf16.msra.mxu0 0
        %4603 = vmatprep.subr.bf16.mxu0 0
        %4604 = vmatpush1.bf16.msra.mxu0 %v4576
        %4605 = vmatprep.subr.bf16.mxu0 0
        %4606 = vmatpush1.bf16.msra.mxu0 %v4575
        %4607 = vmatprep.subr.bf16.mxu0 0
        %4608 = vmatpush2.bf16.msra.mxu0 0
        %4609 = vmatprep.subr.bf16.mxu0 0
        %4610 = vmatpush2.bf16.msra.mxu0 0
        %4611 = vmatprep.subr.bf16.mxu0 0
        %4612 = vmatpush2.bf16.msra.mxu0 0
        %4613 = vmatprep.subr.bf16.mxu0 0
        %4614 = vmatpush2.bf16.msra.mxu0 0
        %4615 = vmatprep.subr.bf16.mxu0 0
        %4616 = vmatpush2.bf16.msra.mxu0 0
        %4617 = vmatprep.subr.bf16.mxu0 0
        %4618 = vmatpush2.bf16.msra.mxu0 0
        %4619 = vmatprep.subr.bf16.mxu0 0
        %4620 = vmatpush2.bf16.msra.mxu0 0
        %4621 = vmatprep.subr.bf16.mxu0 0
        %4622 = vmatpush2.bf16.msra.mxu0 0
        %4623 = vmatprep.mubr.bf16.mxu0 0
        %4624 = vmatmul.mubr.bf16.gmra.mxu0 %v4580
        %v4625 = vpop.f32.mrf.mxu0
        %v4626 = vadd.f32 %v4566, %v4625
        %v4627 = vpop.f32.mrf.mxu0
        %v4628 = vpop.f32.mrf.mxu0
        %v4629 = vadd.f32 %v4566, %v4628
        %v4630 = vpop.f32.mrf.mxu0
        %4631 = vmatprep.mubr.bf16.mxu0 0
        %4632 = vmatmul.mubr.bf16.gmra.mxu0 %v4583
        %v4633 = vpop.f32.mrf.mxu0
        %v4634 = vadd.f32 %v4566, %v4633
        %v4635 = vpop.f32.mrf.mxu0
        %v4636 = vpop.f32.mrf.mxu0
        %v4637 = vadd.f32 %v4566, %v4636
        %v4638 = vpop.f32.mrf.mxu0
        %4639 = vmatprep.mubr.bf16.mxu0 0
        %4640 = vmatmul.mubr.bf16.gmra.mxu0 %v4586
        %v4641 = vpop.f32.mrf.mxu0
        %v4642 = vadd.f32 %v4566, %v4641
        %v4643 = vpop.f32.mrf.mxu0
        %v4644 = vpop.f32.mrf.mxu0
        %v4645 = vadd.f32 %v4566, %v4644
        %v4646 = vpop.f32.mrf.mxu0
        %4647 = vmatprep.mubr.bf16.mxu0 0
        %4648 = vmatmul.mubr.bf16.gmra.mxu0 %v4589
        %v4649 = vpop.f32.mrf.mxu0
        %v4650 = vadd.f32 %v4566, %v4649
        %v4651 = vpop.f32.mrf.mxu0
        %v4652 = vpop.f32.mrf.mxu0
        %v4653 = vadd.f32 %v4566, %v4652
        %v4654 = vpop.f32.mrf.mxu0
        %4655 = vdwg.mxu0
        %v4656 = vadd.f32 %v699, %v4626
        %v4657 = vadd.f32 %v700, %v4629
        %v4658 = vadd.f32 %v701, %v4634
        %v4659 = vadd.f32 %v702, %v4637
        %v4660 = vadd.f32 %v703, %v4642
        %v4661 = vadd.f32 %v704, %v4645
        %v4662 = vadd.f32 %v705, %v4650
        %v4663 = vadd.f32 %v706, %v4653
        %v4664 = vsel %vm717, %v4656, 0.0
        %4665 = vadd.xlane.f32.xlu0 %v4664
        %v4666 = vpop.xlane.xlu0 %4665
        %v4667 = vsel %vm717, %v4657, 0.0
        %4668 = vadd.xlane.f32.xlu0 %v4667
        %v4669 = vpop.xlane.xlu0 %4668
        %v4670 = vsel %vm717, %v4658, 0.0
        %4671 = vadd.xlane.f32.xlu0 %v4670
        %v4672 = vpop.xlane.xlu0 %4671
        %v4673 = vsel %vm717, %v4659, 0.0
        %4674 = vadd.xlane.f32.xlu0 %v4673
        %v4675 = vpop.xlane.xlu0 %4674
        %v4676 = vsel %vm717, %v4660, 0.0
        %4677 = vadd.xlane.f32.xlu0 %v4676
        %v4678 = vpop.xlane.xlu0 %4677
        %v4679 = vsel %vm717, %v4661, 0.0
        %4680 = vadd.xlane.f32.xlu0 %v4679
        %v4681 = vpop.xlane.xlu0 %4680
        %v4682 = vsel %vm717, %v4662, 0.0
        %4683 = vadd.xlane.f32.xlu0 %v4682
        %v4684 = vpop.xlane.xlu0 %4683
        %v4685 = vsel %vm717, %v4663, 0.0
        %4686 = vadd.xlane.f32.xlu0 %v4685
        %v4687 = vpop.xlane.xlu0 %4686
        %v4688 = vmul.f32 %v4666, %v742
        %v4689 = vmul.f32 %v4669, %v742
        %v4690 = vmul.f32 %v4672, %v742
        %v4691 = vmul.f32 %v4675, %v742
        %v4692 = vmul.f32 %v4678, %v742
        %v4693 = vmul.f32 %v4681, %v742
        %v4694 = vmul.f32 %v4684, %v742
        %v4695 = vmul.f32 %v4687, %v742
        %v4696 = vsub.f32 %v4656, %v4688
        %v4697 = vsub.f32 %v4657, %v4689
        %v4698 = vsub.f32 %v4658, %v4690
        %v4699 = vsub.f32 %v4659, %v4691
        %v4700 = vsub.f32 %v4660, %v4692
        %v4701 = vsub.f32 %v4661, %v4693
        %v4702 = vsub.f32 %v4662, %v4694
        %v4703 = vsub.f32 %v4663, %v4695
        %v4704 = vmul.f32 %v4696, %v4696
        %v4705 = vmul.f32 %v4697, %v4697
        %v4706 = vmul.f32 %v4698, %v4698
        %v4707 = vmul.f32 %v4699, %v4699
        %v4708 = vmul.f32 %v4700, %v4700
        %v4709 = vmul.f32 %v4701, %v4701
        %v4710 = vmul.f32 %v4702, %v4702
        %v4711 = vmul.f32 %v4703, %v4703
        %v4712 = vsel %vm717, %v4704, 0.0
        %4713 = vadd.xlane.f32.xlu0 %v4712
        %v4714 = vpop.xlane.xlu0 %4713
        %v4715 = vsel %vm717, %v4705, 0.0
        %4716 = vadd.xlane.f32.xlu0 %v4715
        %v4717 = vpop.xlane.xlu0 %4716
        %v4718 = vsel %vm717, %v4706, 0.0
        %4719 = vadd.xlane.f32.xlu0 %v4718
        %v4720 = vpop.xlane.xlu0 %4719
        %v4721 = vsel %vm717, %v4707, 0.0
        %4722 = vadd.xlane.f32.xlu0 %v4721
        %v4723 = vpop.xlane.xlu0 %4722
        %v4724 = vsel %vm717, %v4708, 0.0
        %4725 = vadd.xlane.f32.xlu0 %v4724
        %v4726 = vpop.xlane.xlu0 %4725
        %v4727 = vsel %vm717, %v4709, 0.0
        %4728 = vadd.xlane.f32.xlu0 %v4727
        %v4729 = vpop.xlane.xlu0 %4728
        %v4730 = vsel %vm717, %v4710, 0.0
        %4731 = vadd.xlane.f32.xlu0 %v4730
        %v4732 = vpop.xlane.xlu0 %4731
        %v4733 = vsel %vm717, %v4711, 0.0
        %4734 = vadd.xlane.f32.xlu0 %v4733
        %v4735 = vpop.xlane.xlu0 %4734
        %v4736 = vmul.f32 %v4714, %v742
        %v4737 = vmul.f32 %v4717, %v742
        %v4738 = vmul.f32 %v4720, %v742
        %v4739 = vmul.f32 %v4723, %v742
        %v4740 = vmul.f32 %v4726, %v742
        %v4741 = vmul.f32 %v4729, %v742
        %v4742 = vmul.f32 %v4732, %v742
        %v4743 = vmul.f32 %v4735, %v742
        %v4744 = vadd.f32 %v4736, 1e-05
        %v4745 = vadd.f32 %v4737, 1e-05
        %v4746 = vadd.f32 %v4738, 1e-05
        %v4747 = vadd.f32 %v4739, 1e-05
        %v4748 = vadd.f32 %v4740, 1e-05
        %v4749 = vadd.f32 %v4741, 1e-05
        %v4750 = vadd.f32 %v4742, 1e-05
        %v4751 = vadd.f32 %v4743, 1e-05
        %v4752 = vrsqrt.pop %v4744
        %v4753 = vrsqrt.pop %v4745
        %v4754 = vrsqrt.pop %v4746
        %v4755 = vrsqrt.pop %v4747
        %v4756 = vrsqrt.pop %v4748
        %v4757 = vrsqrt.pop %v4749
        %v4758 = vrsqrt.pop %v4750
        %v4759 = vrsqrt.pop %v4751
        %v4760 = vmul.f32 %v4696, %v4752
        %v4761 = vmul.f32 %v4697, %v4753
        %v4762 = vmul.f32 %v4698, %v4754
        %v4763 = vmul.f32 %v4699, %v4755
        %v4764 = vmul.f32 %v4700, %v4756
        %v4765 = vmul.f32 %v4701, %v4757
        %v4766 = vmul.f32 %v4702, %v4758
        %v4767 = vmul.f32 %v4703, %v4759
        %v4768 = vlaneseq
        %v4769 = vshrl.u32 %v4768, 7
        %v4770 = vsub.s32 0, %v4769
        %v4771 = vrot.slane %v716, %v4770
        %v4772 = vmul.f32 %v4760, %v4771
        %v4773 = vmul.f32 %v4761, %v4771
        %v4774 = vmul.f32 %v4762, %v4771
        %v4775 = vmul.f32 %v4763, %v4771
        %v4776 = vmul.f32 %v4764, %v4771
        %v4777 = vmul.f32 %v4765, %v4771
        %v4778 = vmul.f32 %v4766, %v4771
        %v4779 = vmul.f32 %v4767, %v4771
        %v4780 = vlaneseq
        %v4781 = vshrl.u32 %v4780, 7
        %v4782 = vsub.s32 1, %v4781
        %v4783 = vrot.slane %v716, %v4782
        %v4784 = vadd.f32 %v4772, %v4783
        %v4785 = vadd.f32 %v4773, %v4783
        %v4786 = vadd.f32 %v4774, %v4783
        %v4787 = vadd.f32 %v4775, %v4783
        %v4788 = vadd.f32 %v4776, %v4783
        %v4789 = vadd.f32 %v4777, %v4783
        %v4790 = vadd.f32 %v4778, %v4783
        %v4791 = vadd.f32 %v4779, %v4783
        %v4792 = vpack.c.bf16 %v4785, %v4784
        %v4793 = vpack.c.bf16 %v4787, %v4786
        %v4794 = vpack.c.bf16 %v4789, %v4788
        %v4795 = vpack.c.bf16 %v4791, %v4790
        %v4796 = vld [vmem:[%s579] sm:$0xf]
        %v4797 = vld [vmem:[%s579 + $0x4] sm:$0xf]
        %v4798 = vld [vmem:[%s579 + $0x8] sm:$0xf]
        %v4799 = vld [vmem:[%s579 + $0xc] sm:$0xf]
        %v4800 = vlaneseq
        %v4801 = vshrl.u32 %v4800, 7
        %v4802 = vsub.s32 2, %v4801
        %v4803 = vrot.slane %v716, %v4802
        %v4808 = vunpack.c.l.b16 %v4796
        %v4809 = vunpack.c.l.b16 %v4797
        %v4810 = vunpack.c.l.b16 %v4798
        %v4811 = vunpack.c.l.b16 %v4799
        %v4812 = vpack.c.b16 %v4809, %v4808
        %v4813 = vpack.c.b16 %v4811, %v4810
        %v4817 = vsel %vm717, %v4792, 0
        %v4820 = vsel %vm717, %v4793, 0
        %v4823 = vsel %vm717, %v4794, 0
        %v4826 = vsel %vm717, %v4795, 0
        %4828 = vmatprep.subr.bf16.mxu0 0
        %4829 = vmatpush1.bf16.msra.mxu0 0
        %4830 = vmatprep.subr.bf16.mxu0 0
        %4831 = vmatpush1.bf16.msra.mxu0 0
        %4832 = vmatprep.subr.bf16.mxu0 0
        %4833 = vmatpush1.bf16.msra.mxu0 0
        %4834 = vmatprep.subr.bf16.mxu0 0
        %4835 = vmatpush1.bf16.msra.mxu0 0
        %4836 = vmatprep.subr.bf16.mxu0 0
        %4837 = vmatpush1.bf16.msra.mxu0 0
        %4838 = vmatprep.subr.bf16.mxu0 0
        %4839 = vmatpush1.bf16.msra.mxu0 0
        %4840 = vmatprep.subr.bf16.mxu0 0
        %4841 = vmatpush1.bf16.msra.mxu0 %v4813
        %4842 = vmatprep.subr.bf16.mxu0 0
        %4843 = vmatpush1.bf16.msra.mxu0 %v4812
        %4844 = vmatprep.subr.bf16.mxu0 0
        %4845 = vmatpush2.bf16.msra.mxu0 0
        %4846 = vmatprep.subr.bf16.mxu0 0
        %4847 = vmatpush2.bf16.msra.mxu0 0
        %4848 = vmatprep.subr.bf16.mxu0 0
        %4849 = vmatpush2.bf16.msra.mxu0 0
        %4850 = vmatprep.subr.bf16.mxu0 0
        %4851 = vmatpush2.bf16.msra.mxu0 0
        %4852 = vmatprep.subr.bf16.mxu0 0
        %4853 = vmatpush2.bf16.msra.mxu0 0
        %4854 = vmatprep.subr.bf16.mxu0 0
        %4855 = vmatpush2.bf16.msra.mxu0 0
        %4856 = vmatprep.subr.bf16.mxu0 0
        %4857 = vmatpush2.bf16.msra.mxu0 0
        %4858 = vmatprep.subr.bf16.mxu0 0
        %4859 = vmatpush2.bf16.msra.mxu0 0
        %4860 = vmatprep.mubr.bf16.mxu0 0
        %4861 = vmatmul.mubr.bf16.gmra.mxu0 %v4817
        %v4862 = vpop.f32.mrf.mxu0
        %v4863 = vadd.f32 %v4803, %v4862
        %v4864 = vpop.f32.mrf.mxu0
        %v4865 = vpop.f32.mrf.mxu0
        %v4866 = vadd.f32 %v4803, %v4865
        %v4867 = vpop.f32.mrf.mxu0
        %4868 = vmatprep.mubr.bf16.mxu0 0
        %4869 = vmatmul.mubr.bf16.gmra.mxu0 %v4820
        %v4870 = vpop.f32.mrf.mxu0
        %v4871 = vadd.f32 %v4803, %v4870
        %v4872 = vpop.f32.mrf.mxu0
        %v4873 = vpop.f32.mrf.mxu0
        %v4874 = vadd.f32 %v4803, %v4873
        %v4875 = vpop.f32.mrf.mxu0
        %4876 = vmatprep.mubr.bf16.mxu0 0
        %4877 = vmatmul.mubr.bf16.gmra.mxu0 %v4823
        %v4878 = vpop.f32.mrf.mxu0
        %v4879 = vadd.f32 %v4803, %v4878
        %v4880 = vpop.f32.mrf.mxu0
        %v4881 = vpop.f32.mrf.mxu0
        %v4882 = vadd.f32 %v4803, %v4881
        %v4883 = vpop.f32.mrf.mxu0
        %4884 = vmatprep.mubr.bf16.mxu0 0
        %4885 = vmatmul.mubr.bf16.gmra.mxu0 %v4826
        %v4886 = vpop.f32.mrf.mxu0
        %v4887 = vadd.f32 %v4803, %v4886
        %v4888 = vpop.f32.mrf.mxu0
        %v4889 = vpop.f32.mrf.mxu0
        %v4890 = vadd.f32 %v4803, %v4889
        %v4891 = vpop.f32.mrf.mxu0
        %4892 = vdwg.mxu0
        %v4893 = vmul.f32 %v4863, 0.5
        %v4894 = vmul.f32 %v4866, 0.5
        %v4895 = vmul.f32 %v4871, 0.5
        %v4896 = vmul.f32 %v4874, 0.5
        %v4897 = vmul.f32 %v4879, 0.5
        %v4898 = vmul.f32 %v4882, 0.5
        %v4899 = vmul.f32 %v4887, 0.5
        %v4900 = vmul.f32 %v4890, 0.5
        %v4901 = vmul.f32 %v4863, 0.70710677
        %v4902 = vmul.f32 %v4866, 0.70710677
        %v4903 = vmul.f32 %v4871, 0.70710677
        %v4904 = vmul.f32 %v4874, 0.70710677
        %v4905 = vmul.f32 %v4879, 0.70710677
        %v4906 = vmul.f32 %v4882, 0.70710677
        %v4907 = vmul.f32 %v4887, 0.70710677
        %v4908 = vmul.f32 %v4890, 0.70710677
        %v4909 = vand.u32 2147483647, %v4901
        %v4910 = vand.u32 2147483647, %v4902
        %v4911 = vand.u32 2147483647, %v4903
        %v4912 = vand.u32 2147483647, %v4904
        %v4913 = vand.u32 2147483647, %v4905
        %v4914 = vand.u32 2147483647, %v4906
        %v4915 = vand.u32 2147483647, %v4907
        %v4916 = vand.u32 2147483647, %v4908
        %v4917 = vmul.f32 %v4909, 0.3275911
        %v4918 = vmul.f32 %v4910, 0.3275911
        %v4919 = vmul.f32 %v4911, 0.3275911
        %v4920 = vmul.f32 %v4912, 0.3275911
        %v4921 = vmul.f32 %v4913, 0.3275911
        %v4922 = vmul.f32 %v4914, 0.3275911
        %v4923 = vmul.f32 %v4915, 0.3275911
        %v4924 = vmul.f32 %v4916, 0.3275911
        %v4925 = vadd.f32 %v4917, 1.0
        %v4926 = vadd.f32 %v4918, 1.0
        %v4927 = vadd.f32 %v4919, 1.0
        %v4928 = vadd.f32 %v4920, 1.0
        %v4929 = vadd.f32 %v4921, 1.0
        %v4930 = vadd.f32 %v4922, 1.0
        %v4931 = vadd.f32 %v4923, 1.0
        %v4932 = vadd.f32 %v4924, 1.0
        %v4933 = vrcp.pop %v4925
        %v4934 = vmul.f32 1.0, %v4933
        %v4935 = vrcp.pop %v4926
        %v4936 = vmul.f32 1.0, %v4935
        %v4937 = vrcp.pop %v4927
        %v4938 = vmul.f32 1.0, %v4937
        %v4939 = vrcp.pop %v4928
        %v4940 = vmul.f32 1.0, %v4939
        %v4941 = vrcp.pop %v4929
        %v4942 = vmul.f32 1.0, %v4941
        %v4943 = vrcp.pop %v4930
        %v4944 = vmul.f32 1.0, %v4943
        %v4945 = vrcp.pop %v4931
        %v4946 = vmul.f32 1.0, %v4945
        %v4947 = vrcp.pop %v4932
        %v4948 = vmul.f32 1.0, %v4947
        %v4949 = vmul.f32 %v4934, 1.0614054
        %v4950 = vmul.f32 %v4936, 1.0614054
        %v4951 = vmul.f32 %v4938, 1.0614054
        %v4952 = vmul.f32 %v4940, 1.0614054
        %v4953 = vmul.f32 %v4942, 1.0614054
        %v4954 = vmul.f32 %v4944, 1.0614054
        %v4955 = vmul.f32 %v4946, 1.0614054
        %v4956 = vmul.f32 %v4948, 1.0614054
        %v4957 = vadd.f32 %v4949, -1.4531521
        %v4958 = vadd.f32 %v4950, -1.4531521
        %v4959 = vadd.f32 %v4951, -1.4531521
        %v4960 = vadd.f32 %v4952, -1.4531521
        %v4961 = vadd.f32 %v4953, -1.4531521
        %v4962 = vadd.f32 %v4954, -1.4531521
        %v4963 = vadd.f32 %v4955, -1.4531521
        %v4964 = vadd.f32 %v4956, -1.4531521
        %v4965 = vmul.f32 %v4957, %v4934
        %v4966 = vmul.f32 %v4958, %v4936
        %v4967 = vmul.f32 %v4959, %v4938
        %v4968 = vmul.f32 %v4960, %v4940
        %v4969 = vmul.f32 %v4961, %v4942
        %v4970 = vmul.f32 %v4962, %v4944
        %v4971 = vmul.f32 %v4963, %v4946
        %v4972 = vmul.f32 %v4964, %v4948
        %v4973 = vadd.f32 %v4965, 1.4214138
        %v4974 = vadd.f32 %v4966, 1.4214138
        %v4975 = vadd.f32 %v4967, 1.4214138
        %v4976 = vadd.f32 %v4968, 1.4214138
        %v4977 = vadd.f32 %v4969, 1.4214138
        %v4978 = vadd.f32 %v4970, 1.4214138
        %v4979 = vadd.f32 %v4971, 1.4214138
        %v4980 = vadd.f32 %v4972, 1.4214138
        %v4981 = vmul.f32 %v4973, %v4934
        %v4982 = vmul.f32 %v4974, %v4936
        %v4983 = vmul.f32 %v4975, %v4938
        %v4984 = vmul.f32 %v4976, %v4940
        %v4985 = vmul.f32 %v4977, %v4942
        %v4986 = vmul.f32 %v4978, %v4944
        %v4987 = vmul.f32 %v4979, %v4946
        %v4988 = vmul.f32 %v4980, %v4948
        %v4989 = vadd.f32 %v4981, -0.28449672
        %v4990 = vadd.f32 %v4982, -0.28449672
        %v4991 = vadd.f32 %v4983, -0.28449672
        %v4992 = vadd.f32 %v4984, -0.28449672
        %v4993 = vadd.f32 %v4985, -0.28449672
        %v4994 = vadd.f32 %v4986, -0.28449672
        %v4995 = vadd.f32 %v4987, -0.28449672
        %v4996 = vadd.f32 %v4988, -0.28449672
        %v4997 = vmul.f32 %v4989, %v4934
        %v4998 = vmul.f32 %v4990, %v4936
        %v4999 = vmul.f32 %v4991, %v4938
        %v5000 = vmul.f32 %v4992, %v4940
        %v5001 = vmul.f32 %v4993, %v4942
        %v5002 = vmul.f32 %v4994, %v4944
        %v5003 = vmul.f32 %v4995, %v4946
        %v5004 = vmul.f32 %v4996, %v4948
        %v5005 = vadd.f32 %v4997, 0.2548296
        %v5006 = vadd.f32 %v4998, 0.2548296
        %v5007 = vadd.f32 %v4999, 0.2548296
        %v5008 = vadd.f32 %v5000, 0.2548296
        %v5009 = vadd.f32 %v5001, 0.2548296
        %v5010 = vadd.f32 %v5002, 0.2548296
        %v5011 = vadd.f32 %v5003, 0.2548296
        %v5012 = vadd.f32 %v5004, 0.2548296
        %v5013 = vmul.f32 %v5005, %v4934
        %v5014 = vmul.f32 %v5006, %v4936
        %v5015 = vmul.f32 %v5007, %v4938
        %v5016 = vmul.f32 %v5008, %v4940
        %v5017 = vmul.f32 %v5009, %v4942
        %v5018 = vmul.f32 %v5010, %v4944
        %v5019 = vmul.f32 %v5011, %v4946
        %v5020 = vmul.f32 %v5012, %v4948
        %v5021 = vsub.f32 0.0, %v4909
        %v5022 = vsub.f32 0.0, %v4910
        %v5023 = vsub.f32 0.0, %v4911
        %v5024 = vsub.f32 0.0, %v4912
        %v5025 = vsub.f32 0.0, %v4913
        %v5026 = vsub.f32 0.0, %v4914
        %v5027 = vsub.f32 0.0, %v4915
        %v5028 = vsub.f32 0.0, %v4916
        %v5029 = vmul.f32 %v5021, %v4909
        %v5030 = vmul.f32 %v5022, %v4910
        %v5031 = vmul.f32 %v5023, %v4911
        %v5032 = vmul.f32 %v5024, %v4912
        %v5033 = vmul.f32 %v5025, %v4913
        %v5034 = vmul.f32 %v5026, %v4914
        %v5035 = vmul.f32 %v5027, %v4915
        %v5036 = vmul.f32 %v5028, %v4916
        %v5037 = vmul.f32 %v5029, 1.442695
        %v5038 = vpow.pop %v5037
        %v5039 = vmul.f32 %v5030, 1.442695
        %v5040 = vpow.pop %v5039
        %v5041 = vmul.f32 %v5031, 1.442695
        %v5042 = vpow.pop %v5041
        %v5043 = vmul.f32 %v5032, 1.442695
        %v5044 = vpow.pop %v5043
        %v5045 = vmul.f32 %v5033, 1.442695
        %v5046 = vpow.pop %v5045
        %v5047 = vmul.f32 %v5034, 1.442695
        %v5048 = vpow.pop %v5047
        %v5049 = vmul.f32 %v5035, 1.442695
        %v5050 = vpow.pop %v5049
        %v5051 = vmul.f32 %v5036, 1.442695
        %v5052 = vpow.pop %v5051
        %v5053 = vmul.f32 %v5013, %v5038
        %v5054 = vmul.f32 %v5014, %v5040
        %v5055 = vmul.f32 %v5015, %v5042
        %v5056 = vmul.f32 %v5016, %v5044
        %v5057 = vmul.f32 %v5017, %v5046
        %v5058 = vmul.f32 %v5018, %v5048
        %v5059 = vmul.f32 %v5019, %v5050
        %v5060 = vmul.f32 %v5020, %v5052
        %v5061 = vsub.f32 1.0, %v5053
        %v5062 = vsub.f32 1.0, %v5054
        %v5063 = vsub.f32 1.0, %v5055
        %v5064 = vsub.f32 1.0, %v5056
        %v5065 = vsub.f32 1.0, %v5057
        %v5066 = vsub.f32 1.0, %v5058
        %v5067 = vsub.f32 1.0, %v5059
        %v5068 = vsub.f32 1.0, %v5060
        %vm5069 = vcmp.ge.f32.partialorder %v4901, 0.0
        %vm5070 = vcmp.ge.f32.partialorder %v4902, 0.0
        %vm5071 = vcmp.ge.f32.partialorder %v4903, 0.0
        %vm5072 = vcmp.ge.f32.partialorder %v4904, 0.0
        %vm5073 = vcmp.ge.f32.partialorder %v4905, 0.0
        %vm5074 = vcmp.ge.f32.partialorder %v4906, 0.0
        %vm5075 = vcmp.ge.f32.partialorder %v4907, 0.0
        %vm5076 = vcmp.ge.f32.partialorder %v4908, 0.0
        %v5077 = vsub.f32 0.0, %v5061
        %v5078 = vsub.f32 0.0, %v5062
        %v5079 = vsub.f32 0.0, %v5063
        %v5080 = vsub.f32 0.0, %v5064
        %v5081 = vsub.f32 0.0, %v5065
        %v5082 = vsub.f32 0.0, %v5066
        %v5083 = vsub.f32 0.0, %v5067
        %v5084 = vsub.f32 0.0, %v5068
        %v5085 = vsel %vm5069, %v5061, %v5077
        %v5086 = vsel %vm5070, %v5062, %v5078
        %v5087 = vsel %vm5071, %v5063, %v5079
        %v5088 = vsel %vm5072, %v5064, %v5080
        %v5089 = vsel %vm5073, %v5065, %v5081
        %v5090 = vsel %vm5074, %v5066, %v5082
        %v5091 = vsel %vm5075, %v5067, %v5083
        %v5092 = vsel %vm5076, %v5068, %v5084
        %v5093 = vadd.f32 %v5085, 1.0
        %v5094 = vadd.f32 %v5086, 1.0
        %v5095 = vadd.f32 %v5087, 1.0
        %v5096 = vadd.f32 %v5088, 1.0
        %v5097 = vadd.f32 %v5089, 1.0
        %v5098 = vadd.f32 %v5090, 1.0
        %v5099 = vadd.f32 %v5091, 1.0
        %v5100 = vadd.f32 %v5092, 1.0
        %v5101 = vmul.f32 %v4893, %v5093
        %v5102 = vmul.f32 %v4894, %v5094
        %v5103 = vmul.f32 %v4895, %v5095
        %v5104 = vmul.f32 %v4896, %v5096
        %v5105 = vmul.f32 %v4897, %v5097
        %v5106 = vmul.f32 %v4898, %v5098
        %v5107 = vmul.f32 %v4899, %v5099
        %v5108 = vmul.f32 %v4900, %v5100
        %v5109 = vpack.c.bf16 %v5102, %v5101
        %v5110 = vpack.c.bf16 %v5104, %v5103
        %v5111 = vpack.c.bf16 %v5106, %v5105
        %v5112 = vpack.c.bf16 %v5108, %v5107
        %v5113 = vld [vmem:[%s690] sm:$0xf]
        %v5114 = vld [vmem:[%s690 + $0x4] sm:$0xf]
        %v5115 = vld [vmem:[%s690 + $0x8] sm:$0xf]
        %v5116 = vld [vmem:[%s690 + $0xc] sm:$0xf]
        %v5117 = vld [vmem:[%s690 + $0x10] sm:$0xf]
        %v5118 = vld [vmem:[%s690 + $0x14] sm:$0xf]
        %v5119 = vld [vmem:[%s690 + $0x18] sm:$0xf]
        %v5120 = vld [vmem:[%s690 + $0x1c] sm:$0xf]
        %v5121 = vld [vmem:[%s690 + $0x20] sm:$0xf]
        %v5122 = vld [vmem:[%s690 + $0x24] sm:$0xf]
        %v5123 = vld [vmem:[%s690 + $0x28] sm:$0xf]
        %v5124 = vld [vmem:[%s690 + $0x2c] sm:$0xf]
        %v5125 = vld [vmem:[%s690 + $0x30] sm:$0xf]
        %v5126 = vld [vmem:[%s690 + $0x34] sm:$0xf]
        %v5127 = vld [vmem:[%s690 + $0x38] sm:$0xf]
        %v5128 = vld [vmem:[%s690 + $0x3c] sm:$0xf]
        %v5145 = vunpack.c.l.b16 %v5113
        %v5146 = vunpack.c.l.b16 %v5114
        %v5147 = vunpack.c.l.b16 %v5115
        %v5148 = vunpack.c.l.b16 %v5116
        %v5149 = vunpack.c.l.b16 %v5117
        %v5150 = vunpack.c.l.b16 %v5118
        %v5151 = vunpack.c.l.b16 %v5119
        %v5152 = vunpack.c.l.b16 %v5120
        %v5153 = vunpack.c.l.b16 %v5121
        %v5154 = vunpack.c.l.b16 %v5122
        %v5155 = vunpack.c.l.b16 %v5123
        %v5156 = vunpack.c.l.b16 %v5124
        %v5157 = vunpack.c.l.b16 %v5125
        %v5158 = vunpack.c.l.b16 %v5126
        %v5159 = vunpack.c.l.b16 %v5127
        %v5160 = vunpack.c.l.b16 %v5128
        %v5161 = vpack.c.b16 %v5146, %v5145
        %v5162 = vpack.c.b16 %v5148, %v5147
        %v5163 = vpack.c.b16 %v5150, %v5149
        %v5164 = vpack.c.b16 %v5152, %v5151
        %v5165 = vpack.c.b16 %v5154, %v5153
        %v5166 = vpack.c.b16 %v5156, %v5155
        %v5167 = vpack.c.b16 %v5158, %v5157
        %v5168 = vpack.c.b16 %v5160, %v5159
        %5177 = vmatprep.subr.bf16.mxu0 0
        %5178 = vmatpush1.bf16.msra.mxu0 %v5168
        %5179 = vmatprep.subr.bf16.mxu0 0
        %5180 = vmatpush1.bf16.msra.mxu0 %v5167
        %5181 = vmatprep.subr.bf16.mxu0 0
        %5182 = vmatpush1.bf16.msra.mxu0 %v5166
        %5183 = vmatprep.subr.bf16.mxu0 0
        %5184 = vmatpush1.bf16.msra.mxu0 %v5165
        %5185 = vmatprep.subr.bf16.mxu0 0
        %5186 = vmatpush1.bf16.msra.mxu0 %v5164
        %5187 = vmatprep.subr.bf16.mxu0 0
        %5188 = vmatpush1.bf16.msra.mxu0 %v5163
        %5189 = vmatprep.subr.bf16.mxu0 0
        %5190 = vmatpush1.bf16.msra.mxu0 %v5162
        %5191 = vmatprep.subr.bf16.mxu0 0
        %5192 = vmatpush1.bf16.msra.mxu0 %v5161
        %5193 = vmatprep.subr.bf16.mxu0 0
        %5194 = vmatpush2.bf16.msra.mxu0 0
        %5195 = vmatprep.subr.bf16.mxu0 0
        %5196 = vmatpush2.bf16.msra.mxu0 0
        %5197 = vmatprep.subr.bf16.mxu0 0
        %5198 = vmatpush2.bf16.msra.mxu0 0
        %5199 = vmatprep.subr.bf16.mxu0 0
        %5200 = vmatpush2.bf16.msra.mxu0 0
        %5201 = vmatprep.subr.bf16.mxu0 0
        %5202 = vmatpush2.bf16.msra.mxu0 0
        %5203 = vmatprep.subr.bf16.mxu0 0
        %5204 = vmatpush2.bf16.msra.mxu0 0
        %5205 = vmatprep.subr.bf16.mxu0 0
        %5206 = vmatpush2.bf16.msra.mxu0 0
        %5207 = vmatprep.subr.bf16.mxu0 0
        %5208 = vmatpush2.bf16.msra.mxu0 0
        %5209 = vmatprep.mubr.bf16.mxu0 0
        %5210 = vmatmul.mubr.bf16.gmra.mxu0 %v5109
        %v5211 = vpop.f32.mrf.mxu0
        %v5212 = vadd.f32 0.0, %v5211
        %v5213 = vpop.f32.mrf.mxu0
        %v5214 = vpop.f32.mrf.mxu0
        %v5215 = vadd.f32 0.0, %v5214
        %v5216 = vpop.f32.mrf.mxu0
        %5217 = vmatprep.mubr.bf16.mxu0 0
        %5218 = vmatmul.mubr.bf16.gmra.mxu0 %v5110
        %v5219 = vpop.f32.mrf.mxu0
        %v5220 = vadd.f32 0.0, %v5219
        %v5221 = vpop.f32.mrf.mxu0
        %v5222 = vpop.f32.mrf.mxu0
        %v5223 = vadd.f32 0.0, %v5222
        %v5224 = vpop.f32.mrf.mxu0
        %5225 = vmatprep.mubr.bf16.mxu0 0
        %5226 = vmatmul.mubr.bf16.gmra.mxu0 %v5111
        %v5227 = vpop.f32.mrf.mxu0
        %v5228 = vadd.f32 0.0, %v5227
        %v5229 = vpop.f32.mrf.mxu0
        %v5230 = vpop.f32.mrf.mxu0
        %v5231 = vadd.f32 0.0, %v5230
        %v5232 = vpop.f32.mrf.mxu0
        %5233 = vmatprep.mubr.bf16.mxu0 0
        %5234 = vmatmul.mubr.bf16.gmra.mxu0 %v5112
        %v5235 = vpop.f32.mrf.mxu0
        %v5236 = vadd.f32 0.0, %v5235
        %v5237 = vpop.f32.mrf.mxu0
        %v5238 = vpop.f32.mrf.mxu0
        %v5239 = vadd.f32 0.0, %v5238
        %v5240 = vpop.f32.mrf.mxu0
        %5241 = vdwg.mxu0
        %v5242 = vadd.f32 %v4656, %v5212
        %v5243 = vadd.f32 %v4657, %v5215
        %v5244 = vadd.f32 %v4658, %v5220
        %v5245 = vadd.f32 %v4659, %v5223
        %v5246 = vadd.f32 %v4660, %v5228
        %v5247 = vadd.f32 %v4661, %v5231
        %v5248 = vadd.f32 %v4662, %v5236
        %v5249 = vadd.f32 %v4663, %v5239
        %v5250 = vlaneseq
        %v5251 = vshrl.u32 %v5250, 7
        %v5252 = vsub.s32 3, %v5251
        %v5253 = vrot.slane %v716, %v5252
        %v5254 = vadd.f32 %v5242, %v5253
        %v5255 = vadd.f32 %v5243, %v5253
        %v5256 = vadd.f32 %v5244, %v5253
        %v5257 = vadd.f32 %v5245, %v5253
        %v5258 = vadd.f32 %v5246, %v5253
        %v5259 = vadd.f32 %v5247, %v5253
        %v5260 = vadd.f32 %v5248, %v5253
        %v5261 = vadd.f32 %v5249, %v5253
        %5262 = vst.msk [vmem:[%s678] sm:$0xff] %vm717, %v5254
        %5263 = vst.msk [vmem:[%s678 + $0x8] sm:$0xff] %vm717, %v5255
        %5264 = vst.msk [vmem:[%s678 + $0x10] sm:$0xff] %vm717, %v5256
        %5265 = vst.msk [vmem:[%s678 + $0x18] sm:$0xff] %vm717, %v5257
        %5266 = vst.msk [vmem:[%s678 + $0x20] sm:$0xff] %vm717, %v5258
        %5267 = vst.msk [vmem:[%s678 + $0x28] sm:$0xff] %vm717, %v5259
        %5268 = vst.msk [vmem:[%s678 + $0x30] sm:$0xff] %vm717, %v5260
        %5269 = vst.msk [vmem:[%s678 + $0x38] sm:$0xff] %vm717, %v5261
        %s5270 = sand.u32 %s322, 1
        %s5271 = scalar_lea.sflag [#allocation4], %s5270
        %s5272 = sand.u32 %s322, 1
        %s5273 = smul.addr %s5272, 64
        %s5274 = scalar_lea.vmem [#allocation14], %s5273
        // Predicated region
        $region89: #{tpu_custom_call.1} parent=59 // pred_check
          %p5275 = pneg %p332
        $region90: #{tpu_custom_call.1} parent=59 // pred_check_branch
          %5277 = sbr.rel (%p5275) target = $region92
        $region91: #{tpu_custom_call.1} parent=59 // pred_region
          %s5278 = smul.u32 4, %s41
          %s5280 = ssub.s32 1024, 1024
          %5281 = vsyncadd %s5271, %s5280
          %s5282 = smul.addr %s5278, 2
          %s5283 = smul.addr %s40, 16
          %s5284 = sadd.s32 %s5282, %s5283
          %s5285 = smul.addr %s5284, 128
          %s5286 = scalar_lea.hbm %s10, %s5285
          %s5287 = sshll.u32 %s5274, 4
          %s5288 = int_to_ptr.vmem [resolvable:$true] %s5287
          %5293 = dma.vmem_to_hbm [thread:$0]  %s5288, 1024, %s5286, %s5271, 128, 128, 8
        $region92: #{tpu_custom_call.1} parent=59 // pred_fallthru
          _
      $region60: #{tpu_custom_call.1} parent=5 // pred_fallthru
        _
      %p5294 = scmp.le.s32.totalorder 2, %s31
      // Predicated region
      $region93: #{tpu_custom_call.1} parent=5 // pred_check
        %p5295 = pneg %p5294
      $region94: #{tpu_custom_call.1} parent=5 // pred_check_branch
        %5297 = sbr.rel (%p5295) target = $region96
      $region95: #{tpu_custom_call.1} parent=5 // pred_region
        %s5298 = ssub.s32 %s31, 2
        // Predicated region
        $region97: #{tpu_custom_call.1} parent=95 // pred_check
          %p5299 = pneg %p338
        $region98: #{tpu_custom_call.1} parent=95 // pred_check_branch
          %5301 = sbr.rel (%p5299) target = $region100
        $region99: #{tpu_custom_call.1} parent=95 // pred_region
          %s5302 = sand.u32 %s323, 1
          %s5303 = scalar_lea.sflag [#allocation4], %s5302
          %s5304 = sand.u32 %s323, 1
          %s5305 = smul.addr %s5304, 64
          %s5306 = scalar_lea.vmem [#allocation14], %s5305
          %5307 = dma.done %s5303, 1024
        $region100: #{tpu_custom_call.1} parent=95 // pred_fallthru
          _
      $region96: #{tpu_custom_call.1} parent=5 // pred_fallthru
        _
    $region6: #{tpu_custom_call.1} parent=1 // loop_footer
      %s35 = sadd.s32 1, %s31
    $region7: #{tpu_custom_call.1} parent=1 // loop_footer_branch
      %30 = sbr.rel target = $region3
    $region8: #{tpu_custom_call.1} parent=1 // loop_exit
      _
    %5308 = vsyncpa [#allocation3], 1
    %s5309 = scalar_lea.sflag [#allocation3], 1
    %5310 = vsyncpa %s5309, 1
    %5311 = vsyncpa [#allocation6], 1
    %s5312 = scalar_lea.sflag [#allocation6], 1
    %5313 = vsyncpa %s5312, 1
    %5314 = vsyncpa [#allocation9], 1
    %s5315 = scalar_lea.sflag [#allocation9], 1
    %5316 = vsyncpa %s5315, 1
    %5317 = vsyncpa [#allocation12], 1
    %s5318 = scalar_lea.sflag [#allocation12], 1
    %5319 = vsyncpa %s5318, 1
    %5320 = vsyncpa [#allocation4], 1
    %s5321 = scalar_lea.sflag [#allocation4], 1
    %5322 = vsyncpa %s5321, 1

</llo_original>
